<compile_context>
chip_gen: v5e
topology: v5e:2x2
jax: 0.10.0
libtpu: 0.0.40
codegen_flags: <defaults>
</compile_context>

<pallas_src>
import jax
import jax.numpy as jnp
import numpy as np
from jax.experimental import pallas as pl
from jax.experimental.pallas import tpu as pltpu


def _round_up(x, m):
    return ((x + m - 1) // m) * m


# ----------------------------------------------------------------------------- kernel
def lstm_text_kernel(xf_ref, h0_ref, c0_ref,
                     wih0_ref, whh0_ref, b0_ref,
                     wih1_ref, whh1_ref, b1_ref,
                     wout_ref, bout_ref,
                     out_ref,
                     l0_s, l1_s):
    """2 stacked LSTM layers + output projection, fully resident in VMEM.

    Padded layout (Hp = round_up(H, 128), Vp = round_up(V, 128)):
      xf_ref   : (S*B, V)     flattened input sequence
      h0_ref   : (2, B, Hp)   initial hidden (zero-padded H -> Hp)
      c0_ref   : (2, B, Hp)   initial cell
      wih*_ref : (in, 4*Hp)   pre-transposed W_ih, each gate zero-padded to Hp lanes
      whh*_ref : (Hp, 4*Hp)   pre-transposed W_hh, padded the same way
      b*_ref   : (1, 4*Hp)    b_ih + b_hh, per-gate padded
      wout_ref : (Hp, Vp)     pre-transposed Linear weight, zero-padded
      bout_ref : (1, Vp)
      out_ref  : (S*B, Vp)    lane-dense logits (wrapper slices back to V)
      l0_s/l1_s: (S*B, Hp)    per-layer hidden-state sequences (scratch)
    """
    SB = xf_ref.shape[0]
    B = h0_ref.shape[1]
    S = SB // B
    Hp = h0_ref.shape[2]

    def run_layer(xg, whh_ref, h, c, buf):
        # xg already contains x_t @ W_ih + (b_ih + b_hh) for every timestep,
        # so the recurrence only does h @ W_hh per step.
        for t in range(S):  # static unroll: S is small and fixed
            g = xg[t * B:(t + 1) * B, :] + jnp.dot(
                h, whh_ref[...], preferred_element_type=jnp.float32)
            # Gate slices are 128-lane aligned -> free vreg views (no lane shuffles).
            i = jax.nn.sigmoid(g[:, 0 * Hp:1 * Hp])
            f = jax.nn.sigmoid(g[:, 1 * Hp:2 * Hp])
            gg = jnp.tanh(g[:, 2 * Hp:3 * Hp])
            o = jax.nn.sigmoid(g[:, 3 * Hp:4 * Hp])
            c = f * c + i * gg
            h = o * jnp.tanh(c)
            buf[pl.ds(t * B, B), :] = h

    # ---- Layer 0: hoisted input projection (one MXU call for all timesteps) ------
    xg0 = jnp.dot(xf_ref[...], wih0_ref[...],
                  preferred_element_type=jnp.float32) + b0_ref[...]
    run_layer(xg0, whh0_ref, h0_ref[0], c0_ref[0], l0_s)

    # ---- Layer 1: hoisted input projection over the whole layer-0 sequence -------
    xg1 = jnp.dot(l0_s[...], wih1_ref[...],
                  preferred_element_type=jnp.float32) + b1_ref[...]
    run_layer(xg1, whh1_ref, h0_ref[1], c0_ref[1], l1_s)

    # ---- Output head: one bulk matmul + one unmasked lane-dense store ------------
    out_ref[...] = (jnp.dot(l1_s[...], wout_ref[...],
                            preferred_element_type=jnp.float32)
                    + bout_ref[...]).astype(out_ref.dtype)


# ----------------------------------------------------------------------------- wrapper
def _prep_gate_weight(w, H, Hp, in_pad):
    """(4H, in) PyTorch weight -> (in_pad, 4*Hp); gate k occupies lanes [k*Hp, k*Hp+H)."""
    wt = w.T                                   # (in, 4H), gate blocks contiguous
    in_f = wt.shape[0]
    wt = wt.reshape(in_f, 4, H)
    wt = jnp.pad(wt, ((0, in_pad - in_f), (0, 0), (0, Hp - H)))
    return wt.reshape(in_pad, 4 * Hp)


def _prep_gate_bias(b_ih, b_hh, H, Hp):
    b = (b_ih + b_hh).reshape(4, H)
    b = jnp.pad(b, ((0, 0), (0, Hp - H)))
    return b.reshape(1, 4 * Hp)


@jax.jit
def text_generation_forward(x, h0, c0, params):
    S, B, V = x.shape
    H = params["w_hh0"].shape[1]
    Hp = _round_up(H, 128)
    Vp = _round_up(V, 128)

    # ---- weight / state prep (runs once in XLA, outside the kernel) ----
    xf = x.reshape(S * B, V)
    h0p = jnp.pad(h0, ((0, 0), (0, 0), (0, Hp - H)))
    c0p = jnp.pad(c0, ((0, 0), (0, 0), (0, Hp - H)))

    wih0 = _prep_gate_weight(params["w_ih0"], H, Hp, V)
    whh0 = _prep_gate_weight(params["w_hh0"], H, Hp, Hp)
    b0 = _prep_gate_bias(params["b_ih0"], params["b_hh0"], H, Hp)
    wih1 = _prep_gate_weight(params["w_ih1"], H, Hp, Hp)
    whh1 = _prep_gate_weight(params["w_hh1"], H, Hp, Hp)
    b1 = _prep_gate_bias(params["b_ih1"], params["b_hh1"], H, Hp)
    wout = jnp.pad(params["w_out"].T, ((0, Hp - H), (0, Vp - V)))
    bout = jnp.pad(params["b_out"].reshape(1, V), ((0, 0), (0, Vp - V)))

    vmem = pl.BlockSpec(memory_space=pltpu.MemorySpace.VMEM)
    out_padded = pl.pallas_call(
        lstm_text_kernel,
        out_shape=jax.ShapeDtypeStruct((S * B, Vp), jnp.float32),
        in_specs=[vmem] * 11,
        out_specs=vmem,
        scratch_shapes=[
            pltpu.VMEM((S * B, Hp), jnp.float32),   # layer-0 hidden sequence
            pltpu.VMEM((S * B, Hp), jnp.float32),   # layer-1 hidden sequence
        ],
        # TODO(synk): at realistic sizes (vocab ~32-50K, hidden 512+), tile the vocab
        # dim of W_out / out and stream x over S with a grid + BlockSpecs, and shard
        # batch across TensorCores (v7x) via dimension_semantics=("parallel", ...).
    )(xf, h0p, c0p, wih0, whh0, b0, wih1, whh1, b1, wout, bout)

    return out_padded.reshape(S, B, Vp)[:, :, :V]


# ----------------------------------------------------------------------------- reference
def reference_forward(x, h0, c0, p):
    """Pure-JAX re-implementation of PyTorch nn.LSTM(2 layers) + nn.Linear."""
    S, B, V = x.shape
    H = p["w_hh0"].shape[1]

    def lstm_layer(inp, h, c, w_ih, w_hh, b_ih, b_hh):
        outs = []
        for t in range(S):
            g = inp[t] @ w_ih.T + h @ w_hh.T + b_ih + b_hh
            i = jax.nn.sigmoid(g[:, 0 * H:1 * H])
            f = jax.nn.sigmoid(g[:, 1 * H:2 * H])
            gg = jnp.tanh(g[:, 2 * H:3 * H])
            o = jax.nn.sigmoid(g[:, 3 * H:4 * H])
            c = f * c + i * gg
            h = o * jnp.tanh(c)
            outs.append(h)
        return jnp.stack(outs)

    o0 = lstm_layer(x, h0[0], c0[0], p["w_ih0"], p["w_hh0"], p["b_ih0"], p["b_hh0"])
    o1 = lstm_layer(o0, h0[1], c0[1], p["w_ih1"], p["w_hh1"], p["b_ih1"], p["b_hh1"])
    return o1 @ p["w_out"].T + p["b_out"]


# ----------------------------------------------------------------------------- params
def init_params(key, vocab, hidden):
    """Deterministic init matching PyTorch shape conventions (uniform +/- 1/sqrt(H))."""
    k = 1.0 / np.sqrt(hidden)
    keys = jax.random.split(key, 11)

    def u(kk, shape):
        return jax.random.uniform(kk, shape, jnp.float32, minval=-k, maxval=k)

    return {
        # layer 0: input = vocab
        "w_ih0": u(keys[0], (4 * hidden, vocab)),
        "w_hh0": u(keys[1], (4 * hidden, hidden)),
        "b_ih0": u(keys[2], (4 * hidden,)),
        "b_hh0": u(keys[3], (4 * hidden,)),
        # layer 1: input = hidden
        "w_ih1": u(keys[4], (4 * hidden, hidden)),
        "w_hh1": u(keys[5], (4 * hidden, hidden)),
        "b_ih1": u(keys[6], (4 * hidden,)),
        "b_hh1": u(keys[7], (4 * hidden,)),
        # Linear head: hidden -> vocab
        "w_out": u(keys[8], (vocab, hidden)),
        "b_out": u(keys[9], (vocab,)),
    }


# ----------------------------------------------------------------------------- main
if __name__ == "__main__":
    SEQ, BATCH, VOCAB, HIDDEN, LAYERS = 8, 2, 32, 32, 2

    root = jax.random.PRNGKey(0)
    k_params, k_x, k_h, k_c = jax.random.split(root, 4)

    params = init_params(k_params, VOCAB, HIDDEN)
    x = jax.random.normal(k_x, (SEQ, BATCH, VOCAB), jnp.float32)
    h0 = jax.random.normal(k_h, (LAYERS, BATCH, HIDDEN), jnp.float32)
    c0 = jax.random.normal(k_c, (LAYERS, BATCH, HIDDEN), jnp.float32)

    out = text_generation_forward(x, h0, c0, params)
    out = jax.block_until_ready(out)

    ref = reference_forward(x, h0, c0, params)
    assert out.shape == (SEQ, BATCH, VOCAB), out.shape
    np.testing.assert_allclose(np.asarray(out), np.asarray(ref), rtol=1e-4, atol=1e-4)

    print("KERNEL_OK")
</pallas_src>

<mosaic_0001>
module attributes {stable_mosaic.version = 11 : i64} {
  func.func @lstm_text_kernel(%arg0: memref<16x32xf32, #tpu.memory_space<vmem>>, %arg1: memref<2x2x128xf32, #tpu.memory_space<vmem>>, %arg2: memref<2x2x128xf32, #tpu.memory_space<vmem>>, %arg3: memref<32x512xf32, #tpu.memory_space<vmem>>, %arg4: memref<128x512xf32, #tpu.memory_space<vmem>>, %arg5: memref<1x512xf32, #tpu.memory_space<vmem>>, %arg6: memref<128x512xf32, #tpu.memory_space<vmem>>, %arg7: memref<128x512xf32, #tpu.memory_space<vmem>>, %arg8: memref<1x512xf32, #tpu.memory_space<vmem>>, %arg9: memref<128x128xf32, #tpu.memory_space<vmem>>, %arg10: memref<1x128xf32, #tpu.memory_space<vmem>>, %arg11: memref<16x128xf32, #tpu.memory_space<vmem>>, %arg12: memref<16x128xf32, #tpu.memory_space<vmem>>, %arg13: memref<16x128xf32, #tpu.memory_space<vmem>>) attributes {dimension_semantics = [], scalar_prefetch = 0 : i64, scratch_operands = 2 : i64, tpu.core_type = #tpu.core_type<tc>} {
    %c0 = arith.constant 0 : index
    %c0_0 = arith.constant 0 : index
    %0 = vector.load %arg0[%c0, %c0_0] : memref<16x32xf32, #tpu.memory_space<vmem>>, vector<16x32xf32>
    %c0_1 = arith.constant 0 : index
    %c0_2 = arith.constant 0 : index
    %1 = vector.load %arg3[%c0_1, %c0_2] : memref<32x512xf32, #tpu.memory_space<vmem>>, vector<32x512xf32>
    %cst = arith.constant dense<0.000000e+00> : vector<16x512xf32>
    %2 = tpu.matmul %0, %1, %cst {dimension_numbers = #tpu.dot_dimension_numbers<[1], [0], [0], [1], [0, 0, 1, 1], [], []>} : vector<16x32xf32>, vector<32x512xf32>, vector<16x512xf32> -> vector<16x512xf32>
    %c0_3 = arith.constant 0 : index
    %c0_4 = arith.constant 0 : index
    %3 = vector.load %arg5[%c0_3, %c0_4] : memref<1x512xf32, #tpu.memory_space<vmem>>, vector<1x512xf32>
    %4 = vector.broadcast %3 : vector<1x512xf32> to vector<16x512xf32>
    %5 = arith.addf %2, %4 : vector<16x512xf32>
    %c0_5 = arith.constant 0 : index
    %c0_6 = arith.constant 0 : index
    %c0_7 = arith.constant 0 : index
    %6 = vector.load %arg1[%c0_5, %c0_6, %c0_7] : memref<2x2x128xf32, #tpu.memory_space<vmem>>, vector<1x2x128xf32>
    %7 = vector.shape_cast %6 : vector<1x2x128xf32> to vector<2x128xf32>
    %c0_8 = arith.constant 0 : index
    %c0_9 = arith.constant 0 : index
    %c0_10 = arith.constant 0 : index
    %8 = vector.load %arg2[%c0_8, %c0_9, %c0_10] : memref<2x2x128xf32, #tpu.memory_space<vmem>>, vector<1x2x128xf32>
    %9 = vector.shape_cast %8 : vector<1x2x128xf32> to vector<2x128xf32>
    %10 = vector.extract_strided_slice %5 {offsets = [0, 0], sizes = [2, 512], strides = [1, 1]} : vector<16x512xf32> to vector<2x512xf32>
    %c0_11 = arith.constant 0 : index
    %c0_12 = arith.constant 0 : index
    %11 = vector.load %arg4[%c0_11, %c0_12] : memref<128x512xf32, #tpu.memory_space<vmem>>, vector<128x512xf32>
    %cst_13 = arith.constant dense<0.000000e+00> : vector<2x512xf32>
    %12 = tpu.matmul %7, %11, %cst_13 {dimension_numbers = #tpu.dot_dimension_numbers<[1], [0], [0], [1], [0, 0, 1, 1], [], []>} : vector<2x128xf32>, vector<128x512xf32>, vector<2x512xf32> -> vector<2x512xf32>
    %13 = arith.addf %10, %12 : vector<2x512xf32>
    %14 = vector.extract_strided_slice %13 {offsets = [0, 0], sizes = [2, 128], strides = [1, 1]} : vector<2x512xf32> to vector<2x128xf32>
    %15 = arith.negf %14 : vector<2x128xf32>
    %16 = math.exp %15 : vector<2x128xf32>
    %cst_14 = arith.constant 1.000000e+00 : f32
    %17 = vector.broadcast %cst_14 : f32 to vector<2x128xf32>
    %18 = arith.addf %17, %16 : vector<2x128xf32>
    %19 = arith.divf %17, %18 : vector<2x128xf32>
    %20 = vector.extract_strided_slice %13 {offsets = [0, 128], sizes = [2, 128], strides = [1, 1]} : vector<2x512xf32> to vector<2x128xf32>
    %21 = arith.negf %20 : vector<2x128xf32>
    %22 = math.exp %21 : vector<2x128xf32>
    %cst_15 = arith.constant 1.000000e+00 : f32
    %23 = vector.broadcast %cst_15 : f32 to vector<2x128xf32>
    %24 = arith.addf %23, %22 : vector<2x128xf32>
    %25 = arith.divf %23, %24 : vector<2x128xf32>
    %26 = vector.extract_strided_slice %13 {offsets = [0, 256], sizes = [2, 128], strides = [1, 1]} : vector<2x512xf32> to vector<2x128xf32>
    %27 = math.tanh %26 : vector<2x128xf32>
    %28 = vector.extract_strided_slice %13 {offsets = [0, 384], sizes = [2, 128], strides = [1, 1]} : vector<2x512xf32> to vector<2x128xf32>
    %29 = arith.negf %28 : vector<2x128xf32>
    %30 = math.exp %29 : vector<2x128xf32>
    %cst_16 = arith.constant 1.000000e+00 : f32
    %31 = vector.broadcast %cst_16 : f32 to vector<2x128xf32>
    %32 = arith.addf %31, %30 : vector<2x128xf32>
    %33 = arith.divf %31, %32 : vector<2x128xf32>
    %34 = arith.mulf %25, %9 : vector<2x128xf32>
    %35 = arith.mulf %19, %27 : vector<2x128xf32>
    %36 = arith.addf %34, %35 : vector<2x128xf32>
    %37 = math.tanh %36 : vector<2x128xf32>
    %38 = arith.mulf %33, %37 : vector<2x128xf32>
    %c0_17 = arith.constant 0 : index
    %c0_18 = arith.constant 0 : index
    %39 = vector.load %arg12[%c0_17, %c0_18] : memref<16x128xf32, #tpu.memory_space<vmem>>, vector<2x128xf32>
    tpu.vector_store %arg12[%c0_17, %c0_18], %38 {strides = array<i32>} : memref<16x128xf32, #tpu.memory_space<vmem>>, vector<2x128xf32>,
    %40 = vector.extract_strided_slice %5 {offsets = [2, 0], sizes = [2, 512], strides = [1, 1]} : vector<16x512xf32> to vector<2x512xf32>
    %c0_19 = arith.constant 0 : index
    %c0_20 = arith.constant 0 : index
    %41 = vector.load %arg4[%c0_19, %c0_20] : memref<128x512xf32, #tpu.memory_space<vmem>>, vector<128x512xf32>
    %cst_21 = arith.constant dense<0.000000e+00> : vector<2x512xf32>
    %42 = tpu.matmul %38, %41, %cst_21 {dimension_numbers = #tpu.dot_dimension_numbers<[1], [0], [0], [1], [0, 0, 1, 1], [], []>} : vector<2x128xf32>, vector<128x512xf32>, vector<2x512xf32> -> vector<2x512xf32>
    %43 = arith.addf %40, %42 : vector<2x512xf32>
    %44 = vector.extract_strided_slice %43 {offsets = [0, 0], sizes = [2, 128], strides = [1, 1]} : vector<2x512xf32> to vector<2x128xf32>
    %45 = arith.negf %44 : vector<2x128xf32>
    %46 = math.exp %45 : vector<2x128xf32>
    %cst_22 = arith.constant 1.000000e+00 : f32
    %47 = vector.broadcast %cst_22 : f32 to vector<2x128xf32>
    %48 = arith.addf %47, %46 : vector<2x128xf32>
    %49 = arith.divf %47, %48 : vector<2x128xf32>
    %50 = vector.extract_strided_slice %43 {offsets = [0, 128], sizes = [2, 128], strides = [1, 1]} : vector<2x512xf32> to vector<2x128xf32>
    %51 = arith.negf %50 : vector<2x128xf32>
    %52 = math.exp %51 : vector<2x128xf32>
    %cst_23 = arith.constant 1.000000e+00 : f32
    %53 = vector.broadcast %cst_23 : f32 to vector<2x128xf32>
    %54 = arith.addf %53, %52 : vector<2x128xf32>
    %55 = arith.divf %53, %54 : vector<2x128xf32>
    %56 = vector.extract_strided_slice %43 {offsets = [0, 256], sizes = [2, 128], strides = [1, 1]} : vector<2x512xf32> to vector<2x128xf32>
    %57 = math.tanh %56 : vector<2x128xf32>
    %58 = vector.extract_strided_slice %43 {offsets = [0, 384], sizes = [2, 128], strides = [1, 1]} : vector<2x512xf32> to vector<2x128xf32>
    %59 = arith.negf %58 : vector<2x128xf32>
    %60 = math.exp %59 : vector<2x128xf32>
    %cst_24 = arith.constant 1.000000e+00 : f32
    %61 = vector.broadcast %cst_24 : f32 to vector<2x128xf32>
    %62 = arith.addf %61, %60 : vector<2x128xf32>
    %63 = arith.divf %61, %62 : vector<2x128xf32>
    %64 = arith.mulf %55, %36 : vector<2x128xf32>
    %65 = arith.mulf %49, %57 : vector<2x128xf32>
    %66 = arith.addf %64, %65 : vector<2x128xf32>
    %67 = math.tanh %66 : vector<2x128xf32>
    %68 = arith.mulf %63, %67 : vector<2x128xf32>
    %c2 = arith.constant 2 : index
    %c0_25 = arith.constant 0 : index
    %69 = vector.load %arg12[%c2, %c0_25] : memref<16x128xf32, #tpu.memory_space<vmem>>, vector<2x128xf32>
    tpu.vector_store %arg12[%c2, %c0_25], %68 {strides = array<i32>} : memref<16x128xf32, #tpu.memory_space<vmem>>, vector<2x128xf32>,
    %70 = vector.extract_strided_slice %5 {offsets = [4, 0], sizes = [2, 512], strides = [1, 1]} : vector<16x512xf32> to vector<2x512xf32>
    %c0_26 = arith.constant 0 : index
    %c0_27 = arith.constant 0 : index
    %71 = vector.load %arg4[%c0_26, %c0_27] : memref<128x512xf32, #tpu.memory_space<vmem>>, vector<128x512xf32>
    %cst_28 = arith.constant dense<0.000000e+00> : vector<2x512xf32>
    %72 = tpu.matmul %68, %71, %cst_28 {dimension_numbers = #tpu.dot_dimension_numbers<[1], [0], [0], [1], [0, 0, 1, 1], [], []>} : vector<2x128xf32>, vector<128x512xf32>, vector<2x512xf32> -> vector<2x512xf32>
    %73 = arith.addf %70, %72 : vector<2x512xf32>
    %74 = vector.extract_strided_slice %73 {offsets = [0, 0], sizes = [2, 128], strides = [1, 1]} : vector<2x512xf32> to vector<2x128xf32>
    %75 = arith.negf %74 : vector<2x128xf32>
    %76 = math.exp %75 : vector<2x128xf32>
    %cst_29 = arith.constant 1.000000e+00 : f32
    %77 = vector.broadcast %cst_29 : f32 to vector<2x128xf32>
    %78 = arith.addf %77, %76 : vector<2x128xf32>
    %79 = arith.divf %77, %78 : vector<2x128xf32>
    %80 = vector.extract_strided_slice %73 {offsets = [0, 128], sizes = [2, 128], strides = [1, 1]} : vector<2x512xf32> to vector<2x128xf32>
    %81 = arith.negf %80 : vector<2x128xf32>
    %82 = math.exp %81 : vector<2x128xf32>
    %cst_30 = arith.constant 1.000000e+00 : f32
    %83 = vector.broadcast %cst_30 : f32 to vector<2x128xf32>
    %84 = arith.addf %83, %82 : vector<2x128xf32>
    %85 = arith.divf %83, %84 : vector<2x128xf32>
    %86 = vector.extract_strided_slice %73 {offsets = [0, 256], sizes = [2, 128], strides = [1, 1]} : vector<2x512xf32> to vector<2x128xf32>
    %87 = math.tanh %86 : vector<2x128xf32>
    %88 = vector.extract_strided_slice %73 {offsets = [0, 384], sizes = [2, 128], strides = [1, 1]} : vector<2x512xf32> to vector<2x128xf32>
    %89 = arith.negf %88 : vector<2x128xf32>
    %90 = math.exp %89 : vector<2x128xf32>
    %cst_31 = arith.constant 1.000000e+00 : f32
    %91 = vector.broadcast %cst_31 : f32 to vector<2x128xf32>
    %92 = arith.addf %91, %90 : vector<2x128xf32>
    %93 = arith.divf %91, %92 : vector<2x128xf32>
    %94 = arith.mulf %85, %66 : vector<2x128xf32>
    %95 = arith.mulf %79, %87 : vector<2x128xf32>
    %96 = arith.addf %94, %95 : vector<2x128xf32>
    %97 = math.tanh %96 : vector<2x128xf32>
    %98 = arith.mulf %93, %97 : vector<2x128xf32>
    %c4 = arith.constant 4 : index
    %c0_32 = arith.constant 0 : index
    %99 = vector.load %arg12[%c4, %c0_32] : memref<16x128xf32, #tpu.memory_space<vmem>>, vector<2x128xf32>
    tpu.vector_store %arg12[%c4, %c0_32], %98 {strides = array<i32>} : memref<16x128xf32, #tpu.memory_space<vmem>>, vector<2x128xf32>,
    %100 = vector.extract_strided_slice %5 {offsets = [6, 0], sizes = [2, 512], strides = [1, 1]} : vector<16x512xf32> to vector<2x512xf32>
    %c0_33 = arith.constant 0 : index
    %c0_34 = arith.constant 0 : index
    %101 = vector.load %arg4[%c0_33, %c0_34] : memref<128x512xf32, #tpu.memory_space<vmem>>, vector<128x512xf32>
    %cst_35 = arith.constant dense<0.000000e+00> : vector<2x512xf32>
    %102 = tpu.matmul %98, %101, %cst_35 {dimension_numbers = #tpu.dot_dimension_numbers<[1], [0], [0], [1], [0, 0, 1, 1], [], []>} : vector<2x128xf32>, vector<128x512xf32>, vector<2x512xf32> -> vector<2x512xf32>
    %103 = arith.addf %100, %102 : vector<2x512xf32>
    %104 = vector.extract_strided_slice %103 {offsets = [0, 0], sizes = [2, 128], strides = [1, 1]} : vector<2x512xf32> to vector<2x128xf32>
    %105 = arith.negf %104 : vector<2x128xf32>
    %106 = math.exp %105 : vector<2x128xf32>
    %cst_36 = arith.constant 1.000000e+00 : f32
    %107 = vector.broadcast %cst_36 : f32 to vector<2x128xf32>
    %108 = arith.addf %107, %106 : vector<2x128xf32>
    %109 = arith.divf %107, %108 : vector<2x128xf32>
    %110 = vector.extract_strided_slice %103 {offsets = [0, 128], sizes = [2, 128], strides = [1, 1]} : vector<2x512xf32> to vector<2x128xf32>
    %111 = arith.negf %110 : vector<2x128xf32>
    %112 = math.exp %111 : vector<2x128xf32>
    %cst_37 = arith.constant 1.000000e+00 : f32
    %113 = vector.broadcast %cst_37 : f32 to vector<2x128xf32>
    %114 = arith.addf %113, %112 : vector<2x128xf32>
    %115 = arith.divf %113, %114 : vector<2x128xf32>
    %116 = vector.extract_strided_slice %103 {offsets = [0, 256], sizes = [2, 128], strides = [1, 1]} : vector<2x512xf32> to vector<2x128xf32>
    %117 = math.tanh %116 : vector<2x128xf32>
    %118 = vector.extract_strided_slice %103 {offsets = [0, 384], sizes = [2, 128], strides = [1, 1]} : vector<2x512xf32> to vector<2x128xf32>
    %119 = arith.negf %118 : vector<2x128xf32>
    %120 = math.exp %119 : vector<2x128xf32>
    %cst_38 = arith.constant 1.000000e+00 : f32
    %121 = vector.broadcast %cst_38 : f32 to vector<2x128xf32>
    %122 = arith.addf %121, %120 : vector<2x128xf32>
    %123 = arith.divf %121, %122 : vector<2x128xf32>
    %124 = arith.mulf %115, %96 : vector<2x128xf32>
    %125 = arith.mulf %109, %117 : vector<2x128xf32>
    %126 = arith.addf %124, %125 : vector<2x128xf32>
    %127 = math.tanh %126 : vector<2x128xf32>
    %128 = arith.mulf %123, %127 : vector<2x128xf32>
    %c6 = arith.constant 6 : index
    %c0_39 = arith.constant 0 : index
    %129 = vector.load %arg12[%c6, %c0_39] : memref<16x128xf32, #tpu.memory_space<vmem>>, vector<2x128xf32>
    tpu.vector_store %arg12[%c6, %c0_39], %128 {strides = array<i32>} : memref<16x128xf32, #tpu.memory_space<vmem>>, vector<2x128xf32>,
    %130 = vector.extract_strided_slice %5 {offsets = [8, 0], sizes = [2, 512], strides = [1, 1]} : vector<16x512xf32> to vector<2x512xf32>
    %c0_40 = arith.constant 0 : index
    %c0_41 = arith.constant 0 : index
    %131 = vector.load %arg4[%c0_40, %c0_41] : memref<128x512xf32, #tpu.memory_space<vmem>>, vector<128x512xf32>
    %cst_42 = arith.constant dense<0.000000e+00> : vector<2x512xf32>
    %132 = tpu.matmul %128, %131, %cst_42 {dimension_numbers = #tpu.dot_dimension_numbers<[1], [0], [0], [1], [0, 0, 1, 1], [], []>} : vector<2x128xf32>, vector<128x512xf32>, vector<2x512xf32> -> vector<2x512xf32>
    %133 = arith.addf %130, %132 : vector<2x512xf32>
    %134 = vector.extract_strided_slice %133 {offsets = [0, 0], sizes = [2, 128], strides = [1, 1]} : vector<2x512xf32> to vector<2x128xf32>
    %135 = arith.negf %134 : vector<2x128xf32>
    %136 = math.exp %135 : vector<2x128xf32>
    %cst_43 = arith.constant 1.000000e+00 : f32
    %137 = vector.broadcast %cst_43 : f32 to vector<2x128xf32>
    %138 = arith.addf %137, %136 : vector<2x128xf32>
    %139 = arith.divf %137, %138 : vector<2x128xf32>
    %140 = vector.extract_strided_slice %133 {offsets = [0, 128], sizes = [2, 128], strides = [1, 1]} : vector<2x512xf32> to vector<2x128xf32>
    %141 = arith.negf %140 : vector<2x128xf32>
    %142 = math.exp %141 : vector<2x128xf32>
    %cst_44 = arith.constant 1.000000e+00 : f32
    %143 = vector.broadcast %cst_44 : f32 to vector<2x128xf32>
    %144 = arith.addf %143, %142 : vector<2x128xf32>
    %145 = arith.divf %143, %144 : vector<2x128xf32>
    %146 = vector.extract_strided_slice %133 {offsets = [0, 256], sizes = [2, 128], strides = [1, 1]} : vector<2x512xf32> to vector<2x128xf32>
    %147 = math.tanh %146 : vector<2x128xf32>
    %148 = vector.extract_strided_slice %133 {offsets = [0, 384], sizes = [2, 128], strides = [1, 1]} : vector<2x512xf32> to vector<2x128xf32>
    %149 = arith.negf %148 : vector<2x128xf32>
    %150 = math.exp %149 : vector<2x128xf32>
    %cst_45 = arith.constant 1.000000e+00 : f32
    %151 = vector.broadcast %cst_45 : f32 to vector<2x128xf32>
    %152 = arith.addf %151, %150 : vector<2x128xf32>
    %153 = arith.divf %151, %152 : vector<2x128xf32>
    %154 = arith.mulf %145, %126 : vector<2x128xf32>
    %155 = arith.mulf %139, %147 : vector<2x128xf32>
    %156 = arith.addf %154, %155 : vector<2x128xf32>
    %157 = math.tanh %156 : vector<2x128xf32>
    %158 = arith.mulf %153, %157 : vector<2x128xf32>
    %c8 = arith.constant 8 : index
    %c0_46 = arith.constant 0 : index
    %159 = vector.load %arg12[%c8, %c0_46] : memref<16x128xf32, #tpu.memory_space<vmem>>, vector<2x128xf32>
    tpu.vector_store %arg12[%c8, %c0_46], %158 {strides = array<i32>} : memref<16x128xf32, #tpu.memory_space<vmem>>, vector<2x128xf32>,
    %160 = vector.extract_strided_slice %5 {offsets = [10, 0], sizes = [2, 512], strides = [1, 1]} : vector<16x512xf32> to vector<2x512xf32>
    %c0_47 = arith.constant 0 : index
    %c0_48 = arith.constant 0 : index
    %161 = vector.load %arg4[%c0_47, %c0_48] : memref<128x512xf32, #tpu.memory_space<vmem>>, vector<128x512xf32>
    %cst_49 = arith.constant dense<0.000000e+00> : vector<2x512xf32>
    %162 = tpu.matmul %158, %161, %cst_49 {dimension_numbers = #tpu.dot_dimension_numbers<[1], [0], [0], [1], [0, 0, 1, 1], [], []>} : vector<2x128xf32>, vector<128x512xf32>, vector<2x512xf32> -> vector<2x512xf32>
    %163 = arith.addf %160, %162 : vector<2x512xf32>
    %164 = vector.extract_strided_slice %163 {offsets = [0, 0], sizes = [2, 128], strides = [1, 1]} : vector<2x512xf32> to vector<2x128xf32>
    %165 = arith.negf %164 : vector<2x128xf32>
    %166 = math.exp %165 : vector<2x128xf32>
    %cst_50 = arith.constant 1.000000e+00 : f32
    %167 = vector.broadcast %cst_50 : f32 to vector<2x128xf32>
    %168 = arith.addf %167, %166 : vector<2x128xf32>
    %169 = arith.divf %167, %168 : vector<2x128xf32>
    %170 = vector.extract_strided_slice %163 {offsets = [0, 128], sizes = [2, 128], strides = [1, 1]} : vector<2x512xf32> to vector<2x128xf32>
    %171 = arith.negf %170 : vector<2x128xf32>
    %172 = math.exp %171 : vector<2x128xf32>
    %cst_51 = arith.constant 1.000000e+00 : f32
    %173 = vector.broadcast %cst_51 : f32 to vector<2x128xf32>
    %174 = arith.addf %173, %172 : vector<2x128xf32>
    %175 = arith.divf %173, %174 : vector<2x128xf32>
    %176 = vector.extract_strided_slice %163 {offsets = [0, 256], sizes = [2, 128], strides = [1, 1]} : vector<2x512xf32> to vector<2x128xf32>
    %177 = math.tanh %176 : vector<2x128xf32>
    %178 = vector.extract_strided_slice %163 {offsets = [0, 384], sizes = [2, 128], strides = [1, 1]} : vector<2x512xf32> to vector<2x128xf32>
    %179 = arith.negf %178 : vector<2x128xf32>
    %180 = math.exp %179 : vector<2x128xf32>
    %cst_52 = arith.constant 1.000000e+00 : f32
    %181 = vector.broadcast %cst_52 : f32 to vector<2x128xf32>
    %182 = arith.addf %181, %180 : vector<2x128xf32>
    %183 = arith.divf %181, %182 : vector<2x128xf32>
    %184 = arith.mulf %175, %156 : vector<2x128xf32>
    %185 = arith.mulf %169, %177 : vector<2x128xf32>
    %186 = arith.addf %184, %185 : vector<2x128xf32>
    %187 = math.tanh %186 : vector<2x128xf32>
    %188 = arith.mulf %183, %187 : vector<2x128xf32>
    %c10 = arith.constant 10 : index
    %c0_53 = arith.constant 0 : index
    %189 = vector.load %arg12[%c10, %c0_53] : memref<16x128xf32, #tpu.memory_space<vmem>>, vector<2x128xf32>
    tpu.vector_store %arg12[%c10, %c0_53], %188 {strides = array<i32>} : memref<16x128xf32, #tpu.memory_space<vmem>>, vector<2x128xf32>,
    %190 = vector.extract_strided_slice %5 {offsets = [12, 0], sizes = [2, 512], strides = [1, 1]} : vector<16x512xf32> to vector<2x512xf32>
    %c0_54 = arith.constant 0 : index
    %c0_55 = arith.constant 0 : index
    %191 = vector.load %arg4[%c0_54, %c0_55] : memref<128x512xf32, #tpu.memory_space<vmem>>, vector<128x512xf32>
    %cst_56 = arith.constant dense<0.000000e+00> : vector<2x512xf32>
    %192 = tpu.matmul %188, %191, %cst_56 {dimension_numbers = #tpu.dot_dimension_numbers<[1], [0], [0], [1], [0, 0, 1, 1], [], []>} : vector<2x128xf32>, vector<128x512xf32>, vector<2x512xf32> -> vector<2x512xf32>
    %193 = arith.addf %190, %192 : vector<2x512xf32>
    %194 = vector.extract_strided_slice %193 {offsets = [0, 0], sizes = [2, 128], strides = [1, 1]} : vector<2x512xf32> to vector<2x128xf32>
    %195 = arith.negf %194 : vector<2x128xf32>
    %196 = math.exp %195 : vector<2x128xf32>
    %cst_57 = arith.constant 1.000000e+00 : f32
    %197 = vector.broadcast %cst_57 : f32 to vector<2x128xf32>
    %198 = arith.addf %197, %196 : vector<2x128xf32>
    %199 = arith.divf %197, %198 : vector<2x128xf32>
    %200 = vector.extract_strided_slice %193 {offsets = [0, 128], sizes = [2, 128], strides = [1, 1]} : vector<2x512xf32> to vector<2x128xf32>
    %201 = arith.negf %200 : vector<2x128xf32>
    %202 = math.exp %201 : vector<2x128xf32>
    %cst_58 = arith.constant 1.000000e+00 : f32
    %203 = vector.broadcast %cst_58 : f32 to vector<2x128xf32>
    %204 = arith.addf %203, %202 : vector<2x128xf32>
    %205 = arith.divf %203, %204 : vector<2x128xf32>
    %206 = vector.extract_strided_slice %193 {offsets = [0, 256], sizes = [2, 128], strides = [1, 1]} : vector<2x512xf32> to vector<2x128xf32>
    %207 = math.tanh %206 : vector<2x128xf32>
    %208 = vector.extract_strided_slice %193 {offsets = [0, 384], sizes = [2, 128], strides = [1, 1]} : vector<2x512xf32> to vector<2x128xf32>
    %209 = arith.negf %208 : vector<2x128xf32>
    %210 = math.exp %209 : vector<2x128xf32>
    %cst_59 = arith.constant 1.000000e+00 : f32
    %211 = vector.broadcast %cst_59 : f32 to vector<2x128xf32>
    %212 = arith.addf %211, %210 : vector<2x128xf32>
    %213 = arith.divf %211, %212 : vector<2x128xf32>
    %214 = arith.mulf %205, %186 : vector<2x128xf32>
    %215 = arith.mulf %199, %207 : vector<2x128xf32>
    %216 = arith.addf %214, %215 : vector<2x128xf32>
    %217 = math.tanh %216 : vector<2x128xf32>
    %218 = arith.mulf %213, %217 : vector<2x128xf32>
    %c12 = arith.constant 12 : index
    %c0_60 = arith.constant 0 : index
    %219 = vector.load %arg12[%c12, %c0_60] : memref<16x128xf32, #tpu.memory_space<vmem>>, vector<2x128xf32>
    tpu.vector_store %arg12[%c12, %c0_60], %218 {strides = array<i32>} : memref<16x128xf32, #tpu.memory_space<vmem>>, vector<2x128xf32>,
    %220 = vector.extract_strided_slice %5 {offsets = [14, 0], sizes = [2, 512], strides = [1, 1]} : vector<16x512xf32> to vector<2x512xf32>
    %c0_61 = arith.constant 0 : index
    %c0_62 = arith.constant 0 : index
    %221 = vector.load %arg4[%c0_61, %c0_62] : memref<128x512xf32, #tpu.memory_space<vmem>>, vector<128x512xf32>
    %cst_63 = arith.constant dense<0.000000e+00> : vector<2x512xf32>
    %222 = tpu.matmul %218, %221, %cst_63 {dimension_numbers = #tpu.dot_dimension_numbers<[1], [0], [0], [1], [0, 0, 1, 1], [], []>} : vector<2x128xf32>, vector<128x512xf32>, vector<2x512xf32> -> vector<2x512xf32>
    %223 = arith.addf %220, %222 : vector<2x512xf32>
    %224 = vector.extract_strided_slice %223 {offsets = [0, 0], sizes = [2, 128], strides = [1, 1]} : vector<2x512xf32> to vector<2x128xf32>
    %225 = arith.negf %224 : vector<2x128xf32>
    %226 = math.exp %225 : vector<2x128xf32>
    %cst_64 = arith.constant 1.000000e+00 : f32
    %227 = vector.broadcast %cst_64 : f32 to vector<2x128xf32>
    %228 = arith.addf %227, %226 : vector<2x128xf32>
    %229 = arith.divf %227, %228 : vector<2x128xf32>
    %230 = vector.extract_strided_slice %223 {offsets = [0, 128], sizes = [2, 128], strides = [1, 1]} : vector<2x512xf32> to vector<2x128xf32>
    %231 = arith.negf %230 : vector<2x128xf32>
    %232 = math.exp %231 : vector<2x128xf32>
    %cst_65 = arith.constant 1.000000e+00 : f32
    %233 = vector.broadcast %cst_65 : f32 to vector<2x128xf32>
    %234 = arith.addf %233, %232 : vector<2x128xf32>
    %235 = arith.divf %233, %234 : vector<2x128xf32>
    %236 = vector.extract_strided_slice %223 {offsets = [0, 256], sizes = [2, 128], strides = [1, 1]} : vector<2x512xf32> to vector<2x128xf32>
    %237 = math.tanh %236 : vector<2x128xf32>
    %238 = vector.extract_strided_slice %223 {offsets = [0, 384], sizes = [2, 128], strides = [1, 1]} : vector<2x512xf32> to vector<2x128xf32>
    %239 = arith.negf %238 : vector<2x128xf32>
    %240 = math.exp %239 : vector<2x128xf32>
    %cst_66 = arith.constant 1.000000e+00 : f32
    %241 = vector.broadcast %cst_66 : f32 to vector<2x128xf32>
    %242 = arith.addf %241, %240 : vector<2x128xf32>
    %243 = arith.divf %241, %242 : vector<2x128xf32>
    %244 = arith.mulf %235, %216 : vector<2x128xf32>
    %245 = arith.mulf %229, %237 : vector<2x128xf32>
    %246 = arith.addf %244, %245 : vector<2x128xf32>
    %247 = math.tanh %246 : vector<2x128xf32>
    %248 = arith.mulf %243, %247 : vector<2x128xf32>
    %c14 = arith.constant 14 : index
    %c0_67 = arith.constant 0 : index
    %249 = vector.load %arg12[%c14, %c0_67] : memref<16x128xf32, #tpu.memory_space<vmem>>, vector<2x128xf32>
    tpu.vector_store %arg12[%c14, %c0_67], %248 {strides = array<i32>} : memref<16x128xf32, #tpu.memory_space<vmem>>, vector<2x128xf32>,
    %c0_68 = arith.constant 0 : index
    %c0_69 = arith.constant 0 : index
    %250 = vector.load %arg12[%c0_68, %c0_69] : memref<16x128xf32, #tpu.memory_space<vmem>>, vector<16x128xf32>
    %c0_70 = arith.constant 0 : index
    %c0_71 = arith.constant 0 : index
    %251 = vector.load %arg6[%c0_70, %c0_71] : memref<128x512xf32, #tpu.memory_space<vmem>>, vector<128x512xf32>
    %cst_72 = arith.constant dense<0.000000e+00> : vector<16x512xf32>
    %252 = tpu.matmul %250, %251, %cst_72 {dimension_numbers = #tpu.dot_dimension_numbers<[1], [0], [0], [1], [0, 0, 1, 1], [], []>} : vector<16x128xf32>, vector<128x512xf32>, vector<16x512xf32> -> vector<16x512xf32>
    %c0_73 = arith.constant 0 : index
    %c0_74 = arith.constant 0 : index
    %253 = vector.load %arg8[%c0_73, %c0_74] : memref<1x512xf32, #tpu.memory_space<vmem>>, vector<1x512xf32>
    %254 = vector.broadcast %253 : vector<1x512xf32> to vector<16x512xf32>
    %255 = arith.addf %252, %254 : vector<16x512xf32>
    %c1 = arith.constant 1 : index
    %c0_75 = arith.constant 0 : index
    %c0_76 = arith.constant 0 : index
    %256 = vector.load %arg1[%c1, %c0_75, %c0_76] : memref<2x2x128xf32, #tpu.memory_space<vmem>>, vector<1x2x128xf32>
    %257 = vector.shape_cast %256 : vector<1x2x128xf32> to vector<2x128xf32>
    %c1_77 = arith.constant 1 : index
    %c0_78 = arith.constant 0 : index
    %c0_79 = arith.constant 0 : index
    %258 = vector.load %arg2[%c1_77, %c0_78, %c0_79] : memref<2x2x128xf32, #tpu.memory_space<vmem>>, vector<1x2x128xf32>
    %259 = vector.shape_cast %258 : vector<1x2x128xf32> to vector<2x128xf32>
    %260 = vector.extract_strided_slice %255 {offsets = [0, 0], sizes = [2, 512], strides = [1, 1]} : vector<16x512xf32> to vector<2x512xf32>
    %c0_80 = arith.constant 0 : index
    %c0_81 = arith.constant 0 : index
    %261 = vector.load %arg7[%c0_80, %c0_81] : memref<128x512xf32, #tpu.memory_space<vmem>>, vector<128x512xf32>
    %cst_82 = arith.constant dense<0.000000e+00> : vector<2x512xf32>
    %262 = tpu.matmul %257, %261, %cst_82 {dimension_numbers = #tpu.dot_dimension_numbers<[1], [0], [0], [1], [0, 0, 1, 1], [], []>} : vector<2x128xf32>, vector<128x512xf32>, vector<2x512xf32> -> vector<2x512xf32>
    %263 = arith.addf %260, %262 : vector<2x512xf32>
    %264 = vector.extract_strided_slice %263 {offsets = [0, 0], sizes = [2, 128], strides = [1, 1]} : vector<2x512xf32> to vector<2x128xf32>
    %265 = arith.negf %264 : vector<2x128xf32>
    %266 = math.exp %265 : vector<2x128xf32>
    %cst_83 = arith.constant 1.000000e+00 : f32
    %267 = vector.broadcast %cst_83 : f32 to vector<2x128xf32>
    %268 = arith.addf %267, %266 : vector<2x128xf32>
    %269 = arith.divf %267, %268 : vector<2x128xf32>
    %270 = vector.extract_strided_slice %263 {offsets = [0, 128], sizes = [2, 128], strides = [1, 1]} : vector<2x512xf32> to vector<2x128xf32>
    %271 = arith.negf %270 : vector<2x128xf32>
    %272 = math.exp %271 : vector<2x128xf32>
    %cst_84 = arith.constant 1.000000e+00 : f32
    %273 = vector.broadcast %cst_84 : f32 to vector<2x128xf32>
    %274 = arith.addf %273, %272 : vector<2x128xf32>
    %275 = arith.divf %273, %274 : vector<2x128xf32>
    %276 = vector.extract_strided_slice %263 {offsets = [0, 256], sizes = [2, 128], strides = [1, 1]} : vector<2x512xf32> to vector<2x128xf32>
    %277 = math.tanh %276 : vector<2x128xf32>
    %278 = vector.extract_strided_slice %263 {offsets = [0, 384], sizes = [2, 128], strides = [1, 1]} : vector<2x512xf32> to vector<2x128xf32>
    %279 = arith.negf %278 : vector<2x128xf32>
    %280 = math.exp %279 : vector<2x128xf32>
    %cst_85 = arith.constant 1.000000e+00 : f32
    %281 = vector.broadcast %cst_85 : f32 to vector<2x128xf32>
    %282 = arith.addf %281, %280 : vector<2x128xf32>
    %283 = arith.divf %281, %282 : vector<2x128xf32>
    %284 = arith.mulf %275, %259 : vector<2x128xf32>
    %285 = arith.mulf %269, %277 : vector<2x128xf32>
    %286 = arith.addf %284, %285 : vector<2x128xf32>
    %287 = math.tanh %286 : vector<2x128xf32>
    %288 = arith.mulf %283, %287 : vector<2x128xf32>
    %c0_86 = arith.constant 0 : index
    %c0_87 = arith.constant 0 : index
    %289 = vector.load %arg13[%c0_86, %c0_87] : memref<16x128xf32, #tpu.memory_space<vmem>>, vector<2x128xf32>
    tpu.vector_store %arg13[%c0_86, %c0_87], %288 {strides = array<i32>} : memref<16x128xf32, #tpu.memory_space<vmem>>, vector<2x128xf32>,
    %290 = vector.extract_strided_slice %255 {offsets = [2, 0], sizes = [2, 512], strides = [1, 1]} : vector<16x512xf32> to vector<2x512xf32>
    %c0_88 = arith.constant 0 : index
    %c0_89 = arith.constant 0 : index
    %291 = vector.load %arg7[%c0_88, %c0_89] : memref<128x512xf32, #tpu.memory_space<vmem>>, vector<128x512xf32>
    %cst_90 = arith.constant dense<0.000000e+00> : vector<2x512xf32>
    %292 = tpu.matmul %288, %291, %cst_90 {dimension_numbers = #tpu.dot_dimension_numbers<[1], [0], [0], [1], [0, 0, 1, 1], [], []>} : vector<2x128xf32>, vector<128x512xf32>, vector<2x512xf32> -> vector<2x512xf32>
    %293 = arith.addf %290, %292 : vector<2x512xf32>
    %294 = vector.extract_strided_slice %293 {offsets = [0, 0], sizes = [2, 128], strides = [1, 1]} : vector<2x512xf32> to vector<2x128xf32>
    %295 = arith.negf %294 : vector<2x128xf32>
    %296 = math.exp %295 : vector<2x128xf32>
    %cst_91 = arith.constant 1.000000e+00 : f32
    %297 = vector.broadcast %cst_91 : f32 to vector<2x128xf32>
    %298 = arith.addf %297, %296 : vector<2x128xf32>
    %299 = arith.divf %297, %298 : vector<2x128xf32>
    %300 = vector.extract_strided_slice %293 {offsets = [0, 128], sizes = [2, 128], strides = [1, 1]} : vector<2x512xf32> to vector<2x128xf32>
    %301 = arith.negf %300 : vector<2x128xf32>
    %302 = math.exp %301 : vector<2x128xf32>
    %cst_92 = arith.constant 1.000000e+00 : f32
    %303 = vector.broadcast %cst_92 : f32 to vector<2x128xf32>
    %304 = arith.addf %303, %302 : vector<2x128xf32>
    %305 = arith.divf %303, %304 : vector<2x128xf32>
    %306 = vector.extract_strided_slice %293 {offsets = [0, 256], sizes = [2, 128], strides = [1, 1]} : vector<2x512xf32> to vector<2x128xf32>
    %307 = math.tanh %306 : vector<2x128xf32>
    %308 = vector.extract_strided_slice %293 {offsets = [0, 384], sizes = [2, 128], strides = [1, 1]} : vector<2x512xf32> to vector<2x128xf32>
    %309 = arith.negf %308 : vector<2x128xf32>
    %310 = math.exp %309 : vector<2x128xf32>
    %cst_93 = arith.constant 1.000000e+00 : f32
    %311 = vector.broadcast %cst_93 : f32 to vector<2x128xf32>
    %312 = arith.addf %311, %310 : vector<2x128xf32>
    %313 = arith.divf %311, %312 : vector<2x128xf32>
    %314 = arith.mulf %305, %286 : vector<2x128xf32>
    %315 = arith.mulf %299, %307 : vector<2x128xf32>
    %316 = arith.addf %314, %315 : vector<2x128xf32>
    %317 = math.tanh %316 : vector<2x128xf32>
    %318 = arith.mulf %313, %317 : vector<2x128xf32>
    %c2_94 = arith.constant 2 : index
    %c0_95 = arith.constant 0 : index
    %319 = vector.load %arg13[%c2_94, %c0_95] : memref<16x128xf32, #tpu.memory_space<vmem>>, vector<2x128xf32>
    tpu.vector_store %arg13[%c2_94, %c0_95], %318 {strides = array<i32>} : memref<16x128xf32, #tpu.memory_space<vmem>>, vector<2x128xf32>,
    %320 = vector.extract_strided_slice %255 {offsets = [4, 0], sizes = [2, 512], strides = [1, 1]} : vector<16x512xf32> to vector<2x512xf32>
    %c0_96 = arith.constant 0 : index
    %c0_97 = arith.constant 0 : index
    %321 = vector.load %arg7[%c0_96, %c0_97] : memref<128x512xf32, #tpu.memory_space<vmem>>, vector<128x512xf32>
    %cst_98 = arith.constant dense<0.000000e+00> : vector<2x512xf32>
    %322 = tpu.matmul %318, %321, %cst_98 {dimension_numbers = #tpu.dot_dimension_numbers<[1], [0], [0], [1], [0, 0, 1, 1], [], []>} : vector<2x128xf32>, vector<128x512xf32>, vector<2x512xf32> -> vector<2x512xf32>
    %323 = arith.addf %320, %322 : vector<2x512xf32>
    %324 = vector.extract_strided_slice %323 {offsets = [0, 0], sizes = [2, 128], strides = [1, 1]} : vector<2x512xf32> to vector<2x128xf32>
    %325 = arith.negf %324 : vector<2x128xf32>
    %326 = math.exp %325 : vector<2x128xf32>
    %cst_99 = arith.constant 1.000000e+00 : f32
    %327 = vector.broadcast %cst_99 : f32 to vector<2x128xf32>
    %328 = arith.addf %327, %326 : vector<2x128xf32>
    %329 = arith.divf %327, %328 : vector<2x128xf32>
    %330 = vector.extract_strided_slice %323 {offsets = [0, 128], sizes = [2, 128], strides = [1, 1]} : vector<2x512xf32> to vector<2x128xf32>
    %331 = arith.negf %330 : vector<2x128xf32>
    %332 = math.exp %331 : vector<2x128xf32>
    %cst_100 = arith.constant 1.000000e+00 : f32
    %333 = vector.broadcast %cst_100 : f32 to vector<2x128xf32>
    %334 = arith.addf %333, %332 : vector<2x128xf32>
    %335 = arith.divf %333, %334 : vector<2x128xf32>
    %336 = vector.extract_strided_slice %323 {offsets = [0, 256], sizes = [2, 128], strides = [1, 1]} : vector<2x512xf32> to vector<2x128xf32>
    %337 = math.tanh %336 : vector<2x128xf32>
    %338 = vector.extract_strided_slice %323 {offsets = [0, 384], sizes = [2, 128], strides = [1, 1]} : vector<2x512xf32> to vector<2x128xf32>
    %339 = arith.negf %338 : vector<2x128xf32>
    %340 = math.exp %339 : vector<2x128xf32>
    %cst_101 = arith.constant 1.000000e+00 : f32
    %341 = vector.broadcast %cst_101 : f32 to vector<2x128xf32>
    %342 = arith.addf %341, %340 : vector<2x128xf32>
    %343 = arith.divf %341, %342 : vector<2x128xf32>
    %344 = arith.mulf %335, %316 : vector<2x128xf32>
    %345 = arith.mulf %329, %337 : vector<2x128xf32>
    %346 = arith.addf %344, %345 : vector<2x128xf32>
    %347 = math.tanh %346 : vector<2x128xf32>
    %348 = arith.mulf %343, %347 : vector<2x128xf32>
    %c4_102 = arith.constant 4 : index
    %c0_103 = arith.constant 0 : index
    %349 = vector.load %arg13[%c4_102, %c0_103] : memref<16x128xf32, #tpu.memory_space<vmem>>, vector<2x128xf32>
    tpu.vector_store %arg13[%c4_102, %c0_103], %348 {strides = array<i32>} : memref<16x128xf32, #tpu.memory_space<vmem>>, vector<2x128xf32>,
    %350 = vector.extract_strided_slice %255 {offsets = [6, 0], sizes = [2, 512], strides = [1, 1]} : vector<16x512xf32> to vector<2x512xf32>
    %c0_104 = arith.constant 0 : index
    %c0_105 = arith.constant 0 : index
    %351 = vector.load %arg7[%c0_104, %c0_105] : memref<128x512xf32, #tpu.memory_space<vmem>>, vector<128x512xf32>
    %cst_106 = arith.constant dense<0.000000e+00> : vector<2x512xf32>
    %352 = tpu.matmul %348, %351, %cst_106 {dimension_numbers = #tpu.dot_dimension_numbers<[1], [0], [0], [1], [0, 0, 1, 1], [], []>} : vector<2x128xf32>, vector<128x512xf32>, vector<2x512xf32> -> vector<2x512xf32>
    %353 = arith.addf %350, %352 : vector<2x512xf32>
    %354 = vector.extract_strided_slice %353 {offsets = [0, 0], sizes = [2, 128], strides = [1, 1]} : vector<2x512xf32> to vector<2x128xf32>
    %355 = arith.negf %354 : vector<2x128xf32>
    %356 = math.exp %355 : vector<2x128xf32>
    %cst_107 = arith.constant 1.000000e+00 : f32
    %357 = vector.broadcast %cst_107 : f32 to vector<2x128xf32>
    %358 = arith.addf %357, %356 : vector<2x128xf32>
    %359 = arith.divf %357, %358 : vector<2x128xf32>
    %360 = vector.extract_strided_slice %353 {offsets = [0, 128], sizes = [2, 128], strides = [1, 1]} : vector<2x512xf32> to vector<2x128xf32>
    %361 = arith.negf %360 : vector<2x128xf32>
    %362 = math.exp %361 : vector<2x128xf32>
    %cst_108 = arith.constant 1.000000e+00 : f32
    %363 = vector.broadcast %cst_108 : f32 to vector<2x128xf32>
    %364 = arith.addf %363, %362 : vector<2x128xf32>
    %365 = arith.divf %363, %364 : vector<2x128xf32>
    %366 = vector.extract_strided_slice %353 {offsets = [0, 256], sizes = [2, 128], strides = [1, 1]} : vector<2x512xf32> to vector<2x128xf32>
    %367 = math.tanh %366 : vector<2x128xf32>
    %368 = vector.extract_strided_slice %353 {offsets = [0, 384], sizes = [2, 128], strides = [1, 1]} : vector<2x512xf32> to vector<2x128xf32>
    %369 = arith.negf %368 : vector<2x128xf32>
    %370 = math.exp %369 : vector<2x128xf32>
    %cst_109 = arith.constant 1.000000e+00 : f32
    %371 = vector.broadcast %cst_109 : f32 to vector<2x128xf32>
    %372 = arith.addf %371, %370 : vector<2x128xf32>
    %373 = arith.divf %371, %372 : vector<2x128xf32>
    %374 = arith.mulf %365, %346 : vector<2x128xf32>
    %375 = arith.mulf %359, %367 : vector<2x128xf32>
    %376 = arith.addf %374, %375 : vector<2x128xf32>
    %377 = math.tanh %376 : vector<2x128xf32>
    %378 = arith.mulf %373, %377 : vector<2x128xf32>
    %c6_110 = arith.constant 6 : index
    %c0_111 = arith.constant 0 : index
    %379 = vector.load %arg13[%c6_110, %c0_111] : memref<16x128xf32, #tpu.memory_space<vmem>>, vector<2x128xf32>
    tpu.vector_store %arg13[%c6_110, %c0_111], %378 {strides = array<i32>} : memref<16x128xf32, #tpu.memory_space<vmem>>, vector<2x128xf32>,
    %380 = vector.extract_strided_slice %255 {offsets = [8, 0], sizes = [2, 512], strides = [1, 1]} : vector<16x512xf32> to vector<2x512xf32>
    %c0_112 = arith.constant 0 : index
    %c0_113 = arith.constant 0 : index
    %381 = vector.load %arg7[%c0_112, %c0_113] : memref<128x512xf32, #tpu.memory_space<vmem>>, vector<128x512xf32>
    %cst_114 = arith.constant dense<0.000000e+00> : vector<2x512xf32>
    %382 = tpu.matmul %378, %381, %cst_114 {dimension_numbers = #tpu.dot_dimension_numbers<[1], [0], [0], [1], [0, 0, 1, 1], [], []>} : vector<2x128xf32>, vector<128x512xf32>, vector<2x512xf32> -> vector<2x512xf32>
    %383 = arith.addf %380, %382 : vector<2x512xf32>
    %384 = vector.extract_strided_slice %383 {offsets = [0, 0], sizes = [2, 128], strides = [1, 1]} : vector<2x512xf32> to vector<2x128xf32>
    %385 = arith.negf %384 : vector<2x128xf32>
    %386 = math.exp %385 : vector<2x128xf32>
    %cst_115 = arith.constant 1.000000e+00 : f32
    %387 = vector.broadcast %cst_115 : f32 to vector<2x128xf32>
    %388 = arith.addf %387, %386 : vector<2x128xf32>
    %389 = arith.divf %387, %388 : vector<2x128xf32>
    %390 = vector.extract_strided_slice %383 {offsets = [0, 128], sizes = [2, 128], strides = [1, 1]} : vector<2x512xf32> to vector<2x128xf32>
    %391 = arith.negf %390 : vector<2x128xf32>
    %392 = math.exp %391 : vector<2x128xf32>
    %cst_116 = arith.constant 1.000000e+00 : f32
    %393 = vector.broadcast %cst_116 : f32 to vector<2x128xf32>
    %394 = arith.addf %393, %392 : vector<2x128xf32>
    %395 = arith.divf %393, %394 : vector<2x128xf32>
    %396 = vector.extract_strided_slice %383 {offsets = [0, 256], sizes = [2, 128], strides = [1, 1]} : vector<2x512xf32> to vector<2x128xf32>
    %397 = math.tanh %396 : vector<2x128xf32>
    %398 = vector.extract_strided_slice %383 {offsets = [0, 384], sizes = [2, 128], strides = [1, 1]} : vector<2x512xf32> to vector<2x128xf32>
    %399 = arith.negf %398 : vector<2x128xf32>
    %400 = math.exp %399 : vector<2x128xf32>
    %cst_117 = arith.constant 1.000000e+00 : f32
    %401 = vector.broadcast %cst_117 : f32 to vector<2x128xf32>
    %402 = arith.addf %401, %400 : vector<2x128xf32>
    %403 = arith.divf %401, %402 : vector<2x128xf32>
    %404 = arith.mulf %395, %376 : vector<2x128xf32>
    %405 = arith.mulf %389, %397 : vector<2x128xf32>
    %406 = arith.addf %404, %405 : vector<2x128xf32>
    %407 = math.tanh %406 : vector<2x128xf32>
    %408 = arith.mulf %403, %407 : vector<2x128xf32>
    %c8_118 = arith.constant 8 : index
    %c0_119 = arith.constant 0 : index
    %409 = vector.load %arg13[%c8_118, %c0_119] : memref<16x128xf32, #tpu.memory_space<vmem>>, vector<2x128xf32>
    tpu.vector_store %arg13[%c8_118, %c0_119], %408 {strides = array<i32>} : memref<16x128xf32, #tpu.memory_space<vmem>>, vector<2x128xf32>,
    %410 = vector.extract_strided_slice %255 {offsets = [10, 0], sizes = [2, 512], strides = [1, 1]} : vector<16x512xf32> to vector<2x512xf32>
    %c0_120 = arith.constant 0 : index
    %c0_121 = arith.constant 0 : index
    %411 = vector.load %arg7[%c0_120, %c0_121] : memref<128x512xf32, #tpu.memory_space<vmem>>, vector<128x512xf32>
    %cst_122 = arith.constant dense<0.000000e+00> : vector<2x512xf32>
    %412 = tpu.matmul %408, %411, %cst_122 {dimension_numbers = #tpu.dot_dimension_numbers<[1], [0], [0], [1], [0, 0, 1, 1], [], []>} : vector<2x128xf32>, vector<128x512xf32>, vector<2x512xf32> -> vector<2x512xf32>
    %413 = arith.addf %410, %412 : vector<2x512xf32>
    %414 = vector.extract_strided_slice %413 {offsets = [0, 0], sizes = [2, 128], strides = [1, 1]} : vector<2x512xf32> to vector<2x128xf32>
    %415 = arith.negf %414 : vector<2x128xf32>
    %416 = math.exp %415 : vector<2x128xf32>
    %cst_123 = arith.constant 1.000000e+00 : f32
    %417 = vector.broadcast %cst_123 : f32 to vector<2x128xf32>
    %418 = arith.addf %417, %416 : vector<2x128xf32>
    %419 = arith.divf %417, %418 : vector<2x128xf32>
    %420 = vector.extract_strided_slice %413 {offsets = [0, 128], sizes = [2, 128], strides = [1, 1]} : vector<2x512xf32> to vector<2x128xf32>
    %421 = arith.negf %420 : vector<2x128xf32>
    %422 = math.exp %421 : vector<2x128xf32>
    %cst_124 = arith.constant 1.000000e+00 : f32
    %423 = vector.broadcast %cst_124 : f32 to vector<2x128xf32>
    %424 = arith.addf %423, %422 : vector<2x128xf32>
    %425 = arith.divf %423, %424 : vector<2x128xf32>
    %426 = vector.extract_strided_slice %413 {offsets = [0, 256], sizes = [2, 128], strides = [1, 1]} : vector<2x512xf32> to vector<2x128xf32>
    %427 = math.tanh %426 : vector<2x128xf32>
    %428 = vector.extract_strided_slice %413 {offsets = [0, 384], sizes = [2, 128], strides = [1, 1]} : vector<2x512xf32> to vector<2x128xf32>
    %429 = arith.negf %428 : vector<2x128xf32>
    %430 = math.exp %429 : vector<2x128xf32>
    %cst_125 = arith.constant 1.000000e+00 : f32
    %431 = vector.broadcast %cst_125 : f32 to vector<2x128xf32>
    %432 = arith.addf %431, %430 : vector<2x128xf32>
    %433 = arith.divf %431, %432 : vector<2x128xf32>
    %434 = arith.mulf %425, %406 : vector<2x128xf32>
    %435 = arith.mulf %419, %427 : vector<2x128xf32>
    %436 = arith.addf %434, %435 : vector<2x128xf32>
    %437 = math.tanh %436 : vector<2x128xf32>
    %438 = arith.mulf %433, %437 : vector<2x128xf32>
    %c10_126 = arith.constant 10 : index
    %c0_127 = arith.constant 0 : index
    %439 = vector.load %arg13[%c10_126, %c0_127] : memref<16x128xf32, #tpu.memory_space<vmem>>, vector<2x128xf32>
    tpu.vector_store %arg13[%c10_126, %c0_127], %438 {strides = array<i32>} : memref<16x128xf32, #tpu.memory_space<vmem>>, vector<2x128xf32>,
    %440 = vector.extract_strided_slice %255 {offsets = [12, 0], sizes = [2, 512], strides = [1, 1]} : vector<16x512xf32> to vector<2x512xf32>
    %c0_128 = arith.constant 0 : index
    %c0_129 = arith.constant 0 : index
    %441 = vector.load %arg7[%c0_128, %c0_129] : memref<128x512xf32, #tpu.memory_space<vmem>>, vector<128x512xf32>
    %cst_130 = arith.constant dense<0.000000e+00> : vector<2x512xf32>
    %442 = tpu.matmul %438, %441, %cst_130 {dimension_numbers = #tpu.dot_dimension_numbers<[1], [0], [0], [1], [0, 0, 1, 1], [], []>} : vector<2x128xf32>, vector<128x512xf32>, vector<2x512xf32> -> vector<2x512xf32>
    %443 = arith.addf %440, %442 : vector<2x512xf32>
    %444 = vector.extract_strided_slice %443 {offsets = [0, 0], sizes = [2, 128], strides = [1, 1]} : vector<2x512xf32> to vector<2x128xf32>
    %445 = arith.negf %444 : vector<2x128xf32>
    %446 = math.exp %445 : vector<2x128xf32>
    %cst_131 = arith.constant 1.000000e+00 : f32
    %447 = vector.broadcast %cst_131 : f32 to vector<2x128xf32>
    %448 = arith.addf %447, %446 : vector<2x128xf32>
    %449 = arith.divf %447, %448 : vector<2x128xf32>
    %450 = vector.extract_strided_slice %443 {offsets = [0, 128], sizes = [2, 128], strides = [1, 1]} : vector<2x512xf32> to vector<2x128xf32>
    %451 = arith.negf %450 : vector<2x128xf32>
    %452 = math.exp %451 : vector<2x128xf32>
    %cst_132 = arith.constant 1.000000e+00 : f32
    %453 = vector.broadcast %cst_132 : f32 to vector<2x128xf32>
    %454 = arith.addf %453, %452 : vector<2x128xf32>
    %455 = arith.divf %453, %454 : vector<2x128xf32>
    %456 = vector.extract_strided_slice %443 {offsets = [0, 256], sizes = [2, 128], strides = [1, 1]} : vector<2x512xf32> to vector<2x128xf32>
    %457 = math.tanh %456 : vector<2x128xf32>
    %458 = vector.extract_strided_slice %443 {offsets = [0, 384], sizes = [2, 128], strides = [1, 1]} : vector<2x512xf32> to vector<2x128xf32>
    %459 = arith.negf %458 : vector<2x128xf32>
    %460 = math.exp %459 : vector<2x128xf32>
    %cst_133 = arith.constant 1.000000e+00 : f32
    %461 = vector.broadcast %cst_133 : f32 to vector<2x128xf32>
    %462 = arith.addf %461, %460 : vector<2x128xf32>
    %463 = arith.divf %461, %462 : vector<2x128xf32>
    %464 = arith.mulf %455, %436 : vector<2x128xf32>
    %465 = arith.mulf %449, %457 : vector<2x128xf32>
    %466 = arith.addf %464, %465 : vector<2x128xf32>
    %467 = math.tanh %466 : vector<2x128xf32>
    %468 = arith.mulf %463, %467 : vector<2x128xf32>
    %c12_134 = arith.constant 12 : index
    %c0_135 = arith.constant 0 : index
    %469 = vector.load %arg13[%c12_134, %c0_135] : memref<16x128xf32, #tpu.memory_space<vmem>>, vector<2x128xf32>
    tpu.vector_store %arg13[%c12_134, %c0_135], %468 {strides = array<i32>} : memref<16x128xf32, #tpu.memory_space<vmem>>, vector<2x128xf32>,
    %470 = vector.extract_strided_slice %255 {offsets = [14, 0], sizes = [2, 512], strides = [1, 1]} : vector<16x512xf32> to vector<2x512xf32>
    %c0_136 = arith.constant 0 : index
    %c0_137 = arith.constant 0 : index
    %471 = vector.load %arg7[%c0_136, %c0_137] : memref<128x512xf32, #tpu.memory_space<vmem>>, vector<128x512xf32>
    %cst_138 = arith.constant dense<0.000000e+00> : vector<2x512xf32>
    %472 = tpu.matmul %468, %471, %cst_138 {dimension_numbers = #tpu.dot_dimension_numbers<[1], [0], [0], [1], [0, 0, 1, 1], [], []>} : vector<2x128xf32>, vector<128x512xf32>, vector<2x512xf32> -> vector<2x512xf32>
    %473 = arith.addf %470, %472 : vector<2x512xf32>
    %474 = vector.extract_strided_slice %473 {offsets = [0, 0], sizes = [2, 128], strides = [1, 1]} : vector<2x512xf32> to vector<2x128xf32>
    %475 = arith.negf %474 : vector<2x128xf32>
    %476 = math.exp %475 : vector<2x128xf32>
    %cst_139 = arith.constant 1.000000e+00 : f32
    %477 = vector.broadcast %cst_139 : f32 to vector<2x128xf32>
    %478 = arith.addf %477, %476 : vector<2x128xf32>
    %479 = arith.divf %477, %478 : vector<2x128xf32>
    %480 = vector.extract_strided_slice %473 {offsets = [0, 128], sizes = [2, 128], strides = [1, 1]} : vector<2x512xf32> to vector<2x128xf32>
    %481 = arith.negf %480 : vector<2x128xf32>
    %482 = math.exp %481 : vector<2x128xf32>
    %cst_140 = arith.constant 1.000000e+00 : f32
    %483 = vector.broadcast %cst_140 : f32 to vector<2x128xf32>
    %484 = arith.addf %483, %482 : vector<2x128xf32>
    %485 = arith.divf %483, %484 : vector<2x128xf32>
    %486 = vector.extract_strided_slice %473 {offsets = [0, 256], sizes = [2, 128], strides = [1, 1]} : vector<2x512xf32> to vector<2x128xf32>
    %487 = math.tanh %486 : vector<2x128xf32>
    %488 = vector.extract_strided_slice %473 {offsets = [0, 384], sizes = [2, 128], strides = [1, 1]} : vector<2x512xf32> to vector<2x128xf32>
    %489 = arith.negf %488 : vector<2x128xf32>
    %490 = math.exp %489 : vector<2x128xf32>
    %cst_141 = arith.constant 1.000000e+00 : f32
    %491 = vector.broadcast %cst_141 : f32 to vector<2x128xf32>
    %492 = arith.addf %491, %490 : vector<2x128xf32>
    %493 = arith.divf %491, %492 : vector<2x128xf32>
    %494 = arith.mulf %485, %466 : vector<2x128xf32>
    %495 = arith.mulf %479, %487 : vector<2x128xf32>
    %496 = arith.addf %494, %495 : vector<2x128xf32>
    %497 = math.tanh %496 : vector<2x128xf32>
    %498 = arith.mulf %493, %497 : vector<2x128xf32>
    %c14_142 = arith.constant 14 : index
    %c0_143 = arith.constant 0 : index
    %499 = vector.load %arg13[%c14_142, %c0_143] : memref<16x128xf32, #tpu.memory_space<vmem>>, vector<2x128xf32>
    tpu.vector_store %arg13[%c14_142, %c0_143], %498 {strides = array<i32>} : memref<16x128xf32, #tpu.memory_space<vmem>>, vector<2x128xf32>,
    %c0_144 = arith.constant 0 : index
    %c0_145 = arith.constant 0 : index
    %500 = vector.load %arg13[%c0_144, %c0_145] : memref<16x128xf32, #tpu.memory_space<vmem>>, vector<16x128xf32>
    %c0_146 = arith.constant 0 : index
    %c0_147 = arith.constant 0 : index
    %501 = vector.load %arg9[%c0_146, %c0_147] : memref<128x128xf32, #tpu.memory_space<vmem>>, vector<128x128xf32>
    %cst_148 = arith.constant dense<0.000000e+00> : vector<16x128xf32>
    %502 = tpu.matmul %500, %501, %cst_148 {dimension_numbers = #tpu.dot_dimension_numbers<[1], [0], [0], [1], [0, 0, 1, 1], [], []>} : vector<16x128xf32>, vector<128x128xf32>, vector<16x128xf32> -> vector<16x128xf32>
    %c0_149 = arith.constant 0 : index
    %c0_150 = arith.constant 0 : index
    %503 = vector.load %arg10[%c0_149, %c0_150] : memref<1x128xf32, #tpu.memory_space<vmem>>, vector<1x128xf32>
    %504 = vector.broadcast %503 : vector<1x128xf32> to vector<16x128xf32>
    %505 = arith.addf %502, %504 : vector<16x128xf32>
    %c0_151 = arith.constant 0 : index
    %c0_152 = arith.constant 0 : index
    %506 = vector.load %arg11[%c0_151, %c0_152] : memref<16x128xf32, #tpu.memory_space<vmem>>, vector<16x128xf32>
    tpu.vector_store %arg11[%c0_151, %c0_152], %505 {strides = array<i32>} : memref<16x128xf32, #tpu.memory_space<vmem>>, vector<16x128xf32>,
    return
  }
}

</mosaic_0001>

<llo_original>
// kernel: text_generation_forward.1
$region0: #{text_generation_forward.1}
  #allocation0 [shape = 'u32[]', space=smem, size = 0x4, offset = 0x4, fixed_abs, tag = 'smem constant byte address 0x4 - core index']
  #allocation1 [shape = 'u32[72,128]{1,0:T(1,128)}', space=vmem, size = 0x9000, scoped, tag = 'internal scratch']
  #allocation2 [shape = 'f32[16,128]{1,0:T(8,128)}', space=vmem, size = 0x2000, scoped, tag = 'scratch operand']
  #allocation3 [shape = 'f32[16,128]{1,0:T(8,128)}', space=vmem, size = 0x2000, scoped, tag = 'scratch operand']
  %s0 = inlined_call_operand.vmem [shape: f32[16,32], index: 0, kind: input, shape index: {}]
  %s1 = inlined_call_operand.vmem [shape: f32[2,2,128], index: 1, kind: input, shape index: {}]
  %s2 = inlined_call_operand.vmem [shape: f32[2,2,128], index: 2, kind: input, shape index: {}]
  %s3 = inlined_call_operand.vmem [shape: f32[32,512], index: 3, kind: input, shape index: {}]
  %s4 = inlined_call_operand.vmem [shape: f32[128,512], index: 4, kind: input, shape index: {}]
  %s5 = inlined_call_operand.vmem [shape: f32[1,512], index: 5, kind: input, shape index: {}]
  %s6 = inlined_call_operand.vmem [shape: f32[128,512], index: 6, kind: input, shape index: {}]
  %s7 = inlined_call_operand.vmem [shape: f32[128,512], index: 7, kind: input, shape index: {}]
  %s8 = inlined_call_operand.vmem [shape: f32[1,512], index: 8, kind: input, shape index: {}]
  %s9 = inlined_call_operand.vmem [shape: f32[128,128], index: 9, kind: input, shape index: {}]
  %s10 = inlined_call_operand.vmem [shape: f32[1,128], index: 10, kind: input, shape index: {}]
  %s11 = inlined_call_operand.hbm [shape: f32[16,128], index: 11, kind: output, shape index: {}]
  %s12 = sld [smem:[#allocation0]]
  $region54: #{text_generation_forward.1} parent=0
    _
  %s14 = ssub.s32 1, %s12
  %s15 = scalar_select 0, %s14, %s12
  $region1: #{text_generation_forward.1} parent=0
    #allocation4 [shape = 'u8[8192]{0}', space=vmem, size = 0x2000, scoped, tag = 'output window, operand 0, single buffered']
    #allocation5 [shape = 's32[1]{0}', space=sflag, size = 0x4, scoped, tag = 'scoped memory for text_generation_forward.1']
    %16 = vsyncpa [#allocation5], 0
    // Predicated region
    $region2: #{text_generation_forward.1} parent=1 // pred_check
      _
    $region3: #{text_generation_forward.1} parent=1 // pred_check_branch
      %18 = sbr.rel (0) target = $region5
    $region4: #{text_generation_forward.1} parent=1 // pred_region
      _
    $region5: #{text_generation_forward.1} parent=1 // pred_fallthru
      _
    // Predicated region
    $region6: #{text_generation_forward.1} parent=1 // pred_check
      _
    $region7: #{text_generation_forward.1} parent=1 // pred_check_branch
      %20 = sbr.rel (0) target = $region9
    $region8: #{text_generation_forward.1} parent=1 // pred_region
      _
    $region9: #{text_generation_forward.1} parent=1 // pred_fallthru
      _
    // Predicated region
    $region10: #{text_generation_forward.1} parent=1 // pred_check
      _
    $region11: #{text_generation_forward.1} parent=1 // pred_check_branch
      %22 = sbr.rel (0) target = $region13
    $region12: #{text_generation_forward.1} parent=1 // pred_region
      _
    $region13: #{text_generation_forward.1} parent=1 // pred_fallthru
      _
    // Predicated region
    $region14: #{text_generation_forward.1} parent=1 // pred_check
      _
    $region15: #{text_generation_forward.1} parent=1 // pred_check_branch
      %24 = sbr.rel (0) target = $region17
    $region16: #{text_generation_forward.1} parent=1 // pred_region
      _
    $region17: #{text_generation_forward.1} parent=1 // pred_fallthru
      _
    // Predicated region
    $region18: #{text_generation_forward.1} parent=1 // pred_check
      _
    $region19: #{text_generation_forward.1} parent=1 // pred_check_branch
      %26 = sbr.rel (0) target = $region21
    $region20: #{text_generation_forward.1} parent=1 // pred_region
      _
    $region21: #{text_generation_forward.1} parent=1 // pred_fallthru
      _
    // Predicated region
    $region22: #{text_generation_forward.1} parent=1 // pred_check
      _
    $region23: #{text_generation_forward.1} parent=1 // pred_check_branch
      %28 = sbr.rel (0) target = $region25
    $region24: #{text_generation_forward.1} parent=1 // pred_region
      _
    $region25: #{text_generation_forward.1} parent=1 // pred_fallthru
      _
    // Predicated region
    $region26: #{text_generation_forward.1} parent=1 // pred_check
      _
    $region27: #{text_generation_forward.1} parent=1 // pred_check_branch
      %30 = sbr.rel (0) target = $region29
    $region28: #{text_generation_forward.1} parent=1 // pred_region
      _
    $region29: #{text_generation_forward.1} parent=1 // pred_fallthru
      _
    // Predicated region
    $region30: #{text_generation_forward.1} parent=1 // pred_check
      _
    $region31: #{text_generation_forward.1} parent=1 // pred_check_branch
      %32 = sbr.rel (0) target = $region33
    $region32: #{text_generation_forward.1} parent=1 // pred_region
      _
    $region33: #{text_generation_forward.1} parent=1 // pred_fallthru
      _
    // Predicated region
    $region34: #{text_generation_forward.1} parent=1 // pred_check
      _
    $region35: #{text_generation_forward.1} parent=1 // pred_check_branch
      %34 = sbr.rel (0) target = $region37
    $region36: #{text_generation_forward.1} parent=1 // pred_region
      _
    $region37: #{text_generation_forward.1} parent=1 // pred_fallthru
      _
    // Predicated region
    $region38: #{text_generation_forward.1} parent=1 // pred_check
      _
    $region39: #{text_generation_forward.1} parent=1 // pred_check_branch
      %36 = sbr.rel (0) target = $region41
    $region40: #{text_generation_forward.1} parent=1 // pred_region
      _
    $region41: #{text_generation_forward.1} parent=1 // pred_fallthru
      _
    // Predicated region
    $region42: #{text_generation_forward.1} parent=1 // pred_check
      _
    $region43: #{text_generation_forward.1} parent=1 // pred_check_branch
      %38 = sbr.rel (0) target = $region45
    $region44: #{text_generation_forward.1} parent=1 // pred_region
      _
    $region45: #{text_generation_forward.1} parent=1 // pred_fallthru
      _
    %v39 = vld [vmem:[%s0] sm:$0xff]
    %v40 = vld [vmem:[%s0 + $0x8] sm:$0xff]
    %v41 = vld [vmem:[%s3] sm:$0xff]
    %v42 = vld [vmem:[%s3 + $0x8] sm:$0xff]
    %v43 = vld [vmem:[%s3 + $0x10] sm:$0xff]
    %v44 = vld [vmem:[%s3 + $0x18] sm:$0xff]
    %v45 = vld [vmem:[%s3 + $0x20] sm:$0xff]
    %v46 = vld [vmem:[%s3 + $0x28] sm:$0xff]
    %v47 = vld [vmem:[%s3 + $0x30] sm:$0xff]
    %v48 = vld [vmem:[%s3 + $0x38] sm:$0xff]
    %v49 = vld [vmem:[%s3 + $0x40] sm:$0xff]
    %v50 = vld [vmem:[%s3 + $0x48] sm:$0xff]
    %v51 = vld [vmem:[%s3 + $0x50] sm:$0xff]
    %v52 = vld [vmem:[%s3 + $0x58] sm:$0xff]
    %v53 = vld [vmem:[%s3 + $0x60] sm:$0xff]
    %v54 = vld [vmem:[%s3 + $0x68] sm:$0xff]
    %v55 = vld [vmem:[%s3 + $0x70] sm:$0xff]
    %v56 = vld [vmem:[%s3 + $0x78] sm:$0xff]
    %v57 = vld [vmem:[%s5] sm:$0xf]
    %v59 = vperm.slane %v57, 0
    %v60 = vperm.slane %v57, 1
    %v61 = vperm.slane %v57, 2
    %v62 = vperm.slane %v57, 3
    %vm67 = vcmask 261120
    %v69 = vsel %vm67, %v39, 0
    %v72 = vsel %vm67, %v40, 0
    %74 = vmatpush.msra.mxu0 0.0
    %75 = vmatpush.msra.mxu0 0.0
    %76 = vmatpush.msra.mxu0 0.0
    %77 = vmatpush.msra.mxu0 0.0
    %78 = vmatpush.msra.mxu0 0.0
    %79 = vmatpush.msra.mxu0 0.0
    %80 = vmatpush.msra.mxu0 0.0
    %81 = vmatpush.msra.mxu0 0.0
    %82 = vmatpush.msra.mxu0 0.0
    %83 = vmatpush.msra.mxu0 0.0
    %84 = vmatpush.msra.mxu0 0.0
    %85 = vmatpush.msra.mxu0 0.0
    %86 = vmatpush.msra.mxu0 %v53
    %87 = vmatpush.msra.mxu0 %v49
    %88 = vmatpush.msra.mxu0 %v45
    %89 = vmatpush.msra.mxu0 %v41
    %90 = vmatmul.f32.gmra.mxu0 %v69
    %v91 = vpop.f32.mrf.mxu0
    %v92 = vadd.f32 %v59, %v91
    %93 = vmatmul.f32.gmra.mxu0 %v72
    %v94 = vpop.f32.mrf.mxu0
    %v95 = vadd.f32 %v59, %v94
    %96 = vdwg.mxu0
    %97 = vmatpush.msra.mxu0 0.0
    %98 = vmatpush.msra.mxu0 0.0
    %99 = vmatpush.msra.mxu0 0.0
    %100 = vmatpush.msra.mxu0 0.0
    %101 = vmatpush.msra.mxu0 0.0
    %102 = vmatpush.msra.mxu0 0.0
    %103 = vmatpush.msra.mxu0 0.0
    %104 = vmatpush.msra.mxu0 0.0
    %105 = vmatpush.msra.mxu0 0.0
    %106 = vmatpush.msra.mxu0 0.0
    %107 = vmatpush.msra.mxu0 0.0
    %108 = vmatpush.msra.mxu0 0.0
    %109 = vmatpush.msra.mxu0 %v54
    %110 = vmatpush.msra.mxu0 %v50
    %111 = vmatpush.msra.mxu0 %v46
    %112 = vmatpush.msra.mxu0 %v42
    %113 = vmatmul.f32.gmra.mxu0 %v69
    %v114 = vpop.f32.mrf.mxu0
    %v115 = vadd.f32 %v60, %v114
    %116 = vmatmul.f32.gmra.mxu0 %v72
    %v117 = vpop.f32.mrf.mxu0
    %v118 = vadd.f32 %v60, %v117
    %119 = vdwg.mxu0
    %120 = vmatpush.msra.mxu0 0.0
    %121 = vmatpush.msra.mxu0 0.0
    %122 = vmatpush.msra.mxu0 0.0
    %123 = vmatpush.msra.mxu0 0.0
    %124 = vmatpush.msra.mxu0 0.0
    %125 = vmatpush.msra.mxu0 0.0
    %126 = vmatpush.msra.mxu0 0.0
    %127 = vmatpush.msra.mxu0 0.0
    %128 = vmatpush.msra.mxu0 0.0
    %129 = vmatpush.msra.mxu0 0.0
    %130 = vmatpush.msra.mxu0 0.0
    %131 = vmatpush.msra.mxu0 0.0
    %132 = vmatpush.msra.mxu0 %v55
    %133 = vmatpush.msra.mxu0 %v51
    %134 = vmatpush.msra.mxu0 %v47
    %135 = vmatpush.msra.mxu0 %v43
    %136 = vmatmul.f32.gmra.mxu0 %v69
    %v137 = vpop.f32.mrf.mxu0
    %v138 = vadd.f32 %v61, %v137
    %139 = vmatmul.f32.gmra.mxu0 %v72
    %v140 = vpop.f32.mrf.mxu0
    %v141 = vadd.f32 %v61, %v140
    %142 = vdwg.mxu0
    %143 = vmatpush.msra.mxu0 0.0
    %144 = vmatpush.msra.mxu0 0.0
    %145 = vmatpush.msra.mxu0 0.0
    %146 = vmatpush.msra.mxu0 0.0
    %147 = vmatpush.msra.mxu0 0.0
    %148 = vmatpush.msra.mxu0 0.0
    %149 = vmatpush.msra.mxu0 0.0
    %150 = vmatpush.msra.mxu0 0.0
    %151 = vmatpush.msra.mxu0 0.0
    %152 = vmatpush.msra.mxu0 0.0
    %153 = vmatpush.msra.mxu0 0.0
    %154 = vmatpush.msra.mxu0 0.0
    %155 = vmatpush.msra.mxu0 %v56
    %156 = vmatpush.msra.mxu0 %v52
    %157 = vmatpush.msra.mxu0 %v48
    %158 = vmatpush.msra.mxu0 %v44
    %159 = vmatmul.f32.gmra.mxu0 %v69
    %v160 = vpop.f32.mrf.mxu0
    %v161 = vadd.f32 %v62, %v160
    %162 = vmatmul.f32.gmra.mxu0 %v72
    %v163 = vpop.f32.mrf.mxu0
    %v164 = vadd.f32 %v62, %v163
    %165 = vdwg.mxu0
    %v166 = vld [vmem:[%s1] sm:$0x3]
    %v167 = vld [vmem:[%s2] sm:$0x3]
    %v168 = vld [vmem:[%s4] sm:$0xff]
    %v169 = vld [vmem:[%s4 + $0x8] sm:$0xff]
    %v170 = vld [vmem:[%s4 + $0x10] sm:$0xff]
    %v171 = vld [vmem:[%s4 + $0x18] sm:$0xff]
    %v172 = vld [vmem:[%s4 + $0x20] sm:$0xff]
    %v173 = vld [vmem:[%s4 + $0x28] sm:$0xff]
    %v174 = vld [vmem:[%s4 + $0x30] sm:$0xff]
    %v175 = vld [vmem:[%s4 + $0x38] sm:$0xff]
    %v176 = vld [vmem:[%s4 + $0x40] sm:$0xff]
    %v177 = vld [vmem:[%s4 + $0x48] sm:$0xff]
    %v178 = vld [vmem:[%s4 + $0x50] sm:$0xff]
    %v179 = vld [vmem:[%s4 + $0x58] sm:$0xff]
    %v180 = vld [vmem:[%s4 + $0x60] sm:$0xff]
    %v181 = vld [vmem:[%s4 + $0x68] sm:$0xff]
    %v182 = vld [vmem:[%s4 + $0x70] sm:$0xff]
    %v183 = vld [vmem:[%s4 + $0x78] sm:$0xff]
    %v184 = vld [vmem:[%s4 + $0x80] sm:$0xff]
    %v185 = vld [vmem:[%s4 + $0x88] sm:$0xff]
    %v186 = vld [vmem:[%s4 + $0x90] sm:$0xff]
    %v187 = vld [vmem:[%s4 + $0x98] sm:$0xff]
    %v188 = vld [vmem:[%s4 + $0xa0] sm:$0xff]
    %v189 = vld [vmem:[%s4 + $0xa8] sm:$0xff]
    %v190 = vld [vmem:[%s4 + $0xb0] sm:$0xff]
    %v191 = vld [vmem:[%s4 + $0xb8] sm:$0xff]
    %v192 = vld [vmem:[%s4 + $0xc0] sm:$0xff]
    %v193 = vld [vmem:[%s4 + $0xc8] sm:$0xff]
    %v194 = vld [vmem:[%s4 + $0xd0] sm:$0xff]
    %v195 = vld [vmem:[%s4 + $0xd8] sm:$0xff]
    %v196 = vld [vmem:[%s4 + $0xe0] sm:$0xff]
    %v197 = vld [vmem:[%s4 + $0xe8] sm:$0xff]
    %v198 = vld [vmem:[%s4 + $0xf0] sm:$0xff]
    %v199 = vld [vmem:[%s4 + $0xf8] sm:$0xff]
    %v200 = vld [vmem:[%s4 + $0x100] sm:$0xff]
    %v201 = vld [vmem:[%s4 + $0x108] sm:$0xff]
    %v202 = vld [vmem:[%s4 + $0x110] sm:$0xff]
    %v203 = vld [vmem:[%s4 + $0x118] sm:$0xff]
    %v204 = vld [vmem:[%s4 + $0x120] sm:$0xff]
    %v205 = vld [vmem:[%s4 + $0x128] sm:$0xff]
    %v206 = vld [vmem:[%s4 + $0x130] sm:$0xff]
    %v207 = vld [vmem:[%s4 + $0x138] sm:$0xff]
    %v208 = vld [vmem:[%s4 + $0x140] sm:$0xff]
    %v209 = vld [vmem:[%s4 + $0x148] sm:$0xff]
    %v210 = vld [vmem:[%s4 + $0x150] sm:$0xff]
    %v211 = vld [vmem:[%s4 + $0x158] sm:$0xff]
    %v212 = vld [vmem:[%s4 + $0x160] sm:$0xff]
    %v213 = vld [vmem:[%s4 + $0x168] sm:$0xff]
    %v214 = vld [vmem:[%s4 + $0x170] sm:$0xff]
    %v215 = vld [vmem:[%s4 + $0x178] sm:$0xff]
    %v216 = vld [vmem:[%s4 + $0x180] sm:$0xff]
    %v217 = vld [vmem:[%s4 + $0x188] sm:$0xff]
    %v218 = vld [vmem:[%s4 + $0x190] sm:$0xff]
    %v219 = vld [vmem:[%s4 + $0x198] sm:$0xff]
    %v220 = vld [vmem:[%s4 + $0x1a0] sm:$0xff]
    %v221 = vld [vmem:[%s4 + $0x1a8] sm:$0xff]
    %v222 = vld [vmem:[%s4 + $0x1b0] sm:$0xff]
    %v223 = vld [vmem:[%s4 + $0x1b8] sm:$0xff]
    %v224 = vld [vmem:[%s4 + $0x1c0] sm:$0xff]
    %v225 = vld [vmem:[%s4 + $0x1c8] sm:$0xff]
    %v226 = vld [vmem:[%s4 + $0x1d0] sm:$0xff]
    %v227 = vld [vmem:[%s4 + $0x1d8] sm:$0xff]
    %v228 = vld [vmem:[%s4 + $0x1e0] sm:$0xff]
    %v229 = vld [vmem:[%s4 + $0x1e8] sm:$0xff]
    %v230 = vld [vmem:[%s4 + $0x1f0] sm:$0xff]
    %v231 = vld [vmem:[%s4 + $0x1f8] sm:$0xff]
    %232 = vmatpush.msra.mxu0 %v228
    %233 = vmatpush.msra.mxu0 %v224
    %234 = vmatpush.msra.mxu0 %v220
    %235 = vmatpush.msra.mxu0 %v216
    %236 = vmatpush.msra.mxu0 %v212
    %237 = vmatpush.msra.mxu0 %v208
    %238 = vmatpush.msra.mxu0 %v204
    %239 = vmatpush.msra.mxu0 %v200
    %240 = vmatpush.msra.mxu0 %v196
    %241 = vmatpush.msra.mxu0 %v192
    %242 = vmatpush.msra.mxu0 %v188
    %243 = vmatpush.msra.mxu0 %v184
    %244 = vmatpush.msra.mxu0 %v180
    %245 = vmatpush.msra.mxu0 %v176
    %246 = vmatpush.msra.mxu0 %v172
    %247 = vmatpush.msra.mxu0 %v168
    %248 = vmatmul.f32.gmra.mxu0 %v166
    %v249 = vpop.f32.mrf.mxu0
    %v250 = vadd.f32 0.0, %v249
    %251 = vdwg.mxu0
    %252 = vmatpush.msra.mxu0 %v229
    %253 = vmatpush.msra.mxu0 %v225
    %254 = vmatpush.msra.mxu0 %v221
    %255 = vmatpush.msra.mxu0 %v217
    %256 = vmatpush.msra.mxu0 %v213
    %257 = vmatpush.msra.mxu0 %v209
    %258 = vmatpush.msra.mxu0 %v205
    %259 = vmatpush.msra.mxu0 %v201
    %260 = vmatpush.msra.mxu0 %v197
    %261 = vmatpush.msra.mxu0 %v193
    %262 = vmatpush.msra.mxu0 %v189
    %263 = vmatpush.msra.mxu0 %v185
    %264 = vmatpush.msra.mxu0 %v181
    %265 = vmatpush.msra.mxu0 %v177
    %266 = vmatpush.msra.mxu0 %v173
    %267 = vmatpush.msra.mxu0 %v169
    %268 = vmatmul.f32.gmra.mxu0 %v166
    %v269 = vpop.f32.mrf.mxu0
    %v270 = vadd.f32 0.0, %v269
    %271 = vdwg.mxu0
    %272 = vmatpush.msra.mxu0 %v230
    %273 = vmatpush.msra.mxu0 %v226
    %274 = vmatpush.msra.mxu0 %v222
    %275 = vmatpush.msra.mxu0 %v218
    %276 = vmatpush.msra.mxu0 %v214
    %277 = vmatpush.msra.mxu0 %v210
    %278 = vmatpush.msra.mxu0 %v206
    %279 = vmatpush.msra.mxu0 %v202
    %280 = vmatpush.msra.mxu0 %v198
    %281 = vmatpush.msra.mxu0 %v194
    %282 = vmatpush.msra.mxu0 %v190
    %283 = vmatpush.msra.mxu0 %v186
    %284 = vmatpush.msra.mxu0 %v182
    %285 = vmatpush.msra.mxu0 %v178
    %286 = vmatpush.msra.mxu0 %v174
    %287 = vmatpush.msra.mxu0 %v170
    %288 = vmatmul.f32.gmra.mxu0 %v166
    %v289 = vpop.f32.mrf.mxu0
    %v290 = vadd.f32 0.0, %v289
    %291 = vdwg.mxu0
    %292 = vmatpush.msra.mxu0 %v231
    %293 = vmatpush.msra.mxu0 %v227
    %294 = vmatpush.msra.mxu0 %v223
    %295 = vmatpush.msra.mxu0 %v219
    %296 = vmatpush.msra.mxu0 %v215
    %297 = vmatpush.msra.mxu0 %v211
    %298 = vmatpush.msra.mxu0 %v207
    %299 = vmatpush.msra.mxu0 %v203
    %300 = vmatpush.msra.mxu0 %v199
    %301 = vmatpush.msra.mxu0 %v195
    %302 = vmatpush.msra.mxu0 %v191
    %303 = vmatpush.msra.mxu0 %v187
    %304 = vmatpush.msra.mxu0 %v183
    %305 = vmatpush.msra.mxu0 %v179
    %306 = vmatpush.msra.mxu0 %v175
    %307 = vmatpush.msra.mxu0 %v171
    %308 = vmatmul.f32.gmra.mxu0 %v166
    %v309 = vpop.f32.mrf.mxu0
    %v310 = vadd.f32 0.0, %v309
    %311 = vdwg.mxu0
    %v312 = vadd.f32 %v92, %v250
    %v313 = vadd.f32 %v115, %v270
    %v314 = vadd.f32 %v138, %v290
    %v315 = vadd.f32 %v161, %v310
    %v316 = vxor.u32 %v312, 2147483648
    %v317 = vmul.f32 %v316, 1.442695
    %v318 = vpow.pop %v317
    %v319 = vadd.f32 %v318, 1.0
    %v320 = vrcp.pop %v319
    %v321 = vmul.f32 %v319, %v320
    %v322 = vsub.f32 1.0, %v321
    %v323 = vmul.f32 %v320, %v322
    %v324 = vadd.f32 %v320, %v323
    %vm325 = vweird.f32 %v319
    %vm326 = vweird.f32 %v320
    %vm327 = vmor %vm325, %vm326
    %v328 = vsel %vm327, %v320, %v324
    %v329 = vand.u32 2147483647, %v319
    %vm330 = vcmp.eq.f32.partialorder %v329, 8.507059e+37
    %v331 = vand.u32 %v319, 2147483648
    %v332 = vor.u32 1.1754944e-38, %v331
    %v333 = vsel %vm330, %v332, %v328
    %v334 = vmul.f32 1.0, %v333
    %v335 = vxor.u32 %v313, 2147483648
    %v336 = vmul.f32 %v335, 1.442695
    %v337 = vpow.pop %v336
    %v338 = vadd.f32 %v337, 1.0
    %v339 = vrcp.pop %v338
    %v340 = vmul.f32 %v338, %v339
    %v341 = vsub.f32 1.0, %v340
    %v342 = vmul.f32 %v339, %v341
    %v343 = vadd.f32 %v339, %v342
    %vm344 = vweird.f32 %v338
    %vm345 = vweird.f32 %v339
    %vm346 = vmor %vm344, %vm345
    %v347 = vsel %vm346, %v339, %v343
    %v348 = vand.u32 2147483647, %v338
    %vm349 = vcmp.eq.f32.partialorder %v348, 8.507059e+37
    %v350 = vand.u32 %v338, 2147483648
    %v351 = vor.u32 1.1754944e-38, %v350
    %v352 = vsel %vm349, %v351, %v347
    %v353 = vmul.f32 1.0, %v352
    %v354 = vtanh.pop %v314
    %v355 = vxor.u32 %v315, 2147483648
    %v356 = vmul.f32 %v355, 1.442695
    %v357 = vpow.pop %v356
    %v358 = vadd.f32 %v357, 1.0
    %v359 = vrcp.pop %v358
    %v360 = vmul.f32 %v358, %v359
    %v361 = vsub.f32 1.0, %v360
    %v362 = vmul.f32 %v359, %v361
    %v363 = vadd.f32 %v359, %v362
    %vm364 = vweird.f32 %v358
    %vm365 = vweird.f32 %v359
    %vm366 = vmor %vm364, %vm365
    %v367 = vsel %vm366, %v359, %v363
    %v368 = vand.u32 2147483647, %v358
    %vm369 = vcmp.eq.f32.partialorder %v368, 8.507059e+37
    %v370 = vand.u32 %v358, 2147483648
    %v371 = vor.u32 1.1754944e-38, %v370
    %v372 = vsel %vm369, %v371, %v367
    %v373 = vmul.f32 1.0, %v372
    %v374 = vmul.f32 %v353, %v167
    %v375 = vmul.f32 %v334, %v354
    %v376 = vadd.f32 %v374, %v375
    %v377 = vtanh.pop %v376
    %v378 = vmul.f32 %v373, %v377
    %379 = vst [vmem:[#allocation2] sm:$0x3] %v378
    %v380 = vld [vmem:[%s4] sm:$0xff]
    %v381 = vld [vmem:[%s4 + $0x8] sm:$0xff]
    %v382 = vld [vmem:[%s4 + $0x10] sm:$0xff]
    %v383 = vld [vmem:[%s4 + $0x18] sm:$0xff]
    %v384 = vld [vmem:[%s4 + $0x20] sm:$0xff]
    %v385 = vld [vmem:[%s4 + $0x28] sm:$0xff]
    %v386 = vld [vmem:[%s4 + $0x30] sm:$0xff]
    %v387 = vld [vmem:[%s4 + $0x38] sm:$0xff]
    %v388 = vld [vmem:[%s4 + $0x40] sm:$0xff]
    %v389 = vld [vmem:[%s4 + $0x48] sm:$0xff]
    %v390 = vld [vmem:[%s4 + $0x50] sm:$0xff]
    %v391 = vld [vmem:[%s4 + $0x58] sm:$0xff]
    %v392 = vld [vmem:[%s4 + $0x60] sm:$0xff]
    %v393 = vld [vmem:[%s4 + $0x68] sm:$0xff]
    %v394 = vld [vmem:[%s4 + $0x70] sm:$0xff]
    %v395 = vld [vmem:[%s4 + $0x78] sm:$0xff]
    %v396 = vld [vmem:[%s4 + $0x80] sm:$0xff]
    %v397 = vld [vmem:[%s4 + $0x88] sm:$0xff]
    %v398 = vld [vmem:[%s4 + $0x90] sm:$0xff]
    %v399 = vld [vmem:[%s4 + $0x98] sm:$0xff]
    %v400 = vld [vmem:[%s4 + $0xa0] sm:$0xff]
    %v401 = vld [vmem:[%s4 + $0xa8] sm:$0xff]
    %v402 = vld [vmem:[%s4 + $0xb0] sm:$0xff]
    %v403 = vld [vmem:[%s4 + $0xb8] sm:$0xff]
    %v404 = vld [vmem:[%s4 + $0xc0] sm:$0xff]
    %v405 = vld [vmem:[%s4 + $0xc8] sm:$0xff]
    %v406 = vld [vmem:[%s4 + $0xd0] sm:$0xff]
    %v407 = vld [vmem:[%s4 + $0xd8] sm:$0xff]
    %v408 = vld [vmem:[%s4 + $0xe0] sm:$0xff]
    %v409 = vld [vmem:[%s4 + $0xe8] sm:$0xff]
    %v410 = vld [vmem:[%s4 + $0xf0] sm:$0xff]
    %v411 = vld [vmem:[%s4 + $0xf8] sm:$0xff]
    %v412 = vld [vmem:[%s4 + $0x100] sm:$0xff]
    %v413 = vld [vmem:[%s4 + $0x108] sm:$0xff]
    %v414 = vld [vmem:[%s4 + $0x110] sm:$0xff]
    %v415 = vld [vmem:[%s4 + $0x118] sm:$0xff]
    %v416 = vld [vmem:[%s4 + $0x120] sm:$0xff]
    %v417 = vld [vmem:[%s4 + $0x128] sm:$0xff]
    %v418 = vld [vmem:[%s4 + $0x130] sm:$0xff]
    %v419 = vld [vmem:[%s4 + $0x138] sm:$0xff]
    %v420 = vld [vmem:[%s4 + $0x140] sm:$0xff]
    %v421 = vld [vmem:[%s4 + $0x148] sm:$0xff]
    %v422 = vld [vmem:[%s4 + $0x150] sm:$0xff]
    %v423 = vld [vmem:[%s4 + $0x158] sm:$0xff]
    %v424 = vld [vmem:[%s4 + $0x160] sm:$0xff]
    %v425 = vld [vmem:[%s4 + $0x168] sm:$0xff]
    %v426 = vld [vmem:[%s4 + $0x170] sm:$0xff]
    %v427 = vld [vmem:[%s4 + $0x178] sm:$0xff]
    %v428 = vld [vmem:[%s4 + $0x180] sm:$0xff]
    %v429 = vld [vmem:[%s4 + $0x188] sm:$0xff]
    %v430 = vld [vmem:[%s4 + $0x190] sm:$0xff]
    %v431 = vld [vmem:[%s4 + $0x198] sm:$0xff]
    %v432 = vld [vmem:[%s4 + $0x1a0] sm:$0xff]
    %v433 = vld [vmem:[%s4 + $0x1a8] sm:$0xff]
    %v434 = vld [vmem:[%s4 + $0x1b0] sm:$0xff]
    %v435 = vld [vmem:[%s4 + $0x1b8] sm:$0xff]
    %v436 = vld [vmem:[%s4 + $0x1c0] sm:$0xff]
    %v437 = vld [vmem:[%s4 + $0x1c8] sm:$0xff]
    %v438 = vld [vmem:[%s4 + $0x1d0] sm:$0xff]
    %v439 = vld [vmem:[%s4 + $0x1d8] sm:$0xff]
    %v440 = vld [vmem:[%s4 + $0x1e0] sm:$0xff]
    %v441 = vld [vmem:[%s4 + $0x1e8] sm:$0xff]
    %v442 = vld [vmem:[%s4 + $0x1f0] sm:$0xff]
    %v443 = vld [vmem:[%s4 + $0x1f8] sm:$0xff]
    %444 = vmatpush.msra.mxu0 %v440
    %445 = vmatpush.msra.mxu0 %v436
    %446 = vmatpush.msra.mxu0 %v432
    %447 = vmatpush.msra.mxu0 %v428
    %448 = vmatpush.msra.mxu0 %v424
    %449 = vmatpush.msra.mxu0 %v420
    %450 = vmatpush.msra.mxu0 %v416
    %451 = vmatpush.msra.mxu0 %v412
    %452 = vmatpush.msra.mxu0 %v408
    %453 = vmatpush.msra.mxu0 %v404
    %454 = vmatpush.msra.mxu0 %v400
    %455 = vmatpush.msra.mxu0 %v396
    %456 = vmatpush.msra.mxu0 %v392
    %457 = vmatpush.msra.mxu0 %v388
    %458 = vmatpush.msra.mxu0 %v384
    %459 = vmatpush.msra.mxu0 %v380
    %460 = vmatmul.f32.gmra.mxu0 %v378
    %v461 = vpop.f32.mrf.mxu0
    %v462 = vadd.f32 0.0, %v461
    %463 = vdwg.mxu0
    %464 = vmatpush.msra.mxu0 %v441
    %465 = vmatpush.msra.mxu0 %v437
    %466 = vmatpush.msra.mxu0 %v433
    %467 = vmatpush.msra.mxu0 %v429
    %468 = vmatpush.msra.mxu0 %v425
    %469 = vmatpush.msra.mxu0 %v421
    %470 = vmatpush.msra.mxu0 %v417
    %471 = vmatpush.msra.mxu0 %v413
    %472 = vmatpush.msra.mxu0 %v409
    %473 = vmatpush.msra.mxu0 %v405
    %474 = vmatpush.msra.mxu0 %v401
    %475 = vmatpush.msra.mxu0 %v397
    %476 = vmatpush.msra.mxu0 %v393
    %477 = vmatpush.msra.mxu0 %v389
    %478 = vmatpush.msra.mxu0 %v385
    %479 = vmatpush.msra.mxu0 %v381
    %480 = vmatmul.f32.gmra.mxu0 %v378
    %v481 = vpop.f32.mrf.mxu0
    %v482 = vadd.f32 0.0, %v481
    %483 = vdwg.mxu0
    %484 = vmatpush.msra.mxu0 %v442
    %485 = vmatpush.msra.mxu0 %v438
    %486 = vmatpush.msra.mxu0 %v434
    %487 = vmatpush.msra.mxu0 %v430
    %488 = vmatpush.msra.mxu0 %v426
    %489 = vmatpush.msra.mxu0 %v422
    %490 = vmatpush.msra.mxu0 %v418
    %491 = vmatpush.msra.mxu0 %v414
    %492 = vmatpush.msra.mxu0 %v410
    %493 = vmatpush.msra.mxu0 %v406
    %494 = vmatpush.msra.mxu0 %v402
    %495 = vmatpush.msra.mxu0 %v398
    %496 = vmatpush.msra.mxu0 %v394
    %497 = vmatpush.msra.mxu0 %v390
    %498 = vmatpush.msra.mxu0 %v386
    %499 = vmatpush.msra.mxu0 %v382
    %500 = vmatmul.f32.gmra.mxu0 %v378
    %v501 = vpop.f32.mrf.mxu0
    %v502 = vadd.f32 0.0, %v501
    %503 = vdwg.mxu0
    %504 = vmatpush.msra.mxu0 %v443
    %505 = vmatpush.msra.mxu0 %v439
    %506 = vmatpush.msra.mxu0 %v435
    %507 = vmatpush.msra.mxu0 %v431
    %508 = vmatpush.msra.mxu0 %v427
    %509 = vmatpush.msra.mxu0 %v423
    %510 = vmatpush.msra.mxu0 %v419
    %511 = vmatpush.msra.mxu0 %v415
    %512 = vmatpush.msra.mxu0 %v411
    %513 = vmatpush.msra.mxu0 %v407
    %514 = vmatpush.msra.mxu0 %v403
    %515 = vmatpush.msra.mxu0 %v399
    %516 = vmatpush.msra.mxu0 %v395
    %517 = vmatpush.msra.mxu0 %v391
    %518 = vmatpush.msra.mxu0 %v387
    %519 = vmatpush.msra.mxu0 %v383
    %520 = vmatmul.f32.gmra.mxu0 %v378
    %v521 = vpop.f32.mrf.mxu0
    %v522 = vadd.f32 0.0, %v521
    %523 = vdwg.mxu0
    %v528 = vrot.slane %v462, 6
    %v529 = vrot.slane %v482, 6
    %v530 = vrot.slane %v502, 6
    %v531 = vrot.slane %v522, 6
    %v536 = vadd.f32 %v92, %v528
    %v537 = vadd.f32 %v115, %v529
    %v538 = vadd.f32 %v138, %v530
    %v539 = vadd.f32 %v161, %v531
    %v540 = vxor.u32 %v536, 2147483648
    %v541 = vmul.f32 %v540, 1.442695
    %v542 = vpow.pop %v541
    %v543 = vadd.f32 %v542, 1.0
    %v544 = vrcp.pop %v543
    %v545 = vmul.f32 %v543, %v544
    %v546 = vsub.f32 1.0, %v545
    %v547 = vmul.f32 %v544, %v546
    %v548 = vadd.f32 %v544, %v547
    %vm549 = vweird.f32 %v543
    %vm550 = vweird.f32 %v544
    %vm551 = vmor %vm549, %vm550
    %v552 = vsel %vm551, %v544, %v548
    %v553 = vand.u32 2147483647, %v543
    %vm554 = vcmp.eq.f32.partialorder %v553, 8.507059e+37
    %v555 = vand.u32 %v543, 2147483648
    %v556 = vor.u32 1.1754944e-38, %v555
    %v557 = vsel %vm554, %v556, %v552
    %v558 = vmul.f32 1.0, %v557
    %v559 = vxor.u32 %v537, 2147483648
    %v560 = vmul.f32 %v559, 1.442695
    %v561 = vpow.pop %v560
    %v562 = vadd.f32 %v561, 1.0
    %v563 = vrcp.pop %v562
    %v564 = vmul.f32 %v562, %v563
    %v565 = vsub.f32 1.0, %v564
    %v566 = vmul.f32 %v563, %v565
    %v567 = vadd.f32 %v563, %v566
    %vm568 = vweird.f32 %v562
    %vm569 = vweird.f32 %v563
    %vm570 = vmor %vm568, %vm569
    %v571 = vsel %vm570, %v563, %v567
    %v572 = vand.u32 2147483647, %v562
    %vm573 = vcmp.eq.f32.partialorder %v572, 8.507059e+37
    %v574 = vand.u32 %v562, 2147483648
    %v575 = vor.u32 1.1754944e-38, %v574
    %v576 = vsel %vm573, %v575, %v571
    %v577 = vmul.f32 1.0, %v576
    %v578 = vtanh.pop %v538
    %v579 = vxor.u32 %v539, 2147483648
    %v580 = vmul.f32 %v579, 1.442695
    %v581 = vpow.pop %v580
    %v582 = vadd.f32 %v581, 1.0
    %v583 = vrcp.pop %v582
    %v584 = vmul.f32 %v582, %v583
    %v585 = vsub.f32 1.0, %v584
    %v586 = vmul.f32 %v583, %v585
    %v587 = vadd.f32 %v583, %v586
    %vm588 = vweird.f32 %v582
    %vm589 = vweird.f32 %v583
    %vm590 = vmor %vm588, %vm589
    %v591 = vsel %vm590, %v583, %v587
    %v592 = vand.u32 2147483647, %v582
    %vm593 = vcmp.eq.f32.partialorder %v592, 8.507059e+37
    %v594 = vand.u32 %v582, 2147483648
    %v595 = vor.u32 1.1754944e-38, %v594
    %v596 = vsel %vm593, %v595, %v591
    %v597 = vmul.f32 1.0, %v596
    %v599 = vrot.slane %v376, 6
    %v601 = vmul.f32 %v577, %v599
    %v602 = vmul.f32 %v558, %v578
    %v603 = vadd.f32 %v601, %v602
    %v604 = vtanh.pop %v603
    %v605 = vmul.f32 %v597, %v604
    %606 = vst [vmem:[#allocation2] sm:$0xc] %v605
    %v607 = vld [vmem:[%s4] sm:$0xff]
    %v608 = vld [vmem:[%s4 + $0x8] sm:$0xff]
    %v609 = vld [vmem:[%s4 + $0x10] sm:$0xff]
    %v610 = vld [vmem:[%s4 + $0x18] sm:$0xff]
    %v611 = vld [vmem:[%s4 + $0x20] sm:$0xff]
    %v612 = vld [vmem:[%s4 + $0x28] sm:$0xff]
    %v613 = vld [vmem:[%s4 + $0x30] sm:$0xff]
    %v614 = vld [vmem:[%s4 + $0x38] sm:$0xff]
    %v615 = vld [vmem:[%s4 + $0x40] sm:$0xff]
    %v616 = vld [vmem:[%s4 + $0x48] sm:$0xff]
    %v617 = vld [vmem:[%s4 + $0x50] sm:$0xff]
    %v618 = vld [vmem:[%s4 + $0x58] sm:$0xff]
    %v619 = vld [vmem:[%s4 + $0x60] sm:$0xff]
    %v620 = vld [vmem:[%s4 + $0x68] sm:$0xff]
    %v621 = vld [vmem:[%s4 + $0x70] sm:$0xff]
    %v622 = vld [vmem:[%s4 + $0x78] sm:$0xff]
    %v623 = vld [vmem:[%s4 + $0x80] sm:$0xff]
    %v624 = vld [vmem:[%s4 + $0x88] sm:$0xff]
    %v625 = vld [vmem:[%s4 + $0x90] sm:$0xff]
    %v626 = vld [vmem:[%s4 + $0x98] sm:$0xff]
    %v627 = vld [vmem:[%s4 + $0xa0] sm:$0xff]
    %v628 = vld [vmem:[%s4 + $0xa8] sm:$0xff]
    %v629 = vld [vmem:[%s4 + $0xb0] sm:$0xff]
    %v630 = vld [vmem:[%s4 + $0xb8] sm:$0xff]
    %v631 = vld [vmem:[%s4 + $0xc0] sm:$0xff]
    %v632 = vld [vmem:[%s4 + $0xc8] sm:$0xff]
    %v633 = vld [vmem:[%s4 + $0xd0] sm:$0xff]
    %v634 = vld [vmem:[%s4 + $0xd8] sm:$0xff]
    %v635 = vld [vmem:[%s4 + $0xe0] sm:$0xff]
    %v636 = vld [vmem:[%s4 + $0xe8] sm:$0xff]
    %v637 = vld [vmem:[%s4 + $0xf0] sm:$0xff]
    %v638 = vld [vmem:[%s4 + $0xf8] sm:$0xff]
    %v639 = vld [vmem:[%s4 + $0x100] sm:$0xff]
    %v640 = vld [vmem:[%s4 + $0x108] sm:$0xff]
    %v641 = vld [vmem:[%s4 + $0x110] sm:$0xff]
    %v642 = vld [vmem:[%s4 + $0x118] sm:$0xff]
    %v643 = vld [vmem:[%s4 + $0x120] sm:$0xff]
    %v644 = vld [vmem:[%s4 + $0x128] sm:$0xff]
    %v645 = vld [vmem:[%s4 + $0x130] sm:$0xff]
    %v646 = vld [vmem:[%s4 + $0x138] sm:$0xff]
    %v647 = vld [vmem:[%s4 + $0x140] sm:$0xff]
    %v648 = vld [vmem:[%s4 + $0x148] sm:$0xff]
    %v649 = vld [vmem:[%s4 + $0x150] sm:$0xff]
    %v650 = vld [vmem:[%s4 + $0x158] sm:$0xff]
    %v651 = vld [vmem:[%s4 + $0x160] sm:$0xff]
    %v652 = vld [vmem:[%s4 + $0x168] sm:$0xff]
    %v653 = vld [vmem:[%s4 + $0x170] sm:$0xff]
    %v654 = vld [vmem:[%s4 + $0x178] sm:$0xff]
    %v655 = vld [vmem:[%s4 + $0x180] sm:$0xff]
    %v656 = vld [vmem:[%s4 + $0x188] sm:$0xff]
    %v657 = vld [vmem:[%s4 + $0x190] sm:$0xff]
    %v658 = vld [vmem:[%s4 + $0x198] sm:$0xff]
    %v659 = vld [vmem:[%s4 + $0x1a0] sm:$0xff]
    %v660 = vld [vmem:[%s4 + $0x1a8] sm:$0xff]
    %v661 = vld [vmem:[%s4 + $0x1b0] sm:$0xff]
    %v662 = vld [vmem:[%s4 + $0x1b8] sm:$0xff]
    %v663 = vld [vmem:[%s4 + $0x1c0] sm:$0xff]
    %v664 = vld [vmem:[%s4 + $0x1c8] sm:$0xff]
    %v665 = vld [vmem:[%s4 + $0x1d0] sm:$0xff]
    %v666 = vld [vmem:[%s4 + $0x1d8] sm:$0xff]
    %v667 = vld [vmem:[%s4 + $0x1e0] sm:$0xff]
    %v668 = vld [vmem:[%s4 + $0x1e8] sm:$0xff]
    %v669 = vld [vmem:[%s4 + $0x1f0] sm:$0xff]
    %v670 = vld [vmem:[%s4 + $0x1f8] sm:$0xff]
    %v672 = vrot.slane %v605, 2
    %674 = vmatpush.msra.mxu0 %v667
    %675 = vmatpush.msra.mxu0 %v663
    %676 = vmatpush.msra.mxu0 %v659
    %677 = vmatpush.msra.mxu0 %v655
    %678 = vmatpush.msra.mxu0 %v651
    %679 = vmatpush.msra.mxu0 %v647
    %680 = vmatpush.msra.mxu0 %v643
    %681 = vmatpush.msra.mxu0 %v639
    %682 = vmatpush.msra.mxu0 %v635
    %683 = vmatpush.msra.mxu0 %v631
    %684 = vmatpush.msra.mxu0 %v627
    %685 = vmatpush.msra.mxu0 %v623
    %686 = vmatpush.msra.mxu0 %v619
    %687 = vmatpush.msra.mxu0 %v615
    %688 = vmatpush.msra.mxu0 %v611
    %689 = vmatpush.msra.mxu0 %v607
    %690 = vmatmul.f32.gmra.mxu0 %v672
    %v691 = vpop.f32.mrf.mxu0
    %v692 = vadd.f32 0.0, %v691
    %693 = vdwg.mxu0
    %694 = vmatpush.msra.mxu0 %v668
    %695 = vmatpush.msra.mxu0 %v664
    %696 = vmatpush.msra.mxu0 %v660
    %697 = vmatpush.msra.mxu0 %v656
    %698 = vmatpush.msra.mxu0 %v652
    %699 = vmatpush.msra.mxu0 %v648
    %700 = vmatpush.msra.mxu0 %v644
    %701 = vmatpush.msra.mxu0 %v640
    %702 = vmatpush.msra.mxu0 %v636
    %703 = vmatpush.msra.mxu0 %v632
    %704 = vmatpush.msra.mxu0 %v628
    %705 = vmatpush.msra.mxu0 %v624
    %706 = vmatpush.msra.mxu0 %v620
    %707 = vmatpush.msra.mxu0 %v616
    %708 = vmatpush.msra.mxu0 %v612
    %709 = vmatpush.msra.mxu0 %v608
    %710 = vmatmul.f32.gmra.mxu0 %v672
    %v711 = vpop.f32.mrf.mxu0
    %v712 = vadd.f32 0.0, %v711
    %713 = vdwg.mxu0
    %714 = vmatpush.msra.mxu0 %v669
    %715 = vmatpush.msra.mxu0 %v665
    %716 = vmatpush.msra.mxu0 %v661
    %717 = vmatpush.msra.mxu0 %v657
    %718 = vmatpush.msra.mxu0 %v653
    %719 = vmatpush.msra.mxu0 %v649
    %720 = vmatpush.msra.mxu0 %v645
    %721 = vmatpush.msra.mxu0 %v641
    %722 = vmatpush.msra.mxu0 %v637
    %723 = vmatpush.msra.mxu0 %v633
    %724 = vmatpush.msra.mxu0 %v629
    %725 = vmatpush.msra.mxu0 %v625
    %726 = vmatpush.msra.mxu0 %v621
    %727 = vmatpush.msra.mxu0 %v617
    %728 = vmatpush.msra.mxu0 %v613
    %729 = vmatpush.msra.mxu0 %v609
    %730 = vmatmul.f32.gmra.mxu0 %v672
    %v731 = vpop.f32.mrf.mxu0
    %v732 = vadd.f32 0.0, %v731
    %733 = vdwg.mxu0
    %734 = vmatpush.msra.mxu0 %v670
    %735 = vmatpush.msra.mxu0 %v666
    %736 = vmatpush.msra.mxu0 %v662
    %737 = vmatpush.msra.mxu0 %v658
    %738 = vmatpush.msra.mxu0 %v654
    %739 = vmatpush.msra.mxu0 %v650
    %740 = vmatpush.msra.mxu0 %v646
    %741 = vmatpush.msra.mxu0 %v642
    %742 = vmatpush.msra.mxu0 %v638
    %743 = vmatpush.msra.mxu0 %v634
    %744 = vmatpush.msra.mxu0 %v630
    %745 = vmatpush.msra.mxu0 %v626
    %746 = vmatpush.msra.mxu0 %v622
    %747 = vmatpush.msra.mxu0 %v618
    %748 = vmatpush.msra.mxu0 %v614
    %749 = vmatpush.msra.mxu0 %v610
    %750 = vmatmul.f32.gmra.mxu0 %v672
    %v751 = vpop.f32.mrf.mxu0
    %v752 = vadd.f32 0.0, %v751
    %753 = vdwg.mxu0
    %v758 = vrot.slane %v692, 4
    %v759 = vrot.slane %v712, 4
    %v760 = vrot.slane %v732, 4
    %v761 = vrot.slane %v752, 4
    %v766 = vadd.f32 %v92, %v758
    %v767 = vadd.f32 %v115, %v759
    %v768 = vadd.f32 %v138, %v760
    %v769 = vadd.f32 %v161, %v761
    %v770 = vxor.u32 %v766, 2147483648
    %v771 = vmul.f32 %v770, 1.442695
    %v772 = vpow.pop %v771
    %v773 = vadd.f32 %v772, 1.0
    %v774 = vrcp.pop %v773
    %v775 = vmul.f32 %v773, %v774
    %v776 = vsub.f32 1.0, %v775
    %v777 = vmul.f32 %v774, %v776
    %v778 = vadd.f32 %v774, %v777
    %vm779 = vweird.f32 %v773
    %vm780 = vweird.f32 %v774
    %vm781 = vmor %vm779, %vm780
    %v782 = vsel %vm781, %v774, %v778
    %v783 = vand.u32 2147483647, %v773
    %vm784 = vcmp.eq.f32.partialorder %v783, 8.507059e+37
    %v785 = vand.u32 %v773, 2147483648
    %v786 = vor.u32 1.1754944e-38, %v785
    %v787 = vsel %vm784, %v786, %v782
    %v788 = vmul.f32 1.0, %v787
    %v789 = vxor.u32 %v767, 2147483648
    %v790 = vmul.f32 %v789, 1.442695
    %v791 = vpow.pop %v790
    %v792 = vadd.f32 %v791, 1.0
    %v793 = vrcp.pop %v792
    %v794 = vmul.f32 %v792, %v793
    %v795 = vsub.f32 1.0, %v794
    %v796 = vmul.f32 %v793, %v795
    %v797 = vadd.f32 %v793, %v796
    %vm798 = vweird.f32 %v792
    %vm799 = vweird.f32 %v793
    %vm800 = vmor %vm798, %vm799
    %v801 = vsel %vm800, %v793, %v797
    %v802 = vand.u32 2147483647, %v792
    %vm803 = vcmp.eq.f32.partialorder %v802, 8.507059e+37
    %v804 = vand.u32 %v792, 2147483648
    %v805 = vor.u32 1.1754944e-38, %v804
    %v806 = vsel %vm803, %v805, %v801
    %v807 = vmul.f32 1.0, %v806
    %v808 = vtanh.pop %v768
    %v809 = vxor.u32 %v769, 2147483648
    %v810 = vmul.f32 %v809, 1.442695
    %v811 = vpow.pop %v810
    %v812 = vadd.f32 %v811, 1.0
    %v813 = vrcp.pop %v812
    %v814 = vmul.f32 %v812, %v813
    %v815 = vsub.f32 1.0, %v814
    %v816 = vmul.f32 %v813, %v815
    %v817 = vadd.f32 %v813, %v816
    %vm818 = vweird.f32 %v812
    %vm819 = vweird.f32 %v813
    %vm820 = vmor %vm818, %vm819
    %v821 = vsel %vm820, %v813, %v817
    %v822 = vand.u32 2147483647, %v812
    %vm823 = vcmp.eq.f32.partialorder %v822, 8.507059e+37
    %v824 = vand.u32 %v812, 2147483648
    %v825 = vor.u32 1.1754944e-38, %v824
    %v826 = vsel %vm823, %v825, %v821
    %v827 = vmul.f32 1.0, %v826
    %v829 = vrot.slane %v603, 6
    %v831 = vmul.f32 %v807, %v829
    %v832 = vmul.f32 %v788, %v808
    %v833 = vadd.f32 %v831, %v832
    %v834 = vtanh.pop %v833
    %v835 = vmul.f32 %v827, %v834
    %836 = vst [vmem:[#allocation2] sm:$0x30] %v835
    %v837 = vld [vmem:[%s4] sm:$0xff]
    %v838 = vld [vmem:[%s4 + $0x8] sm:$0xff]
    %v839 = vld [vmem:[%s4 + $0x10] sm:$0xff]
    %v840 = vld [vmem:[%s4 + $0x18] sm:$0xff]
    %v841 = vld [vmem:[%s4 + $0x20] sm:$0xff]
    %v842 = vld [vmem:[%s4 + $0x28] sm:$0xff]
    %v843 = vld [vmem:[%s4 + $0x30] sm:$0xff]
    %v844 = vld [vmem:[%s4 + $0x38] sm:$0xff]
    %v845 = vld [vmem:[%s4 + $0x40] sm:$0xff]
    %v846 = vld [vmem:[%s4 + $0x48] sm:$0xff]
    %v847 = vld [vmem:[%s4 + $0x50] sm:$0xff]
    %v848 = vld [vmem:[%s4 + $0x58] sm:$0xff]
    %v849 = vld [vmem:[%s4 + $0x60] sm:$0xff]
    %v850 = vld [vmem:[%s4 + $0x68] sm:$0xff]
    %v851 = vld [vmem:[%s4 + $0x70] sm:$0xff]
    %v852 = vld [vmem:[%s4 + $0x78] sm:$0xff]
    %v853 = vld [vmem:[%s4 + $0x80] sm:$0xff]
    %v854 = vld [vmem:[%s4 + $0x88] sm:$0xff]
    %v855 = vld [vmem:[%s4 + $0x90] sm:$0xff]
    %v856 = vld [vmem:[%s4 + $0x98] sm:$0xff]
    %v857 = vld [vmem:[%s4 + $0xa0] sm:$0xff]
    %v858 = vld [vmem:[%s4 + $0xa8] sm:$0xff]
    %v859 = vld [vmem:[%s4 + $0xb0] sm:$0xff]
    %v860 = vld [vmem:[%s4 + $0xb8] sm:$0xff]
    %v861 = vld [vmem:[%s4 + $0xc0] sm:$0xff]
    %v862 = vld [vmem:[%s4 + $0xc8] sm:$0xff]
    %v863 = vld [vmem:[%s4 + $0xd0] sm:$0xff]
    %v864 = vld [vmem:[%s4 + $0xd8] sm:$0xff]
    %v865 = vld [vmem:[%s4 + $0xe0] sm:$0xff]
    %v866 = vld [vmem:[%s4 + $0xe8] sm:$0xff]
    %v867 = vld [vmem:[%s4 + $0xf0] sm:$0xff]
    %v868 = vld [vmem:[%s4 + $0xf8] sm:$0xff]
    %v869 = vld [vmem:[%s4 + $0x100] sm:$0xff]
    %v870 = vld [vmem:[%s4 + $0x108] sm:$0xff]
    %v871 = vld [vmem:[%s4 + $0x110] sm:$0xff]
    %v872 = vld [vmem:[%s4 + $0x118] sm:$0xff]
    %v873 = vld [vmem:[%s4 + $0x120] sm:$0xff]
    %v874 = vld [vmem:[%s4 + $0x128] sm:$0xff]
    %v875 = vld [vmem:[%s4 + $0x130] sm:$0xff]
    %v876 = vld [vmem:[%s4 + $0x138] sm:$0xff]
    %v877 = vld [vmem:[%s4 + $0x140] sm:$0xff]
    %v878 = vld [vmem:[%s4 + $0x148] sm:$0xff]
    %v879 = vld [vmem:[%s4 + $0x150] sm:$0xff]
    %v880 = vld [vmem:[%s4 + $0x158] sm:$0xff]
    %v881 = vld [vmem:[%s4 + $0x160] sm:$0xff]
    %v882 = vld [vmem:[%s4 + $0x168] sm:$0xff]
    %v883 = vld [vmem:[%s4 + $0x170] sm:$0xff]
    %v884 = vld [vmem:[%s4 + $0x178] sm:$0xff]
    %v885 = vld [vmem:[%s4 + $0x180] sm:$0xff]
    %v886 = vld [vmem:[%s4 + $0x188] sm:$0xff]
    %v887 = vld [vmem:[%s4 + $0x190] sm:$0xff]
    %v888 = vld [vmem:[%s4 + $0x198] sm:$0xff]
    %v889 = vld [vmem:[%s4 + $0x1a0] sm:$0xff]
    %v890 = vld [vmem:[%s4 + $0x1a8] sm:$0xff]
    %v891 = vld [vmem:[%s4 + $0x1b0] sm:$0xff]
    %v892 = vld [vmem:[%s4 + $0x1b8] sm:$0xff]
    %v893 = vld [vmem:[%s4 + $0x1c0] sm:$0xff]
    %v894 = vld [vmem:[%s4 + $0x1c8] sm:$0xff]
    %v895 = vld [vmem:[%s4 + $0x1d0] sm:$0xff]
    %v896 = vld [vmem:[%s4 + $0x1d8] sm:$0xff]
    %v897 = vld [vmem:[%s4 + $0x1e0] sm:$0xff]
    %v898 = vld [vmem:[%s4 + $0x1e8] sm:$0xff]
    %v899 = vld [vmem:[%s4 + $0x1f0] sm:$0xff]
    %v900 = vld [vmem:[%s4 + $0x1f8] sm:$0xff]
    %v902 = vrot.slane %v835, 4
    %904 = vmatpush.msra.mxu0 %v897
    %905 = vmatpush.msra.mxu0 %v893
    %906 = vmatpush.msra.mxu0 %v889
    %907 = vmatpush.msra.mxu0 %v885
    %908 = vmatpush.msra.mxu0 %v881
    %909 = vmatpush.msra.mxu0 %v877
    %910 = vmatpush.msra.mxu0 %v873
    %911 = vmatpush.msra.mxu0 %v869
    %912 = vmatpush.msra.mxu0 %v865
    %913 = vmatpush.msra.mxu0 %v861
    %914 = vmatpush.msra.mxu0 %v857
    %915 = vmatpush.msra.mxu0 %v853
    %916 = vmatpush.msra.mxu0 %v849
    %917 = vmatpush.msra.mxu0 %v845
    %918 = vmatpush.msra.mxu0 %v841
    %919 = vmatpush.msra.mxu0 %v837
    %920 = vmatmul.f32.gmra.mxu0 %v902
    %v921 = vpop.f32.mrf.mxu0
    %v922 = vadd.f32 0.0, %v921
    %923 = vdwg.mxu0
    %924 = vmatpush.msra.mxu0 %v898
    %925 = vmatpush.msra.mxu0 %v894
    %926 = vmatpush.msra.mxu0 %v890
    %927 = vmatpush.msra.mxu0 %v886
    %928 = vmatpush.msra.mxu0 %v882
    %929 = vmatpush.msra.mxu0 %v878
    %930 = vmatpush.msra.mxu0 %v874
    %931 = vmatpush.msra.mxu0 %v870
    %932 = vmatpush.msra.mxu0 %v866
    %933 = vmatpush.msra.mxu0 %v862
    %934 = vmatpush.msra.mxu0 %v858
    %935 = vmatpush.msra.mxu0 %v854
    %936 = vmatpush.msra.mxu0 %v850
    %937 = vmatpush.msra.mxu0 %v846
    %938 = vmatpush.msra.mxu0 %v842
    %939 = vmatpush.msra.mxu0 %v838
    %940 = vmatmul.f32.gmra.mxu0 %v902
    %v941 = vpop.f32.mrf.mxu0
    %v942 = vadd.f32 0.0, %v941
    %943 = vdwg.mxu0
    %944 = vmatpush.msra.mxu0 %v899
    %945 = vmatpush.msra.mxu0 %v895
    %946 = vmatpush.msra.mxu0 %v891
    %947 = vmatpush.msra.mxu0 %v887
    %948 = vmatpush.msra.mxu0 %v883
    %949 = vmatpush.msra.mxu0 %v879
    %950 = vmatpush.msra.mxu0 %v875
    %951 = vmatpush.msra.mxu0 %v871
    %952 = vmatpush.msra.mxu0 %v867
    %953 = vmatpush.msra.mxu0 %v863
    %954 = vmatpush.msra.mxu0 %v859
    %955 = vmatpush.msra.mxu0 %v855
    %956 = vmatpush.msra.mxu0 %v851
    %957 = vmatpush.msra.mxu0 %v847
    %958 = vmatpush.msra.mxu0 %v843
    %959 = vmatpush.msra.mxu0 %v839
    %960 = vmatmul.f32.gmra.mxu0 %v902
    %v961 = vpop.f32.mrf.mxu0
    %v962 = vadd.f32 0.0, %v961
    %963 = vdwg.mxu0
    %964 = vmatpush.msra.mxu0 %v900
    %965 = vmatpush.msra.mxu0 %v896
    %966 = vmatpush.msra.mxu0 %v892
    %967 = vmatpush.msra.mxu0 %v888
    %968 = vmatpush.msra.mxu0 %v884
    %969 = vmatpush.msra.mxu0 %v880
    %970 = vmatpush.msra.mxu0 %v876
    %971 = vmatpush.msra.mxu0 %v872
    %972 = vmatpush.msra.mxu0 %v868
    %973 = vmatpush.msra.mxu0 %v864
    %974 = vmatpush.msra.mxu0 %v860
    %975 = vmatpush.msra.mxu0 %v856
    %976 = vmatpush.msra.mxu0 %v852
    %977 = vmatpush.msra.mxu0 %v848
    %978 = vmatpush.msra.mxu0 %v844
    %979 = vmatpush.msra.mxu0 %v840
    %980 = vmatmul.f32.gmra.mxu0 %v902
    %v981 = vpop.f32.mrf.mxu0
    %v982 = vadd.f32 0.0, %v981
    %983 = vdwg.mxu0
    %v988 = vrot.slane %v922, 2
    %v989 = vrot.slane %v942, 2
    %v990 = vrot.slane %v962, 2
    %v991 = vrot.slane %v982, 2
    %v996 = vadd.f32 %v92, %v988
    %v997 = vadd.f32 %v115, %v989
    %v998 = vadd.f32 %v138, %v990
    %v999 = vadd.f32 %v161, %v991
    %v1000 = vxor.u32 %v996, 2147483648
    %v1001 = vmul.f32 %v1000, 1.442695
    %v1002 = vpow.pop %v1001
    %v1003 = vadd.f32 %v1002, 1.0
    %v1004 = vrcp.pop %v1003
    %v1005 = vmul.f32 %v1003, %v1004
    %v1006 = vsub.f32 1.0, %v1005
    %v1007 = vmul.f32 %v1004, %v1006
    %v1008 = vadd.f32 %v1004, %v1007
    %vm1009 = vweird.f32 %v1003
    %vm1010 = vweird.f32 %v1004
    %vm1011 = vmor %vm1009, %vm1010
    %v1012 = vsel %vm1011, %v1004, %v1008
    %v1013 = vand.u32 2147483647, %v1003
    %vm1014 = vcmp.eq.f32.partialorder %v1013, 8.507059e+37
    %v1015 = vand.u32 %v1003, 2147483648
    %v1016 = vor.u32 1.1754944e-38, %v1015
    %v1017 = vsel %vm1014, %v1016, %v1012
    %v1018 = vmul.f32 1.0, %v1017
    %v1019 = vxor.u32 %v997, 2147483648
    %v1020 = vmul.f32 %v1019, 1.442695
    %v1021 = vpow.pop %v1020
    %v1022 = vadd.f32 %v1021, 1.0
    %v1023 = vrcp.pop %v1022
    %v1024 = vmul.f32 %v1022, %v1023
    %v1025 = vsub.f32 1.0, %v1024
    %v1026 = vmul.f32 %v1023, %v1025
    %v1027 = vadd.f32 %v1023, %v1026
    %vm1028 = vweird.f32 %v1022
    %vm1029 = vweird.f32 %v1023
    %vm1030 = vmor %vm1028, %vm1029
    %v1031 = vsel %vm1030, %v1023, %v1027
    %v1032 = vand.u32 2147483647, %v1022
    %vm1033 = vcmp.eq.f32.partialorder %v1032, 8.507059e+37
    %v1034 = vand.u32 %v1022, 2147483648
    %v1035 = vor.u32 1.1754944e-38, %v1034
    %v1036 = vsel %vm1033, %v1035, %v1031
    %v1037 = vmul.f32 1.0, %v1036
    %v1038 = vtanh.pop %v998
    %v1039 = vxor.u32 %v999, 2147483648
    %v1040 = vmul.f32 %v1039, 1.442695
    %v1041 = vpow.pop %v1040
    %v1042 = vadd.f32 %v1041, 1.0
    %v1043 = vrcp.pop %v1042
    %v1044 = vmul.f32 %v1042, %v1043
    %v1045 = vsub.f32 1.0, %v1044
    %v1046 = vmul.f32 %v1043, %v1045
    %v1047 = vadd.f32 %v1043, %v1046
    %vm1048 = vweird.f32 %v1042
    %vm1049 = vweird.f32 %v1043
    %vm1050 = vmor %vm1048, %vm1049
    %v1051 = vsel %vm1050, %v1043, %v1047
    %v1052 = vand.u32 2147483647, %v1042
    %vm1053 = vcmp.eq.f32.partialorder %v1052, 8.507059e+37
    %v1054 = vand.u32 %v1042, 2147483648
    %v1055 = vor.u32 1.1754944e-38, %v1054
    %v1056 = vsel %vm1053, %v1055, %v1051
    %v1057 = vmul.f32 1.0, %v1056
    %v1059 = vrot.slane %v833, 6
    %v1061 = vmul.f32 %v1037, %v1059
    %v1062 = vmul.f32 %v1018, %v1038
    %v1063 = vadd.f32 %v1061, %v1062
    %v1064 = vtanh.pop %v1063
    %v1065 = vmul.f32 %v1057, %v1064
    %1066 = vst [vmem:[#allocation2] sm:$0xc0] %v1065
    %v1067 = vld [vmem:[%s4] sm:$0xff]
    %v1068 = vld [vmem:[%s4 + $0x8] sm:$0xff]
    %v1069 = vld [vmem:[%s4 + $0x10] sm:$0xff]
    %v1070 = vld [vmem:[%s4 + $0x18] sm:$0xff]
    %v1071 = vld [vmem:[%s4 + $0x20] sm:$0xff]
    %v1072 = vld [vmem:[%s4 + $0x28] sm:$0xff]
    %v1073 = vld [vmem:[%s4 + $0x30] sm:$0xff]
    %v1074 = vld [vmem:[%s4 + $0x38] sm:$0xff]
    %v1075 = vld [vmem:[%s4 + $0x40] sm:$0xff]
    %v1076 = vld [vmem:[%s4 + $0x48] sm:$0xff]
    %v1077 = vld [vmem:[%s4 + $0x50] sm:$0xff]
    %v1078 = vld [vmem:[%s4 + $0x58] sm:$0xff]
    %v1079 = vld [vmem:[%s4 + $0x60] sm:$0xff]
    %v1080 = vld [vmem:[%s4 + $0x68] sm:$0xff]
    %v1081 = vld [vmem:[%s4 + $0x70] sm:$0xff]
    %v1082 = vld [vmem:[%s4 + $0x78] sm:$0xff]
    %v1083 = vld [vmem:[%s4 + $0x80] sm:$0xff]
    %v1084 = vld [vmem:[%s4 + $0x88] sm:$0xff]
    %v1085 = vld [vmem:[%s4 + $0x90] sm:$0xff]
    %v1086 = vld [vmem:[%s4 + $0x98] sm:$0xff]
    %v1087 = vld [vmem:[%s4 + $0xa0] sm:$0xff]
    %v1088 = vld [vmem:[%s4 + $0xa8] sm:$0xff]
    %v1089 = vld [vmem:[%s4 + $0xb0] sm:$0xff]
    %v1090 = vld [vmem:[%s4 + $0xb8] sm:$0xff]
    %v1091 = vld [vmem:[%s4 + $0xc0] sm:$0xff]
    %v1092 = vld [vmem:[%s4 + $0xc8] sm:$0xff]
    %v1093 = vld [vmem:[%s4 + $0xd0] sm:$0xff]
    %v1094 = vld [vmem:[%s4 + $0xd8] sm:$0xff]
    %v1095 = vld [vmem:[%s4 + $0xe0] sm:$0xff]
    %v1096 = vld [vmem:[%s4 + $0xe8] sm:$0xff]
    %v1097 = vld [vmem:[%s4 + $0xf0] sm:$0xff]
    %v1098 = vld [vmem:[%s4 + $0xf8] sm:$0xff]
    %v1099 = vld [vmem:[%s4 + $0x100] sm:$0xff]
    %v1100 = vld [vmem:[%s4 + $0x108] sm:$0xff]
    %v1101 = vld [vmem:[%s4 + $0x110] sm:$0xff]
    %v1102 = vld [vmem:[%s4 + $0x118] sm:$0xff]
    %v1103 = vld [vmem:[%s4 + $0x120] sm:$0xff]
    %v1104 = vld [vmem:[%s4 + $0x128] sm:$0xff]
    %v1105 = vld [vmem:[%s4 + $0x130] sm:$0xff]
    %v1106 = vld [vmem:[%s4 + $0x138] sm:$0xff]
    %v1107 = vld [vmem:[%s4 + $0x140] sm:$0xff]
    %v1108 = vld [vmem:[%s4 + $0x148] sm:$0xff]
    %v1109 = vld [vmem:[%s4 + $0x150] sm:$0xff]
    %v1110 = vld [vmem:[%s4 + $0x158] sm:$0xff]
    %v1111 = vld [vmem:[%s4 + $0x160] sm:$0xff]
    %v1112 = vld [vmem:[%s4 + $0x168] sm:$0xff]
    %v1113 = vld [vmem:[%s4 + $0x170] sm:$0xff]
    %v1114 = vld [vmem:[%s4 + $0x178] sm:$0xff]
    %v1115 = vld [vmem:[%s4 + $0x180] sm:$0xff]
    %v1116 = vld [vmem:[%s4 + $0x188] sm:$0xff]
    %v1117 = vld [vmem:[%s4 + $0x190] sm:$0xff]
    %v1118 = vld [vmem:[%s4 + $0x198] sm:$0xff]
    %v1119 = vld [vmem:[%s4 + $0x1a0] sm:$0xff]
    %v1120 = vld [vmem:[%s4 + $0x1a8] sm:$0xff]
    %v1121 = vld [vmem:[%s4 + $0x1b0] sm:$0xff]
    %v1122 = vld [vmem:[%s4 + $0x1b8] sm:$0xff]
    %v1123 = vld [vmem:[%s4 + $0x1c0] sm:$0xff]
    %v1124 = vld [vmem:[%s4 + $0x1c8] sm:$0xff]
    %v1125 = vld [vmem:[%s4 + $0x1d0] sm:$0xff]
    %v1126 = vld [vmem:[%s4 + $0x1d8] sm:$0xff]
    %v1127 = vld [vmem:[%s4 + $0x1e0] sm:$0xff]
    %v1128 = vld [vmem:[%s4 + $0x1e8] sm:$0xff]
    %v1129 = vld [vmem:[%s4 + $0x1f0] sm:$0xff]
    %v1130 = vld [vmem:[%s4 + $0x1f8] sm:$0xff]
    %v1132 = vrot.slane %v1065, 6
    %1134 = vmatpush.msra.mxu0 %v1127
    %1135 = vmatpush.msra.mxu0 %v1123
    %1136 = vmatpush.msra.mxu0 %v1119
    %1137 = vmatpush.msra.mxu0 %v1115
    %1138 = vmatpush.msra.mxu0 %v1111
    %1139 = vmatpush.msra.mxu0 %v1107
    %1140 = vmatpush.msra.mxu0 %v1103
    %1141 = vmatpush.msra.mxu0 %v1099
    %1142 = vmatpush.msra.mxu0 %v1095
    %1143 = vmatpush.msra.mxu0 %v1091
    %1144 = vmatpush.msra.mxu0 %v1087
    %1145 = vmatpush.msra.mxu0 %v1083
    %1146 = vmatpush.msra.mxu0 %v1079
    %1147 = vmatpush.msra.mxu0 %v1075
    %1148 = vmatpush.msra.mxu0 %v1071
    %1149 = vmatpush.msra.mxu0 %v1067
    %1150 = vmatmul.f32.gmra.mxu0 %v1132
    %v1151 = vpop.f32.mrf.mxu0
    %v1152 = vadd.f32 0.0, %v1151
    %1153 = vdwg.mxu0
    %1154 = vmatpush.msra.mxu0 %v1128
    %1155 = vmatpush.msra.mxu0 %v1124
    %1156 = vmatpush.msra.mxu0 %v1120
    %1157 = vmatpush.msra.mxu0 %v1116
    %1158 = vmatpush.msra.mxu0 %v1112
    %1159 = vmatpush.msra.mxu0 %v1108
    %1160 = vmatpush.msra.mxu0 %v1104
    %1161 = vmatpush.msra.mxu0 %v1100
    %1162 = vmatpush.msra.mxu0 %v1096
    %1163 = vmatpush.msra.mxu0 %v1092
    %1164 = vmatpush.msra.mxu0 %v1088
    %1165 = vmatpush.msra.mxu0 %v1084
    %1166 = vmatpush.msra.mxu0 %v1080
    %1167 = vmatpush.msra.mxu0 %v1076
    %1168 = vmatpush.msra.mxu0 %v1072
    %1169 = vmatpush.msra.mxu0 %v1068
    %1170 = vmatmul.f32.gmra.mxu0 %v1132
    %v1171 = vpop.f32.mrf.mxu0
    %v1172 = vadd.f32 0.0, %v1171
    %1173 = vdwg.mxu0
    %1174 = vmatpush.msra.mxu0 %v1129
    %1175 = vmatpush.msra.mxu0 %v1125
    %1176 = vmatpush.msra.mxu0 %v1121
    %1177 = vmatpush.msra.mxu0 %v1117
    %1178 = vmatpush.msra.mxu0 %v1113
    %1179 = vmatpush.msra.mxu0 %v1109
    %1180 = vmatpush.msra.mxu0 %v1105
    %1181 = vmatpush.msra.mxu0 %v1101
    %1182 = vmatpush.msra.mxu0 %v1097
    %1183 = vmatpush.msra.mxu0 %v1093
    %1184 = vmatpush.msra.mxu0 %v1089
    %1185 = vmatpush.msra.mxu0 %v1085
    %1186 = vmatpush.msra.mxu0 %v1081
    %1187 = vmatpush.msra.mxu0 %v1077
    %1188 = vmatpush.msra.mxu0 %v1073
    %1189 = vmatpush.msra.mxu0 %v1069
    %1190 = vmatmul.f32.gmra.mxu0 %v1132
    %v1191 = vpop.f32.mrf.mxu0
    %v1192 = vadd.f32 0.0, %v1191
    %1193 = vdwg.mxu0
    %1194 = vmatpush.msra.mxu0 %v1130
    %1195 = vmatpush.msra.mxu0 %v1126
    %1196 = vmatpush.msra.mxu0 %v1122
    %1197 = vmatpush.msra.mxu0 %v1118
    %1198 = vmatpush.msra.mxu0 %v1114
    %1199 = vmatpush.msra.mxu0 %v1110
    %1200 = vmatpush.msra.mxu0 %v1106
    %1201 = vmatpush.msra.mxu0 %v1102
    %1202 = vmatpush.msra.mxu0 %v1098
    %1203 = vmatpush.msra.mxu0 %v1094
    %1204 = vmatpush.msra.mxu0 %v1090
    %1205 = vmatpush.msra.mxu0 %v1086
    %1206 = vmatpush.msra.mxu0 %v1082
    %1207 = vmatpush.msra.mxu0 %v1078
    %1208 = vmatpush.msra.mxu0 %v1074
    %1209 = vmatpush.msra.mxu0 %v1070
    %1210 = vmatmul.f32.gmra.mxu0 %v1132
    %v1211 = vpop.f32.mrf.mxu0
    %v1212 = vadd.f32 0.0, %v1211
    %1213 = vdwg.mxu0
    %v1214 = vadd.f32 %v95, %v1152
    %v1215 = vadd.f32 %v118, %v1172
    %v1216 = vadd.f32 %v141, %v1192
    %v1217 = vadd.f32 %v164, %v1212
    %v1218 = vxor.u32 %v1214, 2147483648
    %v1219 = vmul.f32 %v1218, 1.442695
    %v1220 = vpow.pop %v1219
    %v1221 = vadd.f32 %v1220, 1.0
    %v1222 = vrcp.pop %v1221
    %v1223 = vmul.f32 %v1221, %v1222
    %v1224 = vsub.f32 1.0, %v1223
    %v1225 = vmul.f32 %v1222, %v1224
    %v1226 = vadd.f32 %v1222, %v1225
    %vm1227 = vweird.f32 %v1221
    %vm1228 = vweird.f32 %v1222
    %vm1229 = vmor %vm1227, %vm1228
    %v1230 = vsel %vm1229, %v1222, %v1226
    %v1231 = vand.u32 2147483647, %v1221
    %vm1232 = vcmp.eq.f32.partialorder %v1231, 8.507059e+37
    %v1233 = vand.u32 %v1221, 2147483648
    %v1234 = vor.u32 1.1754944e-38, %v1233
    %v1235 = vsel %vm1232, %v1234, %v1230
    %v1236 = vmul.f32 1.0, %v1235
    %v1237 = vxor.u32 %v1215, 2147483648
    %v1238 = vmul.f32 %v1237, 1.442695
    %v1239 = vpow.pop %v1238
    %v1240 = vadd.f32 %v1239, 1.0
    %v1241 = vrcp.pop %v1240
    %v1242 = vmul.f32 %v1240, %v1241
    %v1243 = vsub.f32 1.0, %v1242
    %v1244 = vmul.f32 %v1241, %v1243
    %v1245 = vadd.f32 %v1241, %v1244
    %vm1246 = vweird.f32 %v1240
    %vm1247 = vweird.f32 %v1241
    %vm1248 = vmor %vm1246, %vm1247
    %v1249 = vsel %vm1248, %v1241, %v1245
    %v1250 = vand.u32 2147483647, %v1240
    %vm1251 = vcmp.eq.f32.partialorder %v1250, 8.507059e+37
    %v1252 = vand.u32 %v1240, 2147483648
    %v1253 = vor.u32 1.1754944e-38, %v1252
    %v1254 = vsel %vm1251, %v1253, %v1249
    %v1255 = vmul.f32 1.0, %v1254
    %v1256 = vtanh.pop %v1216
    %v1257 = vxor.u32 %v1217, 2147483648
    %v1258 = vmul.f32 %v1257, 1.442695
    %v1259 = vpow.pop %v1258
    %v1260 = vadd.f32 %v1259, 1.0
    %v1261 = vrcp.pop %v1260
    %v1262 = vmul.f32 %v1260, %v1261
    %v1263 = vsub.f32 1.0, %v1262
    %v1264 = vmul.f32 %v1261, %v1263
    %v1265 = vadd.f32 %v1261, %v1264
    %vm1266 = vweird.f32 %v1260
    %vm1267 = vweird.f32 %v1261
    %vm1268 = vmor %vm1266, %vm1267
    %v1269 = vsel %vm1268, %v1261, %v1265
    %v1270 = vand.u32 2147483647, %v1260
    %vm1271 = vcmp.eq.f32.partialorder %v1270, 8.507059e+37
    %v1272 = vand.u32 %v1260, 2147483648
    %v1273 = vor.u32 1.1754944e-38, %v1272
    %v1274 = vsel %vm1271, %v1273, %v1269
    %v1275 = vmul.f32 1.0, %v1274
    %v1277 = vrot.slane %v1063, 6
    %v1279 = vmul.f32 %v1255, %v1277
    %v1280 = vmul.f32 %v1236, %v1256
    %v1281 = vadd.f32 %v1279, %v1280
    %v1282 = vtanh.pop %v1281
    %v1283 = vmul.f32 %v1275, %v1282
    %1284 = vst [vmem:[#allocation2 + $0x8] sm:$0x3] %v1283
    %v1285 = vld [vmem:[%s4] sm:$0xff]
    %v1286 = vld [vmem:[%s4 + $0x8] sm:$0xff]
    %v1287 = vld [vmem:[%s4 + $0x10] sm:$0xff]
    %v1288 = vld [vmem:[%s4 + $0x18] sm:$0xff]
    %v1289 = vld [vmem:[%s4 + $0x20] sm:$0xff]
    %v1290 = vld [vmem:[%s4 + $0x28] sm:$0xff]
    %v1291 = vld [vmem:[%s4 + $0x30] sm:$0xff]
    %v1292 = vld [vmem:[%s4 + $0x38] sm:$0xff]
    %v1293 = vld [vmem:[%s4 + $0x40] sm:$0xff]
    %v1294 = vld [vmem:[%s4 + $0x48] sm:$0xff]
    %v1295 = vld [vmem:[%s4 + $0x50] sm:$0xff]
    %v1296 = vld [vmem:[%s4 + $0x58] sm:$0xff]
    %v1297 = vld [vmem:[%s4 + $0x60] sm:$0xff]
    %v1298 = vld [vmem:[%s4 + $0x68] sm:$0xff]
    %v1299 = vld [vmem:[%s4 + $0x70] sm:$0xff]
    %v1300 = vld [vmem:[%s4 + $0x78] sm:$0xff]
    %v1301 = vld [vmem:[%s4 + $0x80] sm:$0xff]
    %v1302 = vld [vmem:[%s4 + $0x88] sm:$0xff]
    %v1303 = vld [vmem:[%s4 + $0x90] sm:$0xff]
    %v1304 = vld [vmem:[%s4 + $0x98] sm:$0xff]
    %v1305 = vld [vmem:[%s4 + $0xa0] sm:$0xff]
    %v1306 = vld [vmem:[%s4 + $0xa8] sm:$0xff]
    %v1307 = vld [vmem:[%s4 + $0xb0] sm:$0xff]
    %v1308 = vld [vmem:[%s4 + $0xb8] sm:$0xff]
    %v1309 = vld [vmem:[%s4 + $0xc0] sm:$0xff]
    %v1310 = vld [vmem:[%s4 + $0xc8] sm:$0xff]
    %v1311 = vld [vmem:[%s4 + $0xd0] sm:$0xff]
    %v1312 = vld [vmem:[%s4 + $0xd8] sm:$0xff]
    %v1313 = vld [vmem:[%s4 + $0xe0] sm:$0xff]
    %v1314 = vld [vmem:[%s4 + $0xe8] sm:$0xff]
    %v1315 = vld [vmem:[%s4 + $0xf0] sm:$0xff]
    %v1316 = vld [vmem:[%s4 + $0xf8] sm:$0xff]
    %v1317 = vld [vmem:[%s4 + $0x100] sm:$0xff]
    %v1318 = vld [vmem:[%s4 + $0x108] sm:$0xff]
    %v1319 = vld [vmem:[%s4 + $0x110] sm:$0xff]
    %v1320 = vld [vmem:[%s4 + $0x118] sm:$0xff]
    %v1321 = vld [vmem:[%s4 + $0x120] sm:$0xff]
    %v1322 = vld [vmem:[%s4 + $0x128] sm:$0xff]
    %v1323 = vld [vmem:[%s4 + $0x130] sm:$0xff]
    %v1324 = vld [vmem:[%s4 + $0x138] sm:$0xff]
    %v1325 = vld [vmem:[%s4 + $0x140] sm:$0xff]
    %v1326 = vld [vmem:[%s4 + $0x148] sm:$0xff]
    %v1327 = vld [vmem:[%s4 + $0x150] sm:$0xff]
    %v1328 = vld [vmem:[%s4 + $0x158] sm:$0xff]
    %v1329 = vld [vmem:[%s4 + $0x160] sm:$0xff]
    %v1330 = vld [vmem:[%s4 + $0x168] sm:$0xff]
    %v1331 = vld [vmem:[%s4 + $0x170] sm:$0xff]
    %v1332 = vld [vmem:[%s4 + $0x178] sm:$0xff]
    %v1333 = vld [vmem:[%s4 + $0x180] sm:$0xff]
    %v1334 = vld [vmem:[%s4 + $0x188] sm:$0xff]
    %v1335 = vld [vmem:[%s4 + $0x190] sm:$0xff]
    %v1336 = vld [vmem:[%s4 + $0x198] sm:$0xff]
    %v1337 = vld [vmem:[%s4 + $0x1a0] sm:$0xff]
    %v1338 = vld [vmem:[%s4 + $0x1a8] sm:$0xff]
    %v1339 = vld [vmem:[%s4 + $0x1b0] sm:$0xff]
    %v1340 = vld [vmem:[%s4 + $0x1b8] sm:$0xff]
    %v1341 = vld [vmem:[%s4 + $0x1c0] sm:$0xff]
    %v1342 = vld [vmem:[%s4 + $0x1c8] sm:$0xff]
    %v1343 = vld [vmem:[%s4 + $0x1d0] sm:$0xff]
    %v1344 = vld [vmem:[%s4 + $0x1d8] sm:$0xff]
    %v1345 = vld [vmem:[%s4 + $0x1e0] sm:$0xff]
    %v1346 = vld [vmem:[%s4 + $0x1e8] sm:$0xff]
    %v1347 = vld [vmem:[%s4 + $0x1f0] sm:$0xff]
    %v1348 = vld [vmem:[%s4 + $0x1f8] sm:$0xff]
    %1349 = vmatpush.msra.mxu0 %v1345
    %1350 = vmatpush.msra.mxu0 %v1341
    %1351 = vmatpush.msra.mxu0 %v1337
    %1352 = vmatpush.msra.mxu0 %v1333
    %1353 = vmatpush.msra.mxu0 %v1329
    %1354 = vmatpush.msra.mxu0 %v1325
    %1355 = vmatpush.msra.mxu0 %v1321
    %1356 = vmatpush.msra.mxu0 %v1317
    %1357 = vmatpush.msra.mxu0 %v1313
    %1358 = vmatpush.msra.mxu0 %v1309
    %1359 = vmatpush.msra.mxu0 %v1305
    %1360 = vmatpush.msra.mxu0 %v1301
    %1361 = vmatpush.msra.mxu0 %v1297
    %1362 = vmatpush.msra.mxu0 %v1293
    %1363 = vmatpush.msra.mxu0 %v1289
    %1364 = vmatpush.msra.mxu0 %v1285
    %1365 = vmatmul.f32.gmra.mxu0 %v1283
    %v1366 = vpop.f32.mrf.mxu0
    %v1367 = vadd.f32 0.0, %v1366
    %1368 = vdwg.mxu0
    %1369 = vmatpush.msra.mxu0 %v1346
    %1370 = vmatpush.msra.mxu0 %v1342
    %1371 = vmatpush.msra.mxu0 %v1338
    %1372 = vmatpush.msra.mxu0 %v1334
    %1373 = vmatpush.msra.mxu0 %v1330
    %1374 = vmatpush.msra.mxu0 %v1326
    %1375 = vmatpush.msra.mxu0 %v1322
    %1376 = vmatpush.msra.mxu0 %v1318
    %1377 = vmatpush.msra.mxu0 %v1314
    %1378 = vmatpush.msra.mxu0 %v1310
    %1379 = vmatpush.msra.mxu0 %v1306
    %1380 = vmatpush.msra.mxu0 %v1302
    %1381 = vmatpush.msra.mxu0 %v1298
    %1382 = vmatpush.msra.mxu0 %v1294
    %1383 = vmatpush.msra.mxu0 %v1290
    %1384 = vmatpush.msra.mxu0 %v1286
    %1385 = vmatmul.f32.gmra.mxu0 %v1283
    %v1386 = vpop.f32.mrf.mxu0
    %v1387 = vadd.f32 0.0, %v1386
    %1388 = vdwg.mxu0
    %1389 = vmatpush.msra.mxu0 %v1347
    %1390 = vmatpush.msra.mxu0 %v1343
    %1391 = vmatpush.msra.mxu0 %v1339
    %1392 = vmatpush.msra.mxu0 %v1335
    %1393 = vmatpush.msra.mxu0 %v1331
    %1394 = vmatpush.msra.mxu0 %v1327
    %1395 = vmatpush.msra.mxu0 %v1323
    %1396 = vmatpush.msra.mxu0 %v1319
    %1397 = vmatpush.msra.mxu0 %v1315
    %1398 = vmatpush.msra.mxu0 %v1311
    %1399 = vmatpush.msra.mxu0 %v1307
    %1400 = vmatpush.msra.mxu0 %v1303
    %1401 = vmatpush.msra.mxu0 %v1299
    %1402 = vmatpush.msra.mxu0 %v1295
    %1403 = vmatpush.msra.mxu0 %v1291
    %1404 = vmatpush.msra.mxu0 %v1287
    %1405 = vmatmul.f32.gmra.mxu0 %v1283
    %v1406 = vpop.f32.mrf.mxu0
    %v1407 = vadd.f32 0.0, %v1406
    %1408 = vdwg.mxu0
    %1409 = vmatpush.msra.mxu0 %v1348
    %1410 = vmatpush.msra.mxu0 %v1344
    %1411 = vmatpush.msra.mxu0 %v1340
    %1412 = vmatpush.msra.mxu0 %v1336
    %1413 = vmatpush.msra.mxu0 %v1332
    %1414 = vmatpush.msra.mxu0 %v1328
    %1415 = vmatpush.msra.mxu0 %v1324
    %1416 = vmatpush.msra.mxu0 %v1320
    %1417 = vmatpush.msra.mxu0 %v1316
    %1418 = vmatpush.msra.mxu0 %v1312
    %1419 = vmatpush.msra.mxu0 %v1308
    %1420 = vmatpush.msra.mxu0 %v1304
    %1421 = vmatpush.msra.mxu0 %v1300
    %1422 = vmatpush.msra.mxu0 %v1296
    %1423 = vmatpush.msra.mxu0 %v1292
    %1424 = vmatpush.msra.mxu0 %v1288
    %1425 = vmatmul.f32.gmra.mxu0 %v1283
    %v1426 = vpop.f32.mrf.mxu0
    %v1427 = vadd.f32 0.0, %v1426
    %1428 = vdwg.mxu0
    %v1433 = vrot.slane %v1367, 6
    %v1434 = vrot.slane %v1387, 6
    %v1435 = vrot.slane %v1407, 6
    %v1436 = vrot.slane %v1427, 6
    %v1441 = vadd.f32 %v95, %v1433
    %v1442 = vadd.f32 %v118, %v1434
    %v1443 = vadd.f32 %v141, %v1435
    %v1444 = vadd.f32 %v164, %v1436
    %v1445 = vxor.u32 %v1441, 2147483648
    %v1446 = vmul.f32 %v1445, 1.442695
    %v1447 = vpow.pop %v1446
    %v1448 = vadd.f32 %v1447, 1.0
    %v1449 = vrcp.pop %v1448
    %v1450 = vmul.f32 %v1448, %v1449
    %v1451 = vsub.f32 1.0, %v1450
    %v1452 = vmul.f32 %v1449, %v1451
    %v1453 = vadd.f32 %v1449, %v1452
    %vm1454 = vweird.f32 %v1448
    %vm1455 = vweird.f32 %v1449
    %vm1456 = vmor %vm1454, %vm1455
    %v1457 = vsel %vm1456, %v1449, %v1453
    %v1458 = vand.u32 2147483647, %v1448
    %vm1459 = vcmp.eq.f32.partialorder %v1458, 8.507059e+37
    %v1460 = vand.u32 %v1448, 2147483648
    %v1461 = vor.u32 1.1754944e-38, %v1460
    %v1462 = vsel %vm1459, %v1461, %v1457
    %v1463 = vmul.f32 1.0, %v1462
    %v1464 = vxor.u32 %v1442, 2147483648
    %v1465 = vmul.f32 %v1464, 1.442695
    %v1466 = vpow.pop %v1465
    %v1467 = vadd.f32 %v1466, 1.0
    %v1468 = vrcp.pop %v1467
    %v1469 = vmul.f32 %v1467, %v1468
    %v1470 = vsub.f32 1.0, %v1469
    %v1471 = vmul.f32 %v1468, %v1470
    %v1472 = vadd.f32 %v1468, %v1471
    %vm1473 = vweird.f32 %v1467
    %vm1474 = vweird.f32 %v1468
    %vm1475 = vmor %vm1473, %vm1474
    %v1476 = vsel %vm1475, %v1468, %v1472
    %v1477 = vand.u32 2147483647, %v1467
    %vm1478 = vcmp.eq.f32.partialorder %v1477, 8.507059e+37
    %v1479 = vand.u32 %v1467, 2147483648
    %v1480 = vor.u32 1.1754944e-38, %v1479
    %v1481 = vsel %vm1478, %v1480, %v1476
    %v1482 = vmul.f32 1.0, %v1481
    %v1483 = vtanh.pop %v1443
    %v1484 = vxor.u32 %v1444, 2147483648
    %v1485 = vmul.f32 %v1484, 1.442695
    %v1486 = vpow.pop %v1485
    %v1487 = vadd.f32 %v1486, 1.0
    %v1488 = vrcp.pop %v1487
    %v1489 = vmul.f32 %v1487, %v1488
    %v1490 = vsub.f32 1.0, %v1489
    %v1491 = vmul.f32 %v1488, %v1490
    %v1492 = vadd.f32 %v1488, %v1491
    %vm1493 = vweird.f32 %v1487
    %vm1494 = vweird.f32 %v1488
    %vm1495 = vmor %vm1493, %vm1494
    %v1496 = vsel %vm1495, %v1488, %v1492
    %v1497 = vand.u32 2147483647, %v1487
    %vm1498 = vcmp.eq.f32.partialorder %v1497, 8.507059e+37
    %v1499 = vand.u32 %v1487, 2147483648
    %v1500 = vor.u32 1.1754944e-38, %v1499
    %v1501 = vsel %vm1498, %v1500, %v1496
    %v1502 = vmul.f32 1.0, %v1501
    %v1504 = vrot.slane %v1281, 6
    %v1506 = vmul.f32 %v1482, %v1504
    %v1507 = vmul.f32 %v1463, %v1483
    %v1508 = vadd.f32 %v1506, %v1507
    %v1509 = vtanh.pop %v1508
    %v1510 = vmul.f32 %v1502, %v1509
    %1511 = vst [vmem:[#allocation2 + $0x8] sm:$0xc] %v1510
    %v1512 = vld [vmem:[%s4] sm:$0xff]
    %v1513 = vld [vmem:[%s4 + $0x8] sm:$0xff]
    %v1514 = vld [vmem:[%s4 + $0x10] sm:$0xff]
    %v1515 = vld [vmem:[%s4 + $0x18] sm:$0xff]
    %v1516 = vld [vmem:[%s4 + $0x20] sm:$0xff]
    %v1517 = vld [vmem:[%s4 + $0x28] sm:$0xff]
    %v1518 = vld [vmem:[%s4 + $0x30] sm:$0xff]
    %v1519 = vld [vmem:[%s4 + $0x38] sm:$0xff]
    %v1520 = vld [vmem:[%s4 + $0x40] sm:$0xff]
    %v1521 = vld [vmem:[%s4 + $0x48] sm:$0xff]
    %v1522 = vld [vmem:[%s4 + $0x50] sm:$0xff]
    %v1523 = vld [vmem:[%s4 + $0x58] sm:$0xff]
    %v1524 = vld [vmem:[%s4 + $0x60] sm:$0xff]
    %v1525 = vld [vmem:[%s4 + $0x68] sm:$0xff]
    %v1526 = vld [vmem:[%s4 + $0x70] sm:$0xff]
    %v1527 = vld [vmem:[%s4 + $0x78] sm:$0xff]
    %v1528 = vld [vmem:[%s4 + $0x80] sm:$0xff]
    %v1529 = vld [vmem:[%s4 + $0x88] sm:$0xff]
    %v1530 = vld [vmem:[%s4 + $0x90] sm:$0xff]
    %v1531 = vld [vmem:[%s4 + $0x98] sm:$0xff]
    %v1532 = vld [vmem:[%s4 + $0xa0] sm:$0xff]
    %v1533 = vld [vmem:[%s4 + $0xa8] sm:$0xff]
    %v1534 = vld [vmem:[%s4 + $0xb0] sm:$0xff]
    %v1535 = vld [vmem:[%s4 + $0xb8] sm:$0xff]
    %v1536 = vld [vmem:[%s4 + $0xc0] sm:$0xff]
    %v1537 = vld [vmem:[%s4 + $0xc8] sm:$0xff]
    %v1538 = vld [vmem:[%s4 + $0xd0] sm:$0xff]
    %v1539 = vld [vmem:[%s4 + $0xd8] sm:$0xff]
    %v1540 = vld [vmem:[%s4 + $0xe0] sm:$0xff]
    %v1541 = vld [vmem:[%s4 + $0xe8] sm:$0xff]
    %v1542 = vld [vmem:[%s4 + $0xf0] sm:$0xff]
    %v1543 = vld [vmem:[%s4 + $0xf8] sm:$0xff]
    %v1544 = vld [vmem:[%s4 + $0x100] sm:$0xff]
    %v1545 = vld [vmem:[%s4 + $0x108] sm:$0xff]
    %v1546 = vld [vmem:[%s4 + $0x110] sm:$0xff]
    %v1547 = vld [vmem:[%s4 + $0x118] sm:$0xff]
    %v1548 = vld [vmem:[%s4 + $0x120] sm:$0xff]
    %v1549 = vld [vmem:[%s4 + $0x128] sm:$0xff]
    %v1550 = vld [vmem:[%s4 + $0x130] sm:$0xff]
    %v1551 = vld [vmem:[%s4 + $0x138] sm:$0xff]
    %v1552 = vld [vmem:[%s4 + $0x140] sm:$0xff]
    %v1553 = vld [vmem:[%s4 + $0x148] sm:$0xff]
    %v1554 = vld [vmem:[%s4 + $0x150] sm:$0xff]
    %v1555 = vld [vmem:[%s4 + $0x158] sm:$0xff]
    %v1556 = vld [vmem:[%s4 + $0x160] sm:$0xff]
    %v1557 = vld [vmem:[%s4 + $0x168] sm:$0xff]
    %v1558 = vld [vmem:[%s4 + $0x170] sm:$0xff]
    %v1559 = vld [vmem:[%s4 + $0x178] sm:$0xff]
    %v1560 = vld [vmem:[%s4 + $0x180] sm:$0xff]
    %v1561 = vld [vmem:[%s4 + $0x188] sm:$0xff]
    %v1562 = vld [vmem:[%s4 + $0x190] sm:$0xff]
    %v1563 = vld [vmem:[%s4 + $0x198] sm:$0xff]
    %v1564 = vld [vmem:[%s4 + $0x1a0] sm:$0xff]
    %v1565 = vld [vmem:[%s4 + $0x1a8] sm:$0xff]
    %v1566 = vld [vmem:[%s4 + $0x1b0] sm:$0xff]
    %v1567 = vld [vmem:[%s4 + $0x1b8] sm:$0xff]
    %v1568 = vld [vmem:[%s4 + $0x1c0] sm:$0xff]
    %v1569 = vld [vmem:[%s4 + $0x1c8] sm:$0xff]
    %v1570 = vld [vmem:[%s4 + $0x1d0] sm:$0xff]
    %v1571 = vld [vmem:[%s4 + $0x1d8] sm:$0xff]
    %v1572 = vld [vmem:[%s4 + $0x1e0] sm:$0xff]
    %v1573 = vld [vmem:[%s4 + $0x1e8] sm:$0xff]
    %v1574 = vld [vmem:[%s4 + $0x1f0] sm:$0xff]
    %v1575 = vld [vmem:[%s4 + $0x1f8] sm:$0xff]
    %v1577 = vrot.slane %v1510, 2
    %1579 = vmatpush.msra.mxu0 %v1572
    %1580 = vmatpush.msra.mxu0 %v1568
    %1581 = vmatpush.msra.mxu0 %v1564
    %1582 = vmatpush.msra.mxu0 %v1560
    %1583 = vmatpush.msra.mxu0 %v1556
    %1584 = vmatpush.msra.mxu0 %v1552
    %1585 = vmatpush.msra.mxu0 %v1548
    %1586 = vmatpush.msra.mxu0 %v1544
    %1587 = vmatpush.msra.mxu0 %v1540
    %1588 = vmatpush.msra.mxu0 %v1536
    %1589 = vmatpush.msra.mxu0 %v1532
    %1590 = vmatpush.msra.mxu0 %v1528
    %1591 = vmatpush.msra.mxu0 %v1524
    %1592 = vmatpush.msra.mxu0 %v1520
    %1593 = vmatpush.msra.mxu0 %v1516
    %1594 = vmatpush.msra.mxu0 %v1512
    %1595 = vmatmul.f32.gmra.mxu0 %v1577
    %v1596 = vpop.f32.mrf.mxu0
    %v1597 = vadd.f32 0.0, %v1596
    %1598 = vdwg.mxu0
    %1599 = vmatpush.msra.mxu0 %v1573
    %1600 = vmatpush.msra.mxu0 %v1569
    %1601 = vmatpush.msra.mxu0 %v1565
    %1602 = vmatpush.msra.mxu0 %v1561
    %1603 = vmatpush.msra.mxu0 %v1557
    %1604 = vmatpush.msra.mxu0 %v1553
    %1605 = vmatpush.msra.mxu0 %v1549
    %1606 = vmatpush.msra.mxu0 %v1545
    %1607 = vmatpush.msra.mxu0 %v1541
    %1608 = vmatpush.msra.mxu0 %v1537
    %1609 = vmatpush.msra.mxu0 %v1533
    %1610 = vmatpush.msra.mxu0 %v1529
    %1611 = vmatpush.msra.mxu0 %v1525
    %1612 = vmatpush.msra.mxu0 %v1521
    %1613 = vmatpush.msra.mxu0 %v1517
    %1614 = vmatpush.msra.mxu0 %v1513
    %1615 = vmatmul.f32.gmra.mxu0 %v1577
    %v1616 = vpop.f32.mrf.mxu0
    %v1617 = vadd.f32 0.0, %v1616
    %1618 = vdwg.mxu0
    %1619 = vmatpush.msra.mxu0 %v1574
    %1620 = vmatpush.msra.mxu0 %v1570
    %1621 = vmatpush.msra.mxu0 %v1566
    %1622 = vmatpush.msra.mxu0 %v1562
    %1623 = vmatpush.msra.mxu0 %v1558
    %1624 = vmatpush.msra.mxu0 %v1554
    %1625 = vmatpush.msra.mxu0 %v1550
    %1626 = vmatpush.msra.mxu0 %v1546
    %1627 = vmatpush.msra.mxu0 %v1542
    %1628 = vmatpush.msra.mxu0 %v1538
    %1629 = vmatpush.msra.mxu0 %v1534
    %1630 = vmatpush.msra.mxu0 %v1530
    %1631 = vmatpush.msra.mxu0 %v1526
    %1632 = vmatpush.msra.mxu0 %v1522
    %1633 = vmatpush.msra.mxu0 %v1518
    %1634 = vmatpush.msra.mxu0 %v1514
    %1635 = vmatmul.f32.gmra.mxu0 %v1577
    %v1636 = vpop.f32.mrf.mxu0
    %v1637 = vadd.f32 0.0, %v1636
    %1638 = vdwg.mxu0
    %1639 = vmatpush.msra.mxu0 %v1575
    %1640 = vmatpush.msra.mxu0 %v1571
    %1641 = vmatpush.msra.mxu0 %v1567
    %1642 = vmatpush.msra.mxu0 %v1563
    %1643 = vmatpush.msra.mxu0 %v1559
    %1644 = vmatpush.msra.mxu0 %v1555
    %1645 = vmatpush.msra.mxu0 %v1551
    %1646 = vmatpush.msra.mxu0 %v1547
    %1647 = vmatpush.msra.mxu0 %v1543
    %1648 = vmatpush.msra.mxu0 %v1539
    %1649 = vmatpush.msra.mxu0 %v1535
    %1650 = vmatpush.msra.mxu0 %v1531
    %1651 = vmatpush.msra.mxu0 %v1527
    %1652 = vmatpush.msra.mxu0 %v1523
    %1653 = vmatpush.msra.mxu0 %v1519
    %1654 = vmatpush.msra.mxu0 %v1515
    %1655 = vmatmul.f32.gmra.mxu0 %v1577
    %v1656 = vpop.f32.mrf.mxu0
    %v1657 = vadd.f32 0.0, %v1656
    %1658 = vdwg.mxu0
    %v1663 = vrot.slane %v1597, 4
    %v1664 = vrot.slane %v1617, 4
    %v1665 = vrot.slane %v1637, 4
    %v1666 = vrot.slane %v1657, 4
    %v1671 = vadd.f32 %v95, %v1663
    %v1672 = vadd.f32 %v118, %v1664
    %v1673 = vadd.f32 %v141, %v1665
    %v1674 = vadd.f32 %v164, %v1666
    %v1675 = vxor.u32 %v1671, 2147483648
    %v1676 = vmul.f32 %v1675, 1.442695
    %v1677 = vpow.pop %v1676
    %v1678 = vadd.f32 %v1677, 1.0
    %v1679 = vrcp.pop %v1678
    %v1680 = vmul.f32 %v1678, %v1679
    %v1681 = vsub.f32 1.0, %v1680
    %v1682 = vmul.f32 %v1679, %v1681
    %v1683 = vadd.f32 %v1679, %v1682
    %vm1684 = vweird.f32 %v1678
    %vm1685 = vweird.f32 %v1679
    %vm1686 = vmor %vm1684, %vm1685
    %v1687 = vsel %vm1686, %v1679, %v1683
    %v1688 = vand.u32 2147483647, %v1678
    %vm1689 = vcmp.eq.f32.partialorder %v1688, 8.507059e+37
    %v1690 = vand.u32 %v1678, 2147483648
    %v1691 = vor.u32 1.1754944e-38, %v1690
    %v1692 = vsel %vm1689, %v1691, %v1687
    %v1693 = vmul.f32 1.0, %v1692
    %v1694 = vxor.u32 %v1672, 2147483648
    %v1695 = vmul.f32 %v1694, 1.442695
    %v1696 = vpow.pop %v1695
    %v1697 = vadd.f32 %v1696, 1.0
    %v1698 = vrcp.pop %v1697
    %v1699 = vmul.f32 %v1697, %v1698
    %v1700 = vsub.f32 1.0, %v1699
    %v1701 = vmul.f32 %v1698, %v1700
    %v1702 = vadd.f32 %v1698, %v1701
    %vm1703 = vweird.f32 %v1697
    %vm1704 = vweird.f32 %v1698
    %vm1705 = vmor %vm1703, %vm1704
    %v1706 = vsel %vm1705, %v1698, %v1702
    %v1707 = vand.u32 2147483647, %v1697
    %vm1708 = vcmp.eq.f32.partialorder %v1707, 8.507059e+37
    %v1709 = vand.u32 %v1697, 2147483648
    %v1710 = vor.u32 1.1754944e-38, %v1709
    %v1711 = vsel %vm1708, %v1710, %v1706
    %v1712 = vmul.f32 1.0, %v1711
    %v1713 = vtanh.pop %v1673
    %v1714 = vxor.u32 %v1674, 2147483648
    %v1715 = vmul.f32 %v1714, 1.442695
    %v1716 = vpow.pop %v1715
    %v1717 = vadd.f32 %v1716, 1.0
    %v1718 = vrcp.pop %v1717
    %v1719 = vmul.f32 %v1717, %v1718
    %v1720 = vsub.f32 1.0, %v1719
    %v1721 = vmul.f32 %v1718, %v1720
    %v1722 = vadd.f32 %v1718, %v1721
    %vm1723 = vweird.f32 %v1717
    %vm1724 = vweird.f32 %v1718
    %vm1725 = vmor %vm1723, %vm1724
    %v1726 = vsel %vm1725, %v1718, %v1722
    %v1727 = vand.u32 2147483647, %v1717
    %vm1728 = vcmp.eq.f32.partialorder %v1727, 8.507059e+37
    %v1729 = vand.u32 %v1717, 2147483648
    %v1730 = vor.u32 1.1754944e-38, %v1729
    %v1731 = vsel %vm1728, %v1730, %v1726
    %v1732 = vmul.f32 1.0, %v1731
    %v1734 = vrot.slane %v1508, 6
    %v1736 = vmul.f32 %v1712, %v1734
    %v1737 = vmul.f32 %v1693, %v1713
    %v1738 = vadd.f32 %v1736, %v1737
    %v1739 = vtanh.pop %v1738
    %v1740 = vmul.f32 %v1732, %v1739
    %1741 = vst [vmem:[#allocation2 + $0x8] sm:$0x30] %v1740
    %v1742 = vld [vmem:[%s4] sm:$0xff]
    %v1743 = vld [vmem:[%s4 + $0x8] sm:$0xff]
    %v1744 = vld [vmem:[%s4 + $0x10] sm:$0xff]
    %v1745 = vld [vmem:[%s4 + $0x18] sm:$0xff]
    %v1746 = vld [vmem:[%s4 + $0x20] sm:$0xff]
    %v1747 = vld [vmem:[%s4 + $0x28] sm:$0xff]
    %v1748 = vld [vmem:[%s4 + $0x30] sm:$0xff]
    %v1749 = vld [vmem:[%s4 + $0x38] sm:$0xff]
    %v1750 = vld [vmem:[%s4 + $0x40] sm:$0xff]
    %v1751 = vld [vmem:[%s4 + $0x48] sm:$0xff]
    %v1752 = vld [vmem:[%s4 + $0x50] sm:$0xff]
    %v1753 = vld [vmem:[%s4 + $0x58] sm:$0xff]
    %v1754 = vld [vmem:[%s4 + $0x60] sm:$0xff]
    %v1755 = vld [vmem:[%s4 + $0x68] sm:$0xff]
    %v1756 = vld [vmem:[%s4 + $0x70] sm:$0xff]
    %v1757 = vld [vmem:[%s4 + $0x78] sm:$0xff]
    %v1758 = vld [vmem:[%s4 + $0x80] sm:$0xff]
    %v1759 = vld [vmem:[%s4 + $0x88] sm:$0xff]
    %v1760 = vld [vmem:[%s4 + $0x90] sm:$0xff]
    %v1761 = vld [vmem:[%s4 + $0x98] sm:$0xff]
    %v1762 = vld [vmem:[%s4 + $0xa0] sm:$0xff]
    %v1763 = vld [vmem:[%s4 + $0xa8] sm:$0xff]
    %v1764 = vld [vmem:[%s4 + $0xb0] sm:$0xff]
    %v1765 = vld [vmem:[%s4 + $0xb8] sm:$0xff]
    %v1766 = vld [vmem:[%s4 + $0xc0] sm:$0xff]
    %v1767 = vld [vmem:[%s4 + $0xc8] sm:$0xff]
    %v1768 = vld [vmem:[%s4 + $0xd0] sm:$0xff]
    %v1769 = vld [vmem:[%s4 + $0xd8] sm:$0xff]
    %v1770 = vld [vmem:[%s4 + $0xe0] sm:$0xff]
    %v1771 = vld [vmem:[%s4 + $0xe8] sm:$0xff]
    %v1772 = vld [vmem:[%s4 + $0xf0] sm:$0xff]
    %v1773 = vld [vmem:[%s4 + $0xf8] sm:$0xff]
    %v1774 = vld [vmem:[%s4 + $0x100] sm:$0xff]
    %v1775 = vld [vmem:[%s4 + $0x108] sm:$0xff]
    %v1776 = vld [vmem:[%s4 + $0x110] sm:$0xff]
    %v1777 = vld [vmem:[%s4 + $0x118] sm:$0xff]
    %v1778 = vld [vmem:[%s4 + $0x120] sm:$0xff]
    %v1779 = vld [vmem:[%s4 + $0x128] sm:$0xff]
    %v1780 = vld [vmem:[%s4 + $0x130] sm:$0xff]
    %v1781 = vld [vmem:[%s4 + $0x138] sm:$0xff]
    %v1782 = vld [vmem:[%s4 + $0x140] sm:$0xff]
    %v1783 = vld [vmem:[%s4 + $0x148] sm:$0xff]
    %v1784 = vld [vmem:[%s4 + $0x150] sm:$0xff]
    %v1785 = vld [vmem:[%s4 + $0x158] sm:$0xff]
    %v1786 = vld [vmem:[%s4 + $0x160] sm:$0xff]
    %v1787 = vld [vmem:[%s4 + $0x168] sm:$0xff]
    %v1788 = vld [vmem:[%s4 + $0x170] sm:$0xff]
    %v1789 = vld [vmem:[%s4 + $0x178] sm:$0xff]
    %v1790 = vld [vmem:[%s4 + $0x180] sm:$0xff]
    %v1791 = vld [vmem:[%s4 + $0x188] sm:$0xff]
    %v1792 = vld [vmem:[%s4 + $0x190] sm:$0xff]
    %v1793 = vld [vmem:[%s4 + $0x198] sm:$0xff]
    %v1794 = vld [vmem:[%s4 + $0x1a0] sm:$0xff]
    %v1795 = vld [vmem:[%s4 + $0x1a8] sm:$0xff]
    %v1796 = vld [vmem:[%s4 + $0x1b0] sm:$0xff]
    %v1797 = vld [vmem:[%s4 + $0x1b8] sm:$0xff]
    %v1798 = vld [vmem:[%s4 + $0x1c0] sm:$0xff]
    %v1799 = vld [vmem:[%s4 + $0x1c8] sm:$0xff]
    %v1800 = vld [vmem:[%s4 + $0x1d0] sm:$0xff]
    %v1801 = vld [vmem:[%s4 + $0x1d8] sm:$0xff]
    %v1802 = vld [vmem:[%s4 + $0x1e0] sm:$0xff]
    %v1803 = vld [vmem:[%s4 + $0x1e8] sm:$0xff]
    %v1804 = vld [vmem:[%s4 + $0x1f0] sm:$0xff]
    %v1805 = vld [vmem:[%s4 + $0x1f8] sm:$0xff]
    %v1807 = vrot.slane %v1740, 4
    %1809 = vmatpush.msra.mxu0 %v1802
    %1810 = vmatpush.msra.mxu0 %v1798
    %1811 = vmatpush.msra.mxu0 %v1794
    %1812 = vmatpush.msra.mxu0 %v1790
    %1813 = vmatpush.msra.mxu0 %v1786
    %1814 = vmatpush.msra.mxu0 %v1782
    %1815 = vmatpush.msra.mxu0 %v1778
    %1816 = vmatpush.msra.mxu0 %v1774
    %1817 = vmatpush.msra.mxu0 %v1770
    %1818 = vmatpush.msra.mxu0 %v1766
    %1819 = vmatpush.msra.mxu0 %v1762
    %1820 = vmatpush.msra.mxu0 %v1758
    %1821 = vmatpush.msra.mxu0 %v1754
    %1822 = vmatpush.msra.mxu0 %v1750
    %1823 = vmatpush.msra.mxu0 %v1746
    %1824 = vmatpush.msra.mxu0 %v1742
    %1825 = vmatmul.f32.gmra.mxu0 %v1807
    %v1826 = vpop.f32.mrf.mxu0
    %v1827 = vadd.f32 0.0, %v1826
    %1828 = vdwg.mxu0
    %1829 = vmatpush.msra.mxu0 %v1803
    %1830 = vmatpush.msra.mxu0 %v1799
    %1831 = vmatpush.msra.mxu0 %v1795
    %1832 = vmatpush.msra.mxu0 %v1791
    %1833 = vmatpush.msra.mxu0 %v1787
    %1834 = vmatpush.msra.mxu0 %v1783
    %1835 = vmatpush.msra.mxu0 %v1779
    %1836 = vmatpush.msra.mxu0 %v1775
    %1837 = vmatpush.msra.mxu0 %v1771
    %1838 = vmatpush.msra.mxu0 %v1767
    %1839 = vmatpush.msra.mxu0 %v1763
    %1840 = vmatpush.msra.mxu0 %v1759
    %1841 = vmatpush.msra.mxu0 %v1755
    %1842 = vmatpush.msra.mxu0 %v1751
    %1843 = vmatpush.msra.mxu0 %v1747
    %1844 = vmatpush.msra.mxu0 %v1743
    %1845 = vmatmul.f32.gmra.mxu0 %v1807
    %v1846 = vpop.f32.mrf.mxu0
    %v1847 = vadd.f32 0.0, %v1846
    %1848 = vdwg.mxu0
    %1849 = vmatpush.msra.mxu0 %v1804
    %1850 = vmatpush.msra.mxu0 %v1800
    %1851 = vmatpush.msra.mxu0 %v1796
    %1852 = vmatpush.msra.mxu0 %v1792
    %1853 = vmatpush.msra.mxu0 %v1788
    %1854 = vmatpush.msra.mxu0 %v1784
    %1855 = vmatpush.msra.mxu0 %v1780
    %1856 = vmatpush.msra.mxu0 %v1776
    %1857 = vmatpush.msra.mxu0 %v1772
    %1858 = vmatpush.msra.mxu0 %v1768
    %1859 = vmatpush.msra.mxu0 %v1764
    %1860 = vmatpush.msra.mxu0 %v1760
    %1861 = vmatpush.msra.mxu0 %v1756
    %1862 = vmatpush.msra.mxu0 %v1752
    %1863 = vmatpush.msra.mxu0 %v1748
    %1864 = vmatpush.msra.mxu0 %v1744
    %1865 = vmatmul.f32.gmra.mxu0 %v1807
    %v1866 = vpop.f32.mrf.mxu0
    %v1867 = vadd.f32 0.0, %v1866
    %1868 = vdwg.mxu0
    %1869 = vmatpush.msra.mxu0 %v1805
    %1870 = vmatpush.msra.mxu0 %v1801
    %1871 = vmatpush.msra.mxu0 %v1797
    %1872 = vmatpush.msra.mxu0 %v1793
    %1873 = vmatpush.msra.mxu0 %v1789
    %1874 = vmatpush.msra.mxu0 %v1785
    %1875 = vmatpush.msra.mxu0 %v1781
    %1876 = vmatpush.msra.mxu0 %v1777
    %1877 = vmatpush.msra.mxu0 %v1773
    %1878 = vmatpush.msra.mxu0 %v1769
    %1879 = vmatpush.msra.mxu0 %v1765
    %1880 = vmatpush.msra.mxu0 %v1761
    %1881 = vmatpush.msra.mxu0 %v1757
    %1882 = vmatpush.msra.mxu0 %v1753
    %1883 = vmatpush.msra.mxu0 %v1749
    %1884 = vmatpush.msra.mxu0 %v1745
    %1885 = vmatmul.f32.gmra.mxu0 %v1807
    %v1886 = vpop.f32.mrf.mxu0
    %v1887 = vadd.f32 0.0, %v1886
    %1888 = vdwg.mxu0
    %v1893 = vrot.slane %v1827, 2
    %v1894 = vrot.slane %v1847, 2
    %v1895 = vrot.slane %v1867, 2
    %v1896 = vrot.slane %v1887, 2
    %v1901 = vadd.f32 %v95, %v1893
    %v1902 = vadd.f32 %v118, %v1894
    %v1903 = vadd.f32 %v141, %v1895
    %v1904 = vadd.f32 %v164, %v1896
    %v1905 = vxor.u32 %v1901, 2147483648
    %v1906 = vmul.f32 %v1905, 1.442695
    %v1907 = vpow.pop %v1906
    %v1908 = vadd.f32 %v1907, 1.0
    %v1909 = vrcp.pop %v1908
    %v1910 = vmul.f32 %v1908, %v1909
    %v1911 = vsub.f32 1.0, %v1910
    %v1912 = vmul.f32 %v1909, %v1911
    %v1913 = vadd.f32 %v1909, %v1912
    %vm1914 = vweird.f32 %v1908
    %vm1915 = vweird.f32 %v1909
    %vm1916 = vmor %vm1914, %vm1915
    %v1917 = vsel %vm1916, %v1909, %v1913
    %v1918 = vand.u32 2147483647, %v1908
    %vm1919 = vcmp.eq.f32.partialorder %v1918, 8.507059e+37
    %v1920 = vand.u32 %v1908, 2147483648
    %v1921 = vor.u32 1.1754944e-38, %v1920
    %v1922 = vsel %vm1919, %v1921, %v1917
    %v1923 = vmul.f32 1.0, %v1922
    %v1924 = vxor.u32 %v1902, 2147483648
    %v1925 = vmul.f32 %v1924, 1.442695
    %v1926 = vpow.pop %v1925
    %v1927 = vadd.f32 %v1926, 1.0
    %v1928 = vrcp.pop %v1927
    %v1929 = vmul.f32 %v1927, %v1928
    %v1930 = vsub.f32 1.0, %v1929
    %v1931 = vmul.f32 %v1928, %v1930
    %v1932 = vadd.f32 %v1928, %v1931
    %vm1933 = vweird.f32 %v1927
    %vm1934 = vweird.f32 %v1928
    %vm1935 = vmor %vm1933, %vm1934
    %v1936 = vsel %vm1935, %v1928, %v1932
    %v1937 = vand.u32 2147483647, %v1927
    %vm1938 = vcmp.eq.f32.partialorder %v1937, 8.507059e+37
    %v1939 = vand.u32 %v1927, 2147483648
    %v1940 = vor.u32 1.1754944e-38, %v1939
    %v1941 = vsel %vm1938, %v1940, %v1936
    %v1942 = vmul.f32 1.0, %v1941
    %v1943 = vtanh.pop %v1903
    %v1944 = vxor.u32 %v1904, 2147483648
    %v1945 = vmul.f32 %v1944, 1.442695
    %v1946 = vpow.pop %v1945
    %v1947 = vadd.f32 %v1946, 1.0
    %v1948 = vrcp.pop %v1947
    %v1949 = vmul.f32 %v1947, %v1948
    %v1950 = vsub.f32 1.0, %v1949
    %v1951 = vmul.f32 %v1948, %v1950
    %v1952 = vadd.f32 %v1948, %v1951
    %vm1953 = vweird.f32 %v1947
    %vm1954 = vweird.f32 %v1948
    %vm1955 = vmor %vm1953, %vm1954
    %v1956 = vsel %vm1955, %v1948, %v1952
    %v1957 = vand.u32 2147483647, %v1947
    %vm1958 = vcmp.eq.f32.partialorder %v1957, 8.507059e+37
    %v1959 = vand.u32 %v1947, 2147483648
    %v1960 = vor.u32 1.1754944e-38, %v1959
    %v1961 = vsel %vm1958, %v1960, %v1956
    %v1962 = vmul.f32 1.0, %v1961
    %v1964 = vrot.slane %v1738, 6
    %v1966 = vmul.f32 %v1942, %v1964
    %v1967 = vmul.f32 %v1923, %v1943
    %v1968 = vadd.f32 %v1966, %v1967
    %v1969 = vtanh.pop %v1968
    %v1970 = vmul.f32 %v1962, %v1969
    %1971 = vst [vmem:[#allocation2 + $0x8] sm:$0xc0] %v1970
    %v1972 = vld [vmem:[#allocation2] sm:$0xff]
    %v1973 = vld [vmem:[#allocation2 + $0x8] sm:$0xff]
    %v1974 = vld [vmem:[%s6] sm:$0xff]
    %v1975 = vld [vmem:[%s6 + $0x8] sm:$0xff]
    %v1976 = vld [vmem:[%s6 + $0x10] sm:$0xff]
    %v1977 = vld [vmem:[%s6 + $0x18] sm:$0xff]
    %v1978 = vld [vmem:[%s6 + $0x20] sm:$0xff]
    %v1979 = vld [vmem:[%s6 + $0x28] sm:$0xff]
    %v1980 = vld [vmem:[%s6 + $0x30] sm:$0xff]
    %v1981 = vld [vmem:[%s6 + $0x38] sm:$0xff]
    %v1982 = vld [vmem:[%s6 + $0x40] sm:$0xff]
    %v1983 = vld [vmem:[%s6 + $0x48] sm:$0xff]
    %v1984 = vld [vmem:[%s6 + $0x50] sm:$0xff]
    %v1985 = vld [vmem:[%s6 + $0x58] sm:$0xff]
    %v1986 = vld [vmem:[%s6 + $0x60] sm:$0xff]
    %v1987 = vld [vmem:[%s6 + $0x68] sm:$0xff]
    %v1988 = vld [vmem:[%s6 + $0x70] sm:$0xff]
    %v1989 = vld [vmem:[%s6 + $0x78] sm:$0xff]
    %v1990 = vld [vmem:[%s6 + $0x80] sm:$0xff]
    %v1991 = vld [vmem:[%s6 + $0x88] sm:$0xff]
    %v1992 = vld [vmem:[%s6 + $0x90] sm:$0xff]
    %v1993 = vld [vmem:[%s6 + $0x98] sm:$0xff]
    %v1994 = vld [vmem:[%s6 + $0xa0] sm:$0xff]
    %v1995 = vld [vmem:[%s6 + $0xa8] sm:$0xff]
    %v1996 = vld [vmem:[%s6 + $0xb0] sm:$0xff]
    %v1997 = vld [vmem:[%s6 + $0xb8] sm:$0xff]
    %v1998 = vld [vmem:[%s6 + $0xc0] sm:$0xff]
    %v1999 = vld [vmem:[%s6 + $0xc8] sm:$0xff]
    %v2000 = vld [vmem:[%s6 + $0xd0] sm:$0xff]
    %v2001 = vld [vmem:[%s6 + $0xd8] sm:$0xff]
    %v2002 = vld [vmem:[%s6 + $0xe0] sm:$0xff]
    %v2003 = vld [vmem:[%s6 + $0xe8] sm:$0xff]
    %v2004 = vld [vmem:[%s6 + $0xf0] sm:$0xff]
    %v2005 = vld [vmem:[%s6 + $0xf8] sm:$0xff]
    %v2006 = vld [vmem:[%s6 + $0x100] sm:$0xff]
    %v2007 = vld [vmem:[%s6 + $0x108] sm:$0xff]
    %v2008 = vld [vmem:[%s6 + $0x110] sm:$0xff]
    %v2009 = vld [vmem:[%s6 + $0x118] sm:$0xff]
    %v2010 = vld [vmem:[%s6 + $0x120] sm:$0xff]
    %v2011 = vld [vmem:[%s6 + $0x128] sm:$0xff]
    %v2012 = vld [vmem:[%s6 + $0x130] sm:$0xff]
    %v2013 = vld [vmem:[%s6 + $0x138] sm:$0xff]
    %v2014 = vld [vmem:[%s6 + $0x140] sm:$0xff]
    %v2015 = vld [vmem:[%s6 + $0x148] sm:$0xff]
    %v2016 = vld [vmem:[%s6 + $0x150] sm:$0xff]
    %v2017 = vld [vmem:[%s6 + $0x158] sm:$0xff]
    %v2018 = vld [vmem:[%s6 + $0x160] sm:$0xff]
    %v2019 = vld [vmem:[%s6 + $0x168] sm:$0xff]
    %v2020 = vld [vmem:[%s6 + $0x170] sm:$0xff]
    %v2021 = vld [vmem:[%s6 + $0x178] sm:$0xff]
    %v2022 = vld [vmem:[%s6 + $0x180] sm:$0xff]
    %v2023 = vld [vmem:[%s6 + $0x188] sm:$0xff]
    %v2024 = vld [vmem:[%s6 + $0x190] sm:$0xff]
    %v2025 = vld [vmem:[%s6 + $0x198] sm:$0xff]
    %v2026 = vld [vmem:[%s6 + $0x1a0] sm:$0xff]
    %v2027 = vld [vmem:[%s6 + $0x1a8] sm:$0xff]
    %v2028 = vld [vmem:[%s6 + $0x1b0] sm:$0xff]
    %v2029 = vld [vmem:[%s6 + $0x1b8] sm:$0xff]
    %v2030 = vld [vmem:[%s6 + $0x1c0] sm:$0xff]
    %v2031 = vld [vmem:[%s6 + $0x1c8] sm:$0xff]
    %v2032 = vld [vmem:[%s6 + $0x1d0] sm:$0xff]
    %v2033 = vld [vmem:[%s6 + $0x1d8] sm:$0xff]
    %v2034 = vld [vmem:[%s6 + $0x1e0] sm:$0xff]
    %v2035 = vld [vmem:[%s6 + $0x1e8] sm:$0xff]
    %v2036 = vld [vmem:[%s6 + $0x1f0] sm:$0xff]
    %v2037 = vld [vmem:[%s6 + $0x1f8] sm:$0xff]
    %v2038 = vld [vmem:[%s8] sm:$0xf]
    %v2040 = vperm.slane %v2038, 0
    %v2041 = vperm.slane %v2038, 1
    %v2042 = vperm.slane %v2038, 2
    %v2043 = vperm.slane %v2038, 3
    %2048 = vmatpush.msra.mxu0 %v2034
    %2049 = vmatpush.msra.mxu0 %v2030
    %2050 = vmatpush.msra.mxu0 %v2026
    %2051 = vmatpush.msra.mxu0 %v2022
    %2052 = vmatpush.msra.mxu0 %v2018
    %2053 = vmatpush.msra.mxu0 %v2014
    %2054 = vmatpush.msra.mxu0 %v2010
    %2055 = vmatpush.msra.mxu0 %v2006
    %2056 = vmatpush.msra.mxu0 %v2002
    %2057 = vmatpush.msra.mxu0 %v1998
    %2058 = vmatpush.msra.mxu0 %v1994
    %2059 = vmatpush.msra.mxu0 %v1990
    %2060 = vmatpush.msra.mxu0 %v1986
    %2061 = vmatpush.msra.mxu0 %v1982
    %2062 = vmatpush.msra.mxu0 %v1978
    %2063 = vmatpush.msra.mxu0 %v1974
    %2064 = vmatmul.f32.gmra.mxu0 %v1972
    %v2065 = vpop.f32.mrf.mxu0
    %v2066 = vadd.f32 %v2040, %v2065
    %2067 = vmatmul.f32.gmra.mxu0 %v1973
    %v2068 = vpop.f32.mrf.mxu0
    %v2069 = vadd.f32 %v2040, %v2068
    %2070 = vdwg.mxu0
    %2071 = vmatpush.msra.mxu0 %v2035
    %2072 = vmatpush.msra.mxu0 %v2031
    %2073 = vmatpush.msra.mxu0 %v2027
    %2074 = vmatpush.msra.mxu0 %v2023
    %2075 = vmatpush.msra.mxu0 %v2019
    %2076 = vmatpush.msra.mxu0 %v2015
    %2077 = vmatpush.msra.mxu0 %v2011
    %2078 = vmatpush.msra.mxu0 %v2007
    %2079 = vmatpush.msra.mxu0 %v2003
    %2080 = vmatpush.msra.mxu0 %v1999
    %2081 = vmatpush.msra.mxu0 %v1995
    %2082 = vmatpush.msra.mxu0 %v1991
    %2083 = vmatpush.msra.mxu0 %v1987
    %2084 = vmatpush.msra.mxu0 %v1983
    %2085 = vmatpush.msra.mxu0 %v1979
    %2086 = vmatpush.msra.mxu0 %v1975
    %2087 = vmatmul.f32.gmra.mxu0 %v1972
    %v2088 = vpop.f32.mrf.mxu0
    %v2089 = vadd.f32 %v2041, %v2088
    %2090 = vmatmul.f32.gmra.mxu0 %v1973
    %v2091 = vpop.f32.mrf.mxu0
    %v2092 = vadd.f32 %v2041, %v2091
    %2093 = vdwg.mxu0
    %2094 = vmatpush.msra.mxu0 %v2036
    %2095 = vmatpush.msra.mxu0 %v2032
    %2096 = vmatpush.msra.mxu0 %v2028
    %2097 = vmatpush.msra.mxu0 %v2024
    %2098 = vmatpush.msra.mxu0 %v2020
    %2099 = vmatpush.msra.mxu0 %v2016
    %2100 = vmatpush.msra.mxu0 %v2012
    %2101 = vmatpush.msra.mxu0 %v2008
    %2102 = vmatpush.msra.mxu0 %v2004
    %2103 = vmatpush.msra.mxu0 %v2000
    %2104 = vmatpush.msra.mxu0 %v1996
    %2105 = vmatpush.msra.mxu0 %v1992
    %2106 = vmatpush.msra.mxu0 %v1988
    %2107 = vmatpush.msra.mxu0 %v1984
    %2108 = vmatpush.msra.mxu0 %v1980
    %2109 = vmatpush.msra.mxu0 %v1976
    %2110 = vmatmul.f32.gmra.mxu0 %v1972
    %v2111 = vpop.f32.mrf.mxu0
    %v2112 = vadd.f32 %v2042, %v2111
    %2113 = vmatmul.f32.gmra.mxu0 %v1973
    %v2114 = vpop.f32.mrf.mxu0
    %v2115 = vadd.f32 %v2042, %v2114
    %2116 = vdwg.mxu0
    %2117 = vmatpush.msra.mxu0 %v2037
    %2118 = vmatpush.msra.mxu0 %v2033
    %2119 = vmatpush.msra.mxu0 %v2029
    %2120 = vmatpush.msra.mxu0 %v2025
    %2121 = vmatpush.msra.mxu0 %v2021
    %2122 = vmatpush.msra.mxu0 %v2017
    %2123 = vmatpush.msra.mxu0 %v2013
    %2124 = vmatpush.msra.mxu0 %v2009
    %2125 = vmatpush.msra.mxu0 %v2005
    %2126 = vmatpush.msra.mxu0 %v2001
    %2127 = vmatpush.msra.mxu0 %v1997
    %2128 = vmatpush.msra.mxu0 %v1993
    %2129 = vmatpush.msra.mxu0 %v1989
    %2130 = vmatpush.msra.mxu0 %v1985
    %2131 = vmatpush.msra.mxu0 %v1981
    %2132 = vmatpush.msra.mxu0 %v1977
    %2133 = vmatmul.f32.gmra.mxu0 %v1972
    %v2134 = vpop.f32.mrf.mxu0
    %v2135 = vadd.f32 %v2043, %v2134
    %2136 = vmatmul.f32.gmra.mxu0 %v1973
    %v2137 = vpop.f32.mrf.mxu0
    %v2138 = vadd.f32 %v2043, %v2137
    %2139 = vdwg.mxu0
    %s2140 = scalar_lea.vmem %s1, 2
    %v2141 = vld [vmem:[%s2140] sm:$0x3]
    %s2142 = scalar_lea.vmem %s2, 2
    %v2143 = vld [vmem:[%s2142] sm:$0x3]
    %v2144 = vld [vmem:[%s7] sm:$0xff]
    %v2145 = vld [vmem:[%s7 + $0x8] sm:$0xff]
    %v2146 = vld [vmem:[%s7 + $0x10] sm:$0xff]
    %v2147 = vld [vmem:[%s7 + $0x18] sm:$0xff]
    %v2148 = vld [vmem:[%s7 + $0x20] sm:$0xff]
    %v2149 = vld [vmem:[%s7 + $0x28] sm:$0xff]
    %v2150 = vld [vmem:[%s7 + $0x30] sm:$0xff]
    %v2151 = vld [vmem:[%s7 + $0x38] sm:$0xff]
    %v2152 = vld [vmem:[%s7 + $0x40] sm:$0xff]
    %v2153 = vld [vmem:[%s7 + $0x48] sm:$0xff]
    %v2154 = vld [vmem:[%s7 + $0x50] sm:$0xff]
    %v2155 = vld [vmem:[%s7 + $0x58] sm:$0xff]
    %v2156 = vld [vmem:[%s7 + $0x60] sm:$0xff]
    %v2157 = vld [vmem:[%s7 + $0x68] sm:$0xff]
    %v2158 = vld [vmem:[%s7 + $0x70] sm:$0xff]
    %v2159 = vld [vmem:[%s7 + $0x78] sm:$0xff]
    %v2160 = vld [vmem:[%s7 + $0x80] sm:$0xff]
    %v2161 = vld [vmem:[%s7 + $0x88] sm:$0xff]
    %v2162 = vld [vmem:[%s7 + $0x90] sm:$0xff]
    %v2163 = vld [vmem:[%s7 + $0x98] sm:$0xff]
    %v2164 = vld [vmem:[%s7 + $0xa0] sm:$0xff]
    %v2165 = vld [vmem:[%s7 + $0xa8] sm:$0xff]
    %v2166 = vld [vmem:[%s7 + $0xb0] sm:$0xff]
    %v2167 = vld [vmem:[%s7 + $0xb8] sm:$0xff]
    %v2168 = vld [vmem:[%s7 + $0xc0] sm:$0xff]
    %v2169 = vld [vmem:[%s7 + $0xc8] sm:$0xff]
    %v2170 = vld [vmem:[%s7 + $0xd0] sm:$0xff]
    %v2171 = vld [vmem:[%s7 + $0xd8] sm:$0xff]
    %v2172 = vld [vmem:[%s7 + $0xe0] sm:$0xff]
    %v2173 = vld [vmem:[%s7 + $0xe8] sm:$0xff]
    %v2174 = vld [vmem:[%s7 + $0xf0] sm:$0xff]
    %v2175 = vld [vmem:[%s7 + $0xf8] sm:$0xff]
    %v2176 = vld [vmem:[%s7 + $0x100] sm:$0xff]
    %v2177 = vld [vmem:[%s7 + $0x108] sm:$0xff]
    %v2178 = vld [vmem:[%s7 + $0x110] sm:$0xff]
    %v2179 = vld [vmem:[%s7 + $0x118] sm:$0xff]
    %v2180 = vld [vmem:[%s7 + $0x120] sm:$0xff]
    %v2181 = vld [vmem:[%s7 + $0x128] sm:$0xff]
    %v2182 = vld [vmem:[%s7 + $0x130] sm:$0xff]
    %v2183 = vld [vmem:[%s7 + $0x138] sm:$0xff]
    %v2184 = vld [vmem:[%s7 + $0x140] sm:$0xff]
    %v2185 = vld [vmem:[%s7 + $0x148] sm:$0xff]
    %v2186 = vld [vmem:[%s7 + $0x150] sm:$0xff]
    %v2187 = vld [vmem:[%s7 + $0x158] sm:$0xff]
    %v2188 = vld [vmem:[%s7 + $0x160] sm:$0xff]
    %v2189 = vld [vmem:[%s7 + $0x168] sm:$0xff]
    %v2190 = vld [vmem:[%s7 + $0x170] sm:$0xff]
    %v2191 = vld [vmem:[%s7 + $0x178] sm:$0xff]
    %v2192 = vld [vmem:[%s7 + $0x180] sm:$0xff]
    %v2193 = vld [vmem:[%s7 + $0x188] sm:$0xff]
    %v2194 = vld [vmem:[%s7 + $0x190] sm:$0xff]
    %v2195 = vld [vmem:[%s7 + $0x198] sm:$0xff]
    %v2196 = vld [vmem:[%s7 + $0x1a0] sm:$0xff]
    %v2197 = vld [vmem:[%s7 + $0x1a8] sm:$0xff]
    %v2198 = vld [vmem:[%s7 + $0x1b0] sm:$0xff]
    %v2199 = vld [vmem:[%s7 + $0x1b8] sm:$0xff]
    %v2200 = vld [vmem:[%s7 + $0x1c0] sm:$0xff]
    %v2201 = vld [vmem:[%s7 + $0x1c8] sm:$0xff]
    %v2202 = vld [vmem:[%s7 + $0x1d0] sm:$0xff]
    %v2203 = vld [vmem:[%s7 + $0x1d8] sm:$0xff]
    %v2204 = vld [vmem:[%s7 + $0x1e0] sm:$0xff]
    %v2205 = vld [vmem:[%s7 + $0x1e8] sm:$0xff]
    %v2206 = vld [vmem:[%s7 + $0x1f0] sm:$0xff]
    %v2207 = vld [vmem:[%s7 + $0x1f8] sm:$0xff]
    %2208 = vmatpush.msra.mxu0 %v2204
    %2209 = vmatpush.msra.mxu0 %v2200
    %2210 = vmatpush.msra.mxu0 %v2196
    %2211 = vmatpush.msra.mxu0 %v2192
    %2212 = vmatpush.msra.mxu0 %v2188
    %2213 = vmatpush.msra.mxu0 %v2184
    %2214 = vmatpush.msra.mxu0 %v2180
    %2215 = vmatpush.msra.mxu0 %v2176
    %2216 = vmatpush.msra.mxu0 %v2172
    %2217 = vmatpush.msra.mxu0 %v2168
    %2218 = vmatpush.msra.mxu0 %v2164
    %2219 = vmatpush.msra.mxu0 %v2160
    %2220 = vmatpush.msra.mxu0 %v2156
    %2221 = vmatpush.msra.mxu0 %v2152
    %2222 = vmatpush.msra.mxu0 %v2148
    %2223 = vmatpush.msra.mxu0 %v2144
    %2224 = vmatmul.f32.gmra.mxu0 %v2141
    %v2225 = vpop.f32.mrf.mxu0
    %v2226 = vadd.f32 0.0, %v2225
    %2227 = vdwg.mxu0
    %2228 = vmatpush.msra.mxu0 %v2205
    %2229 = vmatpush.msra.mxu0 %v2201
    %2230 = vmatpush.msra.mxu0 %v2197
    %2231 = vmatpush.msra.mxu0 %v2193
    %2232 = vmatpush.msra.mxu0 %v2189
    %2233 = vmatpush.msra.mxu0 %v2185
    %2234 = vmatpush.msra.mxu0 %v2181
    %2235 = vmatpush.msra.mxu0 %v2177
    %2236 = vmatpush.msra.mxu0 %v2173
    %2237 = vmatpush.msra.mxu0 %v2169
    %2238 = vmatpush.msra.mxu0 %v2165
    %2239 = vmatpush.msra.mxu0 %v2161
    %2240 = vmatpush.msra.mxu0 %v2157
    %2241 = vmatpush.msra.mxu0 %v2153
    %2242 = vmatpush.msra.mxu0 %v2149
    %2243 = vmatpush.msra.mxu0 %v2145
    %2244 = vmatmul.f32.gmra.mxu0 %v2141
    %v2245 = vpop.f32.mrf.mxu0
    %v2246 = vadd.f32 0.0, %v2245
    %2247 = vdwg.mxu0
    %2248 = vmatpush.msra.mxu0 %v2206
    %2249 = vmatpush.msra.mxu0 %v2202
    %2250 = vmatpush.msra.mxu0 %v2198
    %2251 = vmatpush.msra.mxu0 %v2194
    %2252 = vmatpush.msra.mxu0 %v2190
    %2253 = vmatpush.msra.mxu0 %v2186
    %2254 = vmatpush.msra.mxu0 %v2182
    %2255 = vmatpush.msra.mxu0 %v2178
    %2256 = vmatpush.msra.mxu0 %v2174
    %2257 = vmatpush.msra.mxu0 %v2170
    %2258 = vmatpush.msra.mxu0 %v2166
    %2259 = vmatpush.msra.mxu0 %v2162
    %2260 = vmatpush.msra.mxu0 %v2158
    %2261 = vmatpush.msra.mxu0 %v2154
    %2262 = vmatpush.msra.mxu0 %v2150
    %2263 = vmatpush.msra.mxu0 %v2146
    %2264 = vmatmul.f32.gmra.mxu0 %v2141
    %v2265 = vpop.f32.mrf.mxu0
    %v2266 = vadd.f32 0.0, %v2265
    %2267 = vdwg.mxu0
    %2268 = vmatpush.msra.mxu0 %v2207
    %2269 = vmatpush.msra.mxu0 %v2203
    %2270 = vmatpush.msra.mxu0 %v2199
    %2271 = vmatpush.msra.mxu0 %v2195
    %2272 = vmatpush.msra.mxu0 %v2191
    %2273 = vmatpush.msra.mxu0 %v2187
    %2274 = vmatpush.msra.mxu0 %v2183
    %2275 = vmatpush.msra.mxu0 %v2179
    %2276 = vmatpush.msra.mxu0 %v2175
    %2277 = vmatpush.msra.mxu0 %v2171
    %2278 = vmatpush.msra.mxu0 %v2167
    %2279 = vmatpush.msra.mxu0 %v2163
    %2280 = vmatpush.msra.mxu0 %v2159
    %2281 = vmatpush.msra.mxu0 %v2155
    %2282 = vmatpush.msra.mxu0 %v2151
    %2283 = vmatpush.msra.mxu0 %v2147
    %2284 = vmatmul.f32.gmra.mxu0 %v2141
    %v2285 = vpop.f32.mrf.mxu0
    %v2286 = vadd.f32 0.0, %v2285
    %2287 = vdwg.mxu0
    %v2288 = vadd.f32 %v2066, %v2226
    %v2289 = vadd.f32 %v2089, %v2246
    %v2290 = vadd.f32 %v2112, %v2266
    %v2291 = vadd.f32 %v2135, %v2286
    %v2292 = vxor.u32 %v2288, 2147483648
    %v2293 = vmul.f32 %v2292, 1.442695
    %v2294 = vpow.pop %v2293
    %v2295 = vadd.f32 %v2294, 1.0
    %v2296 = vrcp.pop %v2295
    %v2297 = vmul.f32 %v2295, %v2296
    %v2298 = vsub.f32 1.0, %v2297
    %v2299 = vmul.f32 %v2296, %v2298
    %v2300 = vadd.f32 %v2296, %v2299
    %vm2301 = vweird.f32 %v2295
    %vm2302 = vweird.f32 %v2296
    %vm2303 = vmor %vm2301, %vm2302
    %v2304 = vsel %vm2303, %v2296, %v2300
    %v2305 = vand.u32 2147483647, %v2295
    %vm2306 = vcmp.eq.f32.partialorder %v2305, 8.507059e+37
    %v2307 = vand.u32 %v2295, 2147483648
    %v2308 = vor.u32 1.1754944e-38, %v2307
    %v2309 = vsel %vm2306, %v2308, %v2304
    %v2310 = vmul.f32 1.0, %v2309
    %v2311 = vxor.u32 %v2289, 2147483648
    %v2312 = vmul.f32 %v2311, 1.442695
    %v2313 = vpow.pop %v2312
    %v2314 = vadd.f32 %v2313, 1.0
    %v2315 = vrcp.pop %v2314
    %v2316 = vmul.f32 %v2314, %v2315
    %v2317 = vsub.f32 1.0, %v2316
    %v2318 = vmul.f32 %v2315, %v2317
    %v2319 = vadd.f32 %v2315, %v2318
    %vm2320 = vweird.f32 %v2314
    %vm2321 = vweird.f32 %v2315
    %vm2322 = vmor %vm2320, %vm2321
    %v2323 = vsel %vm2322, %v2315, %v2319
    %v2324 = vand.u32 2147483647, %v2314
    %vm2325 = vcmp.eq.f32.partialorder %v2324, 8.507059e+37
    %v2326 = vand.u32 %v2314, 2147483648
    %v2327 = vor.u32 1.1754944e-38, %v2326
    %v2328 = vsel %vm2325, %v2327, %v2323
    %v2329 = vmul.f32 1.0, %v2328
    %v2330 = vtanh.pop %v2290
    %v2331 = vxor.u32 %v2291, 2147483648
    %v2332 = vmul.f32 %v2331, 1.442695
    %v2333 = vpow.pop %v2332
    %v2334 = vadd.f32 %v2333, 1.0
    %v2335 = vrcp.pop %v2334
    %v2336 = vmul.f32 %v2334, %v2335
    %v2337 = vsub.f32 1.0, %v2336
    %v2338 = vmul.f32 %v2335, %v2337
    %v2339 = vadd.f32 %v2335, %v2338
    %vm2340 = vweird.f32 %v2334
    %vm2341 = vweird.f32 %v2335
    %vm2342 = vmor %vm2340, %vm2341
    %v2343 = vsel %vm2342, %v2335, %v2339
    %v2344 = vand.u32 2147483647, %v2334
    %vm2345 = vcmp.eq.f32.partialorder %v2344, 8.507059e+37
    %v2346 = vand.u32 %v2334, 2147483648
    %v2347 = vor.u32 1.1754944e-38, %v2346
    %v2348 = vsel %vm2345, %v2347, %v2343
    %v2349 = vmul.f32 1.0, %v2348
    %v2350 = vmul.f32 %v2329, %v2143
    %v2351 = vmul.f32 %v2310, %v2330
    %v2352 = vadd.f32 %v2350, %v2351
    %v2353 = vtanh.pop %v2352
    %v2354 = vmul.f32 %v2349, %v2353
    %2355 = vst [vmem:[#allocation3] sm:$0x3] %v2354
    %v2356 = vld [vmem:[%s7] sm:$0xff]
    %v2357 = vld [vmem:[%s7 + $0x8] sm:$0xff]
    %v2358 = vld [vmem:[%s7 + $0x10] sm:$0xff]
    %v2359 = vld [vmem:[%s7 + $0x18] sm:$0xff]
    %v2360 = vld [vmem:[%s7 + $0x20] sm:$0xff]
    %v2361 = vld [vmem:[%s7 + $0x28] sm:$0xff]
    %v2362 = vld [vmem:[%s7 + $0x30] sm:$0xff]
    %v2363 = vld [vmem:[%s7 + $0x38] sm:$0xff]
    %v2364 = vld [vmem:[%s7 + $0x40] sm:$0xff]
    %v2365 = vld [vmem:[%s7 + $0x48] sm:$0xff]
    %v2366 = vld [vmem:[%s7 + $0x50] sm:$0xff]
    %v2367 = vld [vmem:[%s7 + $0x58] sm:$0xff]
    %v2368 = vld [vmem:[%s7 + $0x60] sm:$0xff]
    %v2369 = vld [vmem:[%s7 + $0x68] sm:$0xff]
    %v2370 = vld [vmem:[%s7 + $0x70] sm:$0xff]
    %v2371 = vld [vmem:[%s7 + $0x78] sm:$0xff]
    %v2372 = vld [vmem:[%s7 + $0x80] sm:$0xff]
    %v2373 = vld [vmem:[%s7 + $0x88] sm:$0xff]
    %v2374 = vld [vmem:[%s7 + $0x90] sm:$0xff]
    %v2375 = vld [vmem:[%s7 + $0x98] sm:$0xff]
    %v2376 = vld [vmem:[%s7 + $0xa0] sm:$0xff]
    %v2377 = vld [vmem:[%s7 + $0xa8] sm:$0xff]
    %v2378 = vld [vmem:[%s7 + $0xb0] sm:$0xff]
    %v2379 = vld [vmem:[%s7 + $0xb8] sm:$0xff]
    %v2380 = vld [vmem:[%s7 + $0xc0] sm:$0xff]
    %v2381 = vld [vmem:[%s7 + $0xc8] sm:$0xff]
    %v2382 = vld [vmem:[%s7 + $0xd0] sm:$0xff]
    %v2383 = vld [vmem:[%s7 + $0xd8] sm:$0xff]
    %v2384 = vld [vmem:[%s7 + $0xe0] sm:$0xff]
    %v2385 = vld [vmem:[%s7 + $0xe8] sm:$0xff]
    %v2386 = vld [vmem:[%s7 + $0xf0] sm:$0xff]
    %v2387 = vld [vmem:[%s7 + $0xf8] sm:$0xff]
    %v2388 = vld [vmem:[%s7 + $0x100] sm:$0xff]
    %v2389 = vld [vmem:[%s7 + $0x108] sm:$0xff]
    %v2390 = vld [vmem:[%s7 + $0x110] sm:$0xff]
    %v2391 = vld [vmem:[%s7 + $0x118] sm:$0xff]
    %v2392 = vld [vmem:[%s7 + $0x120] sm:$0xff]
    %v2393 = vld [vmem:[%s7 + $0x128] sm:$0xff]
    %v2394 = vld [vmem:[%s7 + $0x130] sm:$0xff]
    %v2395 = vld [vmem:[%s7 + $0x138] sm:$0xff]
    %v2396 = vld [vmem:[%s7 + $0x140] sm:$0xff]
    %v2397 = vld [vmem:[%s7 + $0x148] sm:$0xff]
    %v2398 = vld [vmem:[%s7 + $0x150] sm:$0xff]
    %v2399 = vld [vmem:[%s7 + $0x158] sm:$0xff]
    %v2400 = vld [vmem:[%s7 + $0x160] sm:$0xff]
    %v2401 = vld [vmem:[%s7 + $0x168] sm:$0xff]
    %v2402 = vld [vmem:[%s7 + $0x170] sm:$0xff]
    %v2403 = vld [vmem:[%s7 + $0x178] sm:$0xff]
    %v2404 = vld [vmem:[%s7 + $0x180] sm:$0xff]
    %v2405 = vld [vmem:[%s7 + $0x188] sm:$0xff]
    %v2406 = vld [vmem:[%s7 + $0x190] sm:$0xff]
    %v2407 = vld [vmem:[%s7 + $0x198] sm:$0xff]
    %v2408 = vld [vmem:[%s7 + $0x1a0] sm:$0xff]
    %v2409 = vld [vmem:[%s7 + $0x1a8] sm:$0xff]
    %v2410 = vld [vmem:[%s7 + $0x1b0] sm:$0xff]
    %v2411 = vld [vmem:[%s7 + $0x1b8] sm:$0xff]
    %v2412 = vld [vmem:[%s7 + $0x1c0] sm:$0xff]
    %v2413 = vld [vmem:[%s7 + $0x1c8] sm:$0xff]
    %v2414 = vld [vmem:[%s7 + $0x1d0] sm:$0xff]
    %v2415 = vld [vmem:[%s7 + $0x1d8] sm:$0xff]
    %v2416 = vld [vmem:[%s7 + $0x1e0] sm:$0xff]
    %v2417 = vld [vmem:[%s7 + $0x1e8] sm:$0xff]
    %v2418 = vld [vmem:[%s7 + $0x1f0] sm:$0xff]
    %v2419 = vld [vmem:[%s7 + $0x1f8] sm:$0xff]
    %2420 = vmatpush.msra.mxu0 %v2416
    %2421 = vmatpush.msra.mxu0 %v2412
    %2422 = vmatpush.msra.mxu0 %v2408
    %2423 = vmatpush.msra.mxu0 %v2404
    %2424 = vmatpush.msra.mxu0 %v2400
    %2425 = vmatpush.msra.mxu0 %v2396
    %2426 = vmatpush.msra.mxu0 %v2392
    %2427 = vmatpush.msra.mxu0 %v2388
    %2428 = vmatpush.msra.mxu0 %v2384
    %2429 = vmatpush.msra.mxu0 %v2380
    %2430 = vmatpush.msra.mxu0 %v2376
    %2431 = vmatpush.msra.mxu0 %v2372
    %2432 = vmatpush.msra.mxu0 %v2368
    %2433 = vmatpush.msra.mxu0 %v2364
    %2434 = vmatpush.msra.mxu0 %v2360
    %2435 = vmatpush.msra.mxu0 %v2356
    %2436 = vmatmul.f32.gmra.mxu0 %v2354
    %v2437 = vpop.f32.mrf.mxu0
    %v2438 = vadd.f32 0.0, %v2437
    %2439 = vdwg.mxu0
    %2440 = vmatpush.msra.mxu0 %v2417
    %2441 = vmatpush.msra.mxu0 %v2413
    %2442 = vmatpush.msra.mxu0 %v2409
    %2443 = vmatpush.msra.mxu0 %v2405
    %2444 = vmatpush.msra.mxu0 %v2401
    %2445 = vmatpush.msra.mxu0 %v2397
    %2446 = vmatpush.msra.mxu0 %v2393
    %2447 = vmatpush.msra.mxu0 %v2389
    %2448 = vmatpush.msra.mxu0 %v2385
    %2449 = vmatpush.msra.mxu0 %v2381
    %2450 = vmatpush.msra.mxu0 %v2377
    %2451 = vmatpush.msra.mxu0 %v2373
    %2452 = vmatpush.msra.mxu0 %v2369
    %2453 = vmatpush.msra.mxu0 %v2365
    %2454 = vmatpush.msra.mxu0 %v2361
    %2455 = vmatpush.msra.mxu0 %v2357
    %2456 = vmatmul.f32.gmra.mxu0 %v2354
    %v2457 = vpop.f32.mrf.mxu0
    %v2458 = vadd.f32 0.0, %v2457
    %2459 = vdwg.mxu0
    %2460 = vmatpush.msra.mxu0 %v2418
    %2461 = vmatpush.msra.mxu0 %v2414
    %2462 = vmatpush.msra.mxu0 %v2410
    %2463 = vmatpush.msra.mxu0 %v2406
    %2464 = vmatpush.msra.mxu0 %v2402
    %2465 = vmatpush.msra.mxu0 %v2398
    %2466 = vmatpush.msra.mxu0 %v2394
    %2467 = vmatpush.msra.mxu0 %v2390
    %2468 = vmatpush.msra.mxu0 %v2386
    %2469 = vmatpush.msra.mxu0 %v2382
    %2470 = vmatpush.msra.mxu0 %v2378
    %2471 = vmatpush.msra.mxu0 %v2374
    %2472 = vmatpush.msra.mxu0 %v2370
    %2473 = vmatpush.msra.mxu0 %v2366
    %2474 = vmatpush.msra.mxu0 %v2362
    %2475 = vmatpush.msra.mxu0 %v2358
    %2476 = vmatmul.f32.gmra.mxu0 %v2354
    %v2477 = vpop.f32.mrf.mxu0
    %v2478 = vadd.f32 0.0, %v2477
    %2479 = vdwg.mxu0
    %2480 = vmatpush.msra.mxu0 %v2419
    %2481 = vmatpush.msra.mxu0 %v2415
    %2482 = vmatpush.msra.mxu0 %v2411
    %2483 = vmatpush.msra.mxu0 %v2407
    %2484 = vmatpush.msra.mxu0 %v2403
    %2485 = vmatpush.msra.mxu0 %v2399
    %2486 = vmatpush.msra.mxu0 %v2395
    %2487 = vmatpush.msra.mxu0 %v2391
    %2488 = vmatpush.msra.mxu0 %v2387
    %2489 = vmatpush.msra.mxu0 %v2383
    %2490 = vmatpush.msra.mxu0 %v2379
    %2491 = vmatpush.msra.mxu0 %v2375
    %2492 = vmatpush.msra.mxu0 %v2371
    %2493 = vmatpush.msra.mxu0 %v2367
    %2494 = vmatpush.msra.mxu0 %v2363
    %2495 = vmatpush.msra.mxu0 %v2359
    %2496 = vmatmul.f32.gmra.mxu0 %v2354
    %v2497 = vpop.f32.mrf.mxu0
    %v2498 = vadd.f32 0.0, %v2497
    %2499 = vdwg.mxu0
    %v2504 = vrot.slane %v2438, 6
    %v2505 = vrot.slane %v2458, 6
    %v2506 = vrot.slane %v2478, 6
    %v2507 = vrot.slane %v2498, 6
    %v2512 = vadd.f32 %v2066, %v2504
    %v2513 = vadd.f32 %v2089, %v2505
    %v2514 = vadd.f32 %v2112, %v2506
    %v2515 = vadd.f32 %v2135, %v2507
    %v2516 = vxor.u32 %v2512, 2147483648
    %v2517 = vmul.f32 %v2516, 1.442695
    %v2518 = vpow.pop %v2517
    %v2519 = vadd.f32 %v2518, 1.0
    %v2520 = vrcp.pop %v2519
    %v2521 = vmul.f32 %v2519, %v2520
    %v2522 = vsub.f32 1.0, %v2521
    %v2523 = vmul.f32 %v2520, %v2522
    %v2524 = vadd.f32 %v2520, %v2523
    %vm2525 = vweird.f32 %v2519
    %vm2526 = vweird.f32 %v2520
    %vm2527 = vmor %vm2525, %vm2526
    %v2528 = vsel %vm2527, %v2520, %v2524
    %v2529 = vand.u32 2147483647, %v2519
    %vm2530 = vcmp.eq.f32.partialorder %v2529, 8.507059e+37
    %v2531 = vand.u32 %v2519, 2147483648
    %v2532 = vor.u32 1.1754944e-38, %v2531
    %v2533 = vsel %vm2530, %v2532, %v2528
    %v2534 = vmul.f32 1.0, %v2533
    %v2535 = vxor.u32 %v2513, 2147483648
    %v2536 = vmul.f32 %v2535, 1.442695
    %v2537 = vpow.pop %v2536
    %v2538 = vadd.f32 %v2537, 1.0
    %v2539 = vrcp.pop %v2538
    %v2540 = vmul.f32 %v2538, %v2539
    %v2541 = vsub.f32 1.0, %v2540
    %v2542 = vmul.f32 %v2539, %v2541
    %v2543 = vadd.f32 %v2539, %v2542
    %vm2544 = vweird.f32 %v2538
    %vm2545 = vweird.f32 %v2539
    %vm2546 = vmor %vm2544, %vm2545
    %v2547 = vsel %vm2546, %v2539, %v2543
    %v2548 = vand.u32 2147483647, %v2538
    %vm2549 = vcmp.eq.f32.partialorder %v2548, 8.507059e+37
    %v2550 = vand.u32 %v2538, 2147483648
    %v2551 = vor.u32 1.1754944e-38, %v2550
    %v2552 = vsel %vm2549, %v2551, %v2547
    %v2553 = vmul.f32 1.0, %v2552
    %v2554 = vtanh.pop %v2514
    %v2555 = vxor.u32 %v2515, 2147483648
    %v2556 = vmul.f32 %v2555, 1.442695
    %v2557 = vpow.pop %v2556
    %v2558 = vadd.f32 %v2557, 1.0
    %v2559 = vrcp.pop %v2558
    %v2560 = vmul.f32 %v2558, %v2559
    %v2561 = vsub.f32 1.0, %v2560
    %v2562 = vmul.f32 %v2559, %v2561
    %v2563 = vadd.f32 %v2559, %v2562
    %vm2564 = vweird.f32 %v2558
    %vm2565 = vweird.f32 %v2559
    %vm2566 = vmor %vm2564, %vm2565
    %v2567 = vsel %vm2566, %v2559, %v2563
    %v2568 = vand.u32 2147483647, %v2558
    %vm2569 = vcmp.eq.f32.partialorder %v2568, 8.507059e+37
    %v2570 = vand.u32 %v2558, 2147483648
    %v2571 = vor.u32 1.1754944e-38, %v2570
    %v2572 = vsel %vm2569, %v2571, %v2567
    %v2573 = vmul.f32 1.0, %v2572
    %v2575 = vrot.slane %v2352, 6
    %v2577 = vmul.f32 %v2553, %v2575
    %v2578 = vmul.f32 %v2534, %v2554
    %v2579 = vadd.f32 %v2577, %v2578
    %v2580 = vtanh.pop %v2579
    %v2581 = vmul.f32 %v2573, %v2580
    %2582 = vst [vmem:[#allocation3] sm:$0xc] %v2581
    %v2583 = vld [vmem:[%s7] sm:$0xff]
    %v2584 = vld [vmem:[%s7 + $0x8] sm:$0xff]
    %v2585 = vld [vmem:[%s7 + $0x10] sm:$0xff]
    %v2586 = vld [vmem:[%s7 + $0x18] sm:$0xff]
    %v2587 = vld [vmem:[%s7 + $0x20] sm:$0xff]
    %v2588 = vld [vmem:[%s7 + $0x28] sm:$0xff]
    %v2589 = vld [vmem:[%s7 + $0x30] sm:$0xff]
    %v2590 = vld [vmem:[%s7 + $0x38] sm:$0xff]
    %v2591 = vld [vmem:[%s7 + $0x40] sm:$0xff]
    %v2592 = vld [vmem:[%s7 + $0x48] sm:$0xff]
    %v2593 = vld [vmem:[%s7 + $0x50] sm:$0xff]
    %v2594 = vld [vmem:[%s7 + $0x58] sm:$0xff]
    %v2595 = vld [vmem:[%s7 + $0x60] sm:$0xff]
    %v2596 = vld [vmem:[%s7 + $0x68] sm:$0xff]
    %v2597 = vld [vmem:[%s7 + $0x70] sm:$0xff]
    %v2598 = vld [vmem:[%s7 + $0x78] sm:$0xff]
    %v2599 = vld [vmem:[%s7 + $0x80] sm:$0xff]
    %v2600 = vld [vmem:[%s7 + $0x88] sm:$0xff]
    %v2601 = vld [vmem:[%s7 + $0x90] sm:$0xff]
    %v2602 = vld [vmem:[%s7 + $0x98] sm:$0xff]
    %v2603 = vld [vmem:[%s7 + $0xa0] sm:$0xff]
    %v2604 = vld [vmem:[%s7 + $0xa8] sm:$0xff]
    %v2605 = vld [vmem:[%s7 + $0xb0] sm:$0xff]
    %v2606 = vld [vmem:[%s7 + $0xb8] sm:$0xff]
    %v2607 = vld [vmem:[%s7 + $0xc0] sm:$0xff]
    %v2608 = vld [vmem:[%s7 + $0xc8] sm:$0xff]
    %v2609 = vld [vmem:[%s7 + $0xd0] sm:$0xff]
    %v2610 = vld [vmem:[%s7 + $0xd8] sm:$0xff]
    %v2611 = vld [vmem:[%s7 + $0xe0] sm:$0xff]
    %v2612 = vld [vmem:[%s7 + $0xe8] sm:$0xff]
    %v2613 = vld [vmem:[%s7 + $0xf0] sm:$0xff]
    %v2614 = vld [vmem:[%s7 + $0xf8] sm:$0xff]
    %v2615 = vld [vmem:[%s7 + $0x100] sm:$0xff]
    %v2616 = vld [vmem:[%s7 + $0x108] sm:$0xff]
    %v2617 = vld [vmem:[%s7 + $0x110] sm:$0xff]
    %v2618 = vld [vmem:[%s7 + $0x118] sm:$0xff]
    %v2619 = vld [vmem:[%s7 + $0x120] sm:$0xff]
    %v2620 = vld [vmem:[%s7 + $0x128] sm:$0xff]
    %v2621 = vld [vmem:[%s7 + $0x130] sm:$0xff]
    %v2622 = vld [vmem:[%s7 + $0x138] sm:$0xff]
    %v2623 = vld [vmem:[%s7 + $0x140] sm:$0xff]
    %v2624 = vld [vmem:[%s7 + $0x148] sm:$0xff]
    %v2625 = vld [vmem:[%s7 + $0x150] sm:$0xff]
    %v2626 = vld [vmem:[%s7 + $0x158] sm:$0xff]
    %v2627 = vld [vmem:[%s7 + $0x160] sm:$0xff]
    %v2628 = vld [vmem:[%s7 + $0x168] sm:$0xff]
    %v2629 = vld [vmem:[%s7 + $0x170] sm:$0xff]
    %v2630 = vld [vmem:[%s7 + $0x178] sm:$0xff]
    %v2631 = vld [vmem:[%s7 + $0x180] sm:$0xff]
    %v2632 = vld [vmem:[%s7 + $0x188] sm:$0xff]
    %v2633 = vld [vmem:[%s7 + $0x190] sm:$0xff]
    %v2634 = vld [vmem:[%s7 + $0x198] sm:$0xff]
    %v2635 = vld [vmem:[%s7 + $0x1a0] sm:$0xff]
    %v2636 = vld [vmem:[%s7 + $0x1a8] sm:$0xff]
    %v2637 = vld [vmem:[%s7 + $0x1b0] sm:$0xff]
    %v2638 = vld [vmem:[%s7 + $0x1b8] sm:$0xff]
    %v2639 = vld [vmem:[%s7 + $0x1c0] sm:$0xff]
    %v2640 = vld [vmem:[%s7 + $0x1c8] sm:$0xff]
    %v2641 = vld [vmem:[%s7 + $0x1d0] sm:$0xff]
    %v2642 = vld [vmem:[%s7 + $0x1d8] sm:$0xff]
    %v2643 = vld [vmem:[%s7 + $0x1e0] sm:$0xff]
    %v2644 = vld [vmem:[%s7 + $0x1e8] sm:$0xff]
    %v2645 = vld [vmem:[%s7 + $0x1f0] sm:$0xff]
    %v2646 = vld [vmem:[%s7 + $0x1f8] sm:$0xff]
    %v2648 = vrot.slane %v2581, 2
    %2650 = vmatpush.msra.mxu0 %v2643
    %2651 = vmatpush.msra.mxu0 %v2639
    %2652 = vmatpush.msra.mxu0 %v2635
    %2653 = vmatpush.msra.mxu0 %v2631
    %2654 = vmatpush.msra.mxu0 %v2627
    %2655 = vmatpush.msra.mxu0 %v2623
    %2656 = vmatpush.msra.mxu0 %v2619
    %2657 = vmatpush.msra.mxu0 %v2615
    %2658 = vmatpush.msra.mxu0 %v2611
    %2659 = vmatpush.msra.mxu0 %v2607
    %2660 = vmatpush.msra.mxu0 %v2603
    %2661 = vmatpush.msra.mxu0 %v2599
    %2662 = vmatpush.msra.mxu0 %v2595
    %2663 = vmatpush.msra.mxu0 %v2591
    %2664 = vmatpush.msra.mxu0 %v2587
    %2665 = vmatpush.msra.mxu0 %v2583
    %2666 = vmatmul.f32.gmra.mxu0 %v2648
    %v2667 = vpop.f32.mrf.mxu0
    %v2668 = vadd.f32 0.0, %v2667
    %2669 = vdwg.mxu0
    %2670 = vmatpush.msra.mxu0 %v2644
    %2671 = vmatpush.msra.mxu0 %v2640
    %2672 = vmatpush.msra.mxu0 %v2636
    %2673 = vmatpush.msra.mxu0 %v2632
    %2674 = vmatpush.msra.mxu0 %v2628
    %2675 = vmatpush.msra.mxu0 %v2624
    %2676 = vmatpush.msra.mxu0 %v2620
    %2677 = vmatpush.msra.mxu0 %v2616
    %2678 = vmatpush.msra.mxu0 %v2612
    %2679 = vmatpush.msra.mxu0 %v2608
    %2680 = vmatpush.msra.mxu0 %v2604
    %2681 = vmatpush.msra.mxu0 %v2600
    %2682 = vmatpush.msra.mxu0 %v2596
    %2683 = vmatpush.msra.mxu0 %v2592
    %2684 = vmatpush.msra.mxu0 %v2588
    %2685 = vmatpush.msra.mxu0 %v2584
    %2686 = vmatmul.f32.gmra.mxu0 %v2648
    %v2687 = vpop.f32.mrf.mxu0
    %v2688 = vadd.f32 0.0, %v2687
    %2689 = vdwg.mxu0
    %2690 = vmatpush.msra.mxu0 %v2645
    %2691 = vmatpush.msra.mxu0 %v2641
    %2692 = vmatpush.msra.mxu0 %v2637
    %2693 = vmatpush.msra.mxu0 %v2633
    %2694 = vmatpush.msra.mxu0 %v2629
    %2695 = vmatpush.msra.mxu0 %v2625
    %2696 = vmatpush.msra.mxu0 %v2621
    %2697 = vmatpush.msra.mxu0 %v2617
    %2698 = vmatpush.msra.mxu0 %v2613
    %2699 = vmatpush.msra.mxu0 %v2609
    %2700 = vmatpush.msra.mxu0 %v2605
    %2701 = vmatpush.msra.mxu0 %v2601
    %2702 = vmatpush.msra.mxu0 %v2597
    %2703 = vmatpush.msra.mxu0 %v2593
    %2704 = vmatpush.msra.mxu0 %v2589
    %2705 = vmatpush.msra.mxu0 %v2585
    %2706 = vmatmul.f32.gmra.mxu0 %v2648
    %v2707 = vpop.f32.mrf.mxu0
    %v2708 = vadd.f32 0.0, %v2707
    %2709 = vdwg.mxu0
    %2710 = vmatpush.msra.mxu0 %v2646
    %2711 = vmatpush.msra.mxu0 %v2642
    %2712 = vmatpush.msra.mxu0 %v2638
    %2713 = vmatpush.msra.mxu0 %v2634
    %2714 = vmatpush.msra.mxu0 %v2630
    %2715 = vmatpush.msra.mxu0 %v2626
    %2716 = vmatpush.msra.mxu0 %v2622
    %2717 = vmatpush.msra.mxu0 %v2618
    %2718 = vmatpush.msra.mxu0 %v2614
    %2719 = vmatpush.msra.mxu0 %v2610
    %2720 = vmatpush.msra.mxu0 %v2606
    %2721 = vmatpush.msra.mxu0 %v2602
    %2722 = vmatpush.msra.mxu0 %v2598
    %2723 = vmatpush.msra.mxu0 %v2594
    %2724 = vmatpush.msra.mxu0 %v2590
    %2725 = vmatpush.msra.mxu0 %v2586
    %2726 = vmatmul.f32.gmra.mxu0 %v2648
    %v2727 = vpop.f32.mrf.mxu0
    %v2728 = vadd.f32 0.0, %v2727
    %2729 = vdwg.mxu0
    %v2734 = vrot.slane %v2668, 4
    %v2735 = vrot.slane %v2688, 4
    %v2736 = vrot.slane %v2708, 4
    %v2737 = vrot.slane %v2728, 4
    %v2742 = vadd.f32 %v2066, %v2734
    %v2743 = vadd.f32 %v2089, %v2735
    %v2744 = vadd.f32 %v2112, %v2736
    %v2745 = vadd.f32 %v2135, %v2737
    %v2746 = vxor.u32 %v2742, 2147483648
    %v2747 = vmul.f32 %v2746, 1.442695
    %v2748 = vpow.pop %v2747
    %v2749 = vadd.f32 %v2748, 1.0
    %v2750 = vrcp.pop %v2749
    %v2751 = vmul.f32 %v2749, %v2750
    %v2752 = vsub.f32 1.0, %v2751
    %v2753 = vmul.f32 %v2750, %v2752
    %v2754 = vadd.f32 %v2750, %v2753
    %vm2755 = vweird.f32 %v2749
    %vm2756 = vweird.f32 %v2750
    %vm2757 = vmor %vm2755, %vm2756
    %v2758 = vsel %vm2757, %v2750, %v2754
    %v2759 = vand.u32 2147483647, %v2749
    %vm2760 = vcmp.eq.f32.partialorder %v2759, 8.507059e+37
    %v2761 = vand.u32 %v2749, 2147483648
    %v2762 = vor.u32 1.1754944e-38, %v2761
    %v2763 = vsel %vm2760, %v2762, %v2758
    %v2764 = vmul.f32 1.0, %v2763
    %v2765 = vxor.u32 %v2743, 2147483648
    %v2766 = vmul.f32 %v2765, 1.442695
    %v2767 = vpow.pop %v2766
    %v2768 = vadd.f32 %v2767, 1.0
    %v2769 = vrcp.pop %v2768
    %v2770 = vmul.f32 %v2768, %v2769
    %v2771 = vsub.f32 1.0, %v2770
    %v2772 = vmul.f32 %v2769, %v2771
    %v2773 = vadd.f32 %v2769, %v2772
    %vm2774 = vweird.f32 %v2768
    %vm2775 = vweird.f32 %v2769
    %vm2776 = vmor %vm2774, %vm2775
    %v2777 = vsel %vm2776, %v2769, %v2773
    %v2778 = vand.u32 2147483647, %v2768
    %vm2779 = vcmp.eq.f32.partialorder %v2778, 8.507059e+37
    %v2780 = vand.u32 %v2768, 2147483648
    %v2781 = vor.u32 1.1754944e-38, %v2780
    %v2782 = vsel %vm2779, %v2781, %v2777
    %v2783 = vmul.f32 1.0, %v2782
    %v2784 = vtanh.pop %v2744
    %v2785 = vxor.u32 %v2745, 2147483648
    %v2786 = vmul.f32 %v2785, 1.442695
    %v2787 = vpow.pop %v2786
    %v2788 = vadd.f32 %v2787, 1.0
    %v2789 = vrcp.pop %v2788
    %v2790 = vmul.f32 %v2788, %v2789
    %v2791 = vsub.f32 1.0, %v2790
    %v2792 = vmul.f32 %v2789, %v2791
    %v2793 = vadd.f32 %v2789, %v2792
    %vm2794 = vweird.f32 %v2788
    %vm2795 = vweird.f32 %v2789
    %vm2796 = vmor %vm2794, %vm2795
    %v2797 = vsel %vm2796, %v2789, %v2793
    %v2798 = vand.u32 2147483647, %v2788
    %vm2799 = vcmp.eq.f32.partialorder %v2798, 8.507059e+37
    %v2800 = vand.u32 %v2788, 2147483648
    %v2801 = vor.u32 1.1754944e-38, %v2800
    %v2802 = vsel %vm2799, %v2801, %v2797
    %v2803 = vmul.f32 1.0, %v2802
    %v2805 = vrot.slane %v2579, 6
    %v2807 = vmul.f32 %v2783, %v2805
    %v2808 = vmul.f32 %v2764, %v2784
    %v2809 = vadd.f32 %v2807, %v2808
    %v2810 = vtanh.pop %v2809
    %v2811 = vmul.f32 %v2803, %v2810
    %2812 = vst [vmem:[#allocation3] sm:$0x30] %v2811
    %v2813 = vld [vmem:[%s7] sm:$0xff]
    %v2814 = vld [vmem:[%s7 + $0x8] sm:$0xff]
    %v2815 = vld [vmem:[%s7 + $0x10] sm:$0xff]
    %v2816 = vld [vmem:[%s7 + $0x18] sm:$0xff]
    %v2817 = vld [vmem:[%s7 + $0x20] sm:$0xff]
    %v2818 = vld [vmem:[%s7 + $0x28] sm:$0xff]
    %v2819 = vld [vmem:[%s7 + $0x30] sm:$0xff]
    %v2820 = vld [vmem:[%s7 + $0x38] sm:$0xff]
    %v2821 = vld [vmem:[%s7 + $0x40] sm:$0xff]
    %v2822 = vld [vmem:[%s7 + $0x48] sm:$0xff]
    %v2823 = vld [vmem:[%s7 + $0x50] sm:$0xff]
    %v2824 = vld [vmem:[%s7 + $0x58] sm:$0xff]
    %v2825 = vld [vmem:[%s7 + $0x60] sm:$0xff]
    %v2826 = vld [vmem:[%s7 + $0x68] sm:$0xff]
    %v2827 = vld [vmem:[%s7 + $0x70] sm:$0xff]
    %v2828 = vld [vmem:[%s7 + $0x78] sm:$0xff]
    %v2829 = vld [vmem:[%s7 + $0x80] sm:$0xff]
    %v2830 = vld [vmem:[%s7 + $0x88] sm:$0xff]
    %v2831 = vld [vmem:[%s7 + $0x90] sm:$0xff]
    %v2832 = vld [vmem:[%s7 + $0x98] sm:$0xff]
    %v2833 = vld [vmem:[%s7 + $0xa0] sm:$0xff]
    %v2834 = vld [vmem:[%s7 + $0xa8] sm:$0xff]
    %v2835 = vld [vmem:[%s7 + $0xb0] sm:$0xff]
    %v2836 = vld [vmem:[%s7 + $0xb8] sm:$0xff]
    %v2837 = vld [vmem:[%s7 + $0xc0] sm:$0xff]
    %v2838 = vld [vmem:[%s7 + $0xc8] sm:$0xff]
    %v2839 = vld [vmem:[%s7 + $0xd0] sm:$0xff]
    %v2840 = vld [vmem:[%s7 + $0xd8] sm:$0xff]
    %v2841 = vld [vmem:[%s7 + $0xe0] sm:$0xff]
    %v2842 = vld [vmem:[%s7 + $0xe8] sm:$0xff]
    %v2843 = vld [vmem:[%s7 + $0xf0] sm:$0xff]
    %v2844 = vld [vmem:[%s7 + $0xf8] sm:$0xff]
    %v2845 = vld [vmem:[%s7 + $0x100] sm:$0xff]
    %v2846 = vld [vmem:[%s7 + $0x108] sm:$0xff]
    %v2847 = vld [vmem:[%s7 + $0x110] sm:$0xff]
    %v2848 = vld [vmem:[%s7 + $0x118] sm:$0xff]
    %v2849 = vld [vmem:[%s7 + $0x120] sm:$0xff]
    %v2850 = vld [vmem:[%s7 + $0x128] sm:$0xff]
    %v2851 = vld [vmem:[%s7 + $0x130] sm:$0xff]
    %v2852 = vld [vmem:[%s7 + $0x138] sm:$0xff]
    %v2853 = vld [vmem:[%s7 + $0x140] sm:$0xff]
    %v2854 = vld [vmem:[%s7 + $0x148] sm:$0xff]
    %v2855 = vld [vmem:[%s7 + $0x150] sm:$0xff]
    %v2856 = vld [vmem:[%s7 + $0x158] sm:$0xff]
    %v2857 = vld [vmem:[%s7 + $0x160] sm:$0xff]
    %v2858 = vld [vmem:[%s7 + $0x168] sm:$0xff]
    %v2859 = vld [vmem:[%s7 + $0x170] sm:$0xff]
    %v2860 = vld [vmem:[%s7 + $0x178] sm:$0xff]
    %v2861 = vld [vmem:[%s7 + $0x180] sm:$0xff]
    %v2862 = vld [vmem:[%s7 + $0x188] sm:$0xff]
    %v2863 = vld [vmem:[%s7 + $0x190] sm:$0xff]
    %v2864 = vld [vmem:[%s7 + $0x198] sm:$0xff]
    %v2865 = vld [vmem:[%s7 + $0x1a0] sm:$0xff]
    %v2866 = vld [vmem:[%s7 + $0x1a8] sm:$0xff]
    %v2867 = vld [vmem:[%s7 + $0x1b0] sm:$0xff]
    %v2868 = vld [vmem:[%s7 + $0x1b8] sm:$0xff]
    %v2869 = vld [vmem:[%s7 + $0x1c0] sm:$0xff]
    %v2870 = vld [vmem:[%s7 + $0x1c8] sm:$0xff]
    %v2871 = vld [vmem:[%s7 + $0x1d0] sm:$0xff]
    %v2872 = vld [vmem:[%s7 + $0x1d8] sm:$0xff]
    %v2873 = vld [vmem:[%s7 + $0x1e0] sm:$0xff]
    %v2874 = vld [vmem:[%s7 + $0x1e8] sm:$0xff]
    %v2875 = vld [vmem:[%s7 + $0x1f0] sm:$0xff]
    %v2876 = vld [vmem:[%s7 + $0x1f8] sm:$0xff]
    %v2878 = vrot.slane %v2811, 4
    %2880 = vmatpush.msra.mxu0 %v2873
    %2881 = vmatpush.msra.mxu0 %v2869
    %2882 = vmatpush.msra.mxu0 %v2865
    %2883 = vmatpush.msra.mxu0 %v2861
    %2884 = vmatpush.msra.mxu0 %v2857
    %2885 = vmatpush.msra.mxu0 %v2853
    %2886 = vmatpush.msra.mxu0 %v2849
    %2887 = vmatpush.msra.mxu0 %v2845
    %2888 = vmatpush.msra.mxu0 %v2841
    %2889 = vmatpush.msra.mxu0 %v2837
    %2890 = vmatpush.msra.mxu0 %v2833
    %2891 = vmatpush.msra.mxu0 %v2829
    %2892 = vmatpush.msra.mxu0 %v2825
    %2893 = vmatpush.msra.mxu0 %v2821
    %2894 = vmatpush.msra.mxu0 %v2817
    %2895 = vmatpush.msra.mxu0 %v2813
    %2896 = vmatmul.f32.gmra.mxu0 %v2878
    %v2897 = vpop.f32.mrf.mxu0
    %v2898 = vadd.f32 0.0, %v2897
    %2899 = vdwg.mxu0
    %2900 = vmatpush.msra.mxu0 %v2874
    %2901 = vmatpush.msra.mxu0 %v2870
    %2902 = vmatpush.msra.mxu0 %v2866
    %2903 = vmatpush.msra.mxu0 %v2862
    %2904 = vmatpush.msra.mxu0 %v2858
    %2905 = vmatpush.msra.mxu0 %v2854
    %2906 = vmatpush.msra.mxu0 %v2850
    %2907 = vmatpush.msra.mxu0 %v2846
    %2908 = vmatpush.msra.mxu0 %v2842
    %2909 = vmatpush.msra.mxu0 %v2838
    %2910 = vmatpush.msra.mxu0 %v2834
    %2911 = vmatpush.msra.mxu0 %v2830
    %2912 = vmatpush.msra.mxu0 %v2826
    %2913 = vmatpush.msra.mxu0 %v2822
    %2914 = vmatpush.msra.mxu0 %v2818
    %2915 = vmatpush.msra.mxu0 %v2814
    %2916 = vmatmul.f32.gmra.mxu0 %v2878
    %v2917 = vpop.f32.mrf.mxu0
    %v2918 = vadd.f32 0.0, %v2917
    %2919 = vdwg.mxu0
    %2920 = vmatpush.msra.mxu0 %v2875
    %2921 = vmatpush.msra.mxu0 %v2871
    %2922 = vmatpush.msra.mxu0 %v2867
    %2923 = vmatpush.msra.mxu0 %v2863
    %2924 = vmatpush.msra.mxu0 %v2859
    %2925 = vmatpush.msra.mxu0 %v2855
    %2926 = vmatpush.msra.mxu0 %v2851
    %2927 = vmatpush.msra.mxu0 %v2847
    %2928 = vmatpush.msra.mxu0 %v2843
    %2929 = vmatpush.msra.mxu0 %v2839
    %2930 = vmatpush.msra.mxu0 %v2835
    %2931 = vmatpush.msra.mxu0 %v2831
    %2932 = vmatpush.msra.mxu0 %v2827
    %2933 = vmatpush.msra.mxu0 %v2823
    %2934 = vmatpush.msra.mxu0 %v2819
    %2935 = vmatpush.msra.mxu0 %v2815
    %2936 = vmatmul.f32.gmra.mxu0 %v2878
    %v2937 = vpop.f32.mrf.mxu0
    %v2938 = vadd.f32 0.0, %v2937
    %2939 = vdwg.mxu0
    %2940 = vmatpush.msra.mxu0 %v2876
    %2941 = vmatpush.msra.mxu0 %v2872
    %2942 = vmatpush.msra.mxu0 %v2868
    %2943 = vmatpush.msra.mxu0 %v2864
    %2944 = vmatpush.msra.mxu0 %v2860
    %2945 = vmatpush.msra.mxu0 %v2856
    %2946 = vmatpush.msra.mxu0 %v2852
    %2947 = vmatpush.msra.mxu0 %v2848
    %2948 = vmatpush.msra.mxu0 %v2844
    %2949 = vmatpush.msra.mxu0 %v2840
    %2950 = vmatpush.msra.mxu0 %v2836
    %2951 = vmatpush.msra.mxu0 %v2832
    %2952 = vmatpush.msra.mxu0 %v2828
    %2953 = vmatpush.msra.mxu0 %v2824
    %2954 = vmatpush.msra.mxu0 %v2820
    %2955 = vmatpush.msra.mxu0 %v2816
    %2956 = vmatmul.f32.gmra.mxu0 %v2878
    %v2957 = vpop.f32.mrf.mxu0
    %v2958 = vadd.f32 0.0, %v2957
    %2959 = vdwg.mxu0
    %v2964 = vrot.slane %v2898, 2
    %v2965 = vrot.slane %v2918, 2
    %v2966 = vrot.slane %v2938, 2
    %v2967 = vrot.slane %v2958, 2
    %v2972 = vadd.f32 %v2066, %v2964
    %v2973 = vadd.f32 %v2089, %v2965
    %v2974 = vadd.f32 %v2112, %v2966
    %v2975 = vadd.f32 %v2135, %v2967
    %v2976 = vxor.u32 %v2972, 2147483648
    %v2977 = vmul.f32 %v2976, 1.442695
    %v2978 = vpow.pop %v2977
    %v2979 = vadd.f32 %v2978, 1.0
    %v2980 = vrcp.pop %v2979
    %v2981 = vmul.f32 %v2979, %v2980
    %v2982 = vsub.f32 1.0, %v2981
    %v2983 = vmul.f32 %v2980, %v2982
    %v2984 = vadd.f32 %v2980, %v2983
    %vm2985 = vweird.f32 %v2979
    %vm2986 = vweird.f32 %v2980
    %vm2987 = vmor %vm2985, %vm2986
    %v2988 = vsel %vm2987, %v2980, %v2984
    %v2989 = vand.u32 2147483647, %v2979
    %vm2990 = vcmp.eq.f32.partialorder %v2989, 8.507059e+37
    %v2991 = vand.u32 %v2979, 2147483648
    %v2992 = vor.u32 1.1754944e-38, %v2991
    %v2993 = vsel %vm2990, %v2992, %v2988
    %v2994 = vmul.f32 1.0, %v2993
    %v2995 = vxor.u32 %v2973, 2147483648
    %v2996 = vmul.f32 %v2995, 1.442695
    %v2997 = vpow.pop %v2996
    %v2998 = vadd.f32 %v2997, 1.0
    %v2999 = vrcp.pop %v2998
    %v3000 = vmul.f32 %v2998, %v2999
    %v3001 = vsub.f32 1.0, %v3000
    %v3002 = vmul.f32 %v2999, %v3001
    %v3003 = vadd.f32 %v2999, %v3002
    %vm3004 = vweird.f32 %v2998
    %vm3005 = vweird.f32 %v2999
    %vm3006 = vmor %vm3004, %vm3005
    %v3007 = vsel %vm3006, %v2999, %v3003
    %v3008 = vand.u32 2147483647, %v2998
    %vm3009 = vcmp.eq.f32.partialorder %v3008, 8.507059e+37
    %v3010 = vand.u32 %v2998, 2147483648
    %v3011 = vor.u32 1.1754944e-38, %v3010
    %v3012 = vsel %vm3009, %v3011, %v3007
    %v3013 = vmul.f32 1.0, %v3012
    %v3014 = vtanh.pop %v2974
    %v3015 = vxor.u32 %v2975, 2147483648
    %v3016 = vmul.f32 %v3015, 1.442695
    %v3017 = vpow.pop %v3016
    %v3018 = vadd.f32 %v3017, 1.0
    %v3019 = vrcp.pop %v3018
    %v3020 = vmul.f32 %v3018, %v3019
    %v3021 = vsub.f32 1.0, %v3020
    %v3022 = vmul.f32 %v3019, %v3021
    %v3023 = vadd.f32 %v3019, %v3022
    %vm3024 = vweird.f32 %v3018
    %vm3025 = vweird.f32 %v3019
    %vm3026 = vmor %vm3024, %vm3025
    %v3027 = vsel %vm3026, %v3019, %v3023
    %v3028 = vand.u32 2147483647, %v3018
    %vm3029 = vcmp.eq.f32.partialorder %v3028, 8.507059e+37
    %v3030 = vand.u32 %v3018, 2147483648
    %v3031 = vor.u32 1.1754944e-38, %v3030
    %v3032 = vsel %vm3029, %v3031, %v3027
    %v3033 = vmul.f32 1.0, %v3032
    %v3035 = vrot.slane %v2809, 6
    %v3037 = vmul.f32 %v3013, %v3035
    %v3038 = vmul.f32 %v2994, %v3014
    %v3039 = vadd.f32 %v3037, %v3038
    %v3040 = vtanh.pop %v3039
    %v3041 = vmul.f32 %v3033, %v3040
    %3042 = vst [vmem:[#allocation3] sm:$0xc0] %v3041
    %v3043 = vld [vmem:[%s7] sm:$0xff]
    %v3044 = vld [vmem:[%s7 + $0x8] sm:$0xff]
    %v3045 = vld [vmem:[%s7 + $0x10] sm:$0xff]
    %v3046 = vld [vmem:[%s7 + $0x18] sm:$0xff]
    %v3047 = vld [vmem:[%s7 + $0x20] sm:$0xff]
    %v3048 = vld [vmem:[%s7 + $0x28] sm:$0xff]
    %v3049 = vld [vmem:[%s7 + $0x30] sm:$0xff]
    %v3050 = vld [vmem:[%s7 + $0x38] sm:$0xff]
    %v3051 = vld [vmem:[%s7 + $0x40] sm:$0xff]
    %v3052 = vld [vmem:[%s7 + $0x48] sm:$0xff]
    %v3053 = vld [vmem:[%s7 + $0x50] sm:$0xff]
    %v3054 = vld [vmem:[%s7 + $0x58] sm:$0xff]
    %v3055 = vld [vmem:[%s7 + $0x60] sm:$0xff]
    %v3056 = vld [vmem:[%s7 + $0x68] sm:$0xff]
    %v3057 = vld [vmem:[%s7 + $0x70] sm:$0xff]
    %v3058 = vld [vmem:[%s7 + $0x78] sm:$0xff]
    %v3059 = vld [vmem:[%s7 + $0x80] sm:$0xff]
    %v3060 = vld [vmem:[%s7 + $0x88] sm:$0xff]
    %v3061 = vld [vmem:[%s7 + $0x90] sm:$0xff]
    %v3062 = vld [vmem:[%s7 + $0x98] sm:$0xff]
    %v3063 = vld [vmem:[%s7 + $0xa0] sm:$0xff]
    %v3064 = vld [vmem:[%s7 + $0xa8] sm:$0xff]
    %v3065 = vld [vmem:[%s7 + $0xb0] sm:$0xff]
    %v3066 = vld [vmem:[%s7 + $0xb8] sm:$0xff]
    %v3067 = vld [vmem:[%s7 + $0xc0] sm:$0xff]
    %v3068 = vld [vmem:[%s7 + $0xc8] sm:$0xff]
    %v3069 = vld [vmem:[%s7 + $0xd0] sm:$0xff]
    %v3070 = vld [vmem:[%s7 + $0xd8] sm:$0xff]
    %v3071 = vld [vmem:[%s7 + $0xe0] sm:$0xff]
    %v3072 = vld [vmem:[%s7 + $0xe8] sm:$0xff]
    %v3073 = vld [vmem:[%s7 + $0xf0] sm:$0xff]
    %v3074 = vld [vmem:[%s7 + $0xf8] sm:$0xff]
    %v3075 = vld [vmem:[%s7 + $0x100] sm:$0xff]
    %v3076 = vld [vmem:[%s7 + $0x108] sm:$0xff]
    %v3077 = vld [vmem:[%s7 + $0x110] sm:$0xff]
    %v3078 = vld [vmem:[%s7 + $0x118] sm:$0xff]
    %v3079 = vld [vmem:[%s7 + $0x120] sm:$0xff]
    %v3080 = vld [vmem:[%s7 + $0x128] sm:$0xff]
    %v3081 = vld [vmem:[%s7 + $0x130] sm:$0xff]
    %v3082 = vld [vmem:[%s7 + $0x138] sm:$0xff]
    %v3083 = vld [vmem:[%s7 + $0x140] sm:$0xff]
    %v3084 = vld [vmem:[%s7 + $0x148] sm:$0xff]
    %v3085 = vld [vmem:[%s7 + $0x150] sm:$0xff]
    %v3086 = vld [vmem:[%s7 + $0x158] sm:$0xff]
    %v3087 = vld [vmem:[%s7 + $0x160] sm:$0xff]
    %v3088 = vld [vmem:[%s7 + $0x168] sm:$0xff]
    %v3089 = vld [vmem:[%s7 + $0x170] sm:$0xff]
    %v3090 = vld [vmem:[%s7 + $0x178] sm:$0xff]
    %v3091 = vld [vmem:[%s7 + $0x180] sm:$0xff]
    %v3092 = vld [vmem:[%s7 + $0x188] sm:$0xff]
    %v3093 = vld [vmem:[%s7 + $0x190] sm:$0xff]
    %v3094 = vld [vmem:[%s7 + $0x198] sm:$0xff]
    %v3095 = vld [vmem:[%s7 + $0x1a0] sm:$0xff]
    %v3096 = vld [vmem:[%s7 + $0x1a8] sm:$0xff]
    %v3097 = vld [vmem:[%s7 + $0x1b0] sm:$0xff]
    %v3098 = vld [vmem:[%s7 + $0x1b8] sm:$0xff]
    %v3099 = vld [vmem:[%s7 + $0x1c0] sm:$0xff]
    %v3100 = vld [vmem:[%s7 + $0x1c8] sm:$0xff]
    %v3101 = vld [vmem:[%s7 + $0x1d0] sm:$0xff]
    %v3102 = vld [vmem:[%s7 + $0x1d8] sm:$0xff]
    %v3103 = vld [vmem:[%s7 + $0x1e0] sm:$0xff]
    %v3104 = vld [vmem:[%s7 + $0x1e8] sm:$0xff]
    %v3105 = vld [vmem:[%s7 + $0x1f0] sm:$0xff]
    %v3106 = vld [vmem:[%s7 + $0x1f8] sm:$0xff]
    %v3108 = vrot.slane %v3041, 6
    %3110 = vmatpush.msra.mxu0 %v3103
    %3111 = vmatpush.msra.mxu0 %v3099
    %3112 = vmatpush.msra.mxu0 %v3095
    %3113 = vmatpush.msra.mxu0 %v3091
    %3114 = vmatpush.msra.mxu0 %v3087
    %3115 = vmatpush.msra.mxu0 %v3083
    %3116 = vmatpush.msra.mxu0 %v3079
    %3117 = vmatpush.msra.mxu0 %v3075
    %3118 = vmatpush.msra.mxu0 %v3071
    %3119 = vmatpush.msra.mxu0 %v3067
    %3120 = vmatpush.msra.mxu0 %v3063
    %3121 = vmatpush.msra.mxu0 %v3059
    %3122 = vmatpush.msra.mxu0 %v3055
    %3123 = vmatpush.msra.mxu0 %v3051
    %3124 = vmatpush.msra.mxu0 %v3047
    %3125 = vmatpush.msra.mxu0 %v3043
    %3126 = vmatmul.f32.gmra.mxu0 %v3108
    %v3127 = vpop.f32.mrf.mxu0
    %v3128 = vadd.f32 0.0, %v3127
    %3129 = vdwg.mxu0
    %3130 = vmatpush.msra.mxu0 %v3104
    %3131 = vmatpush.msra.mxu0 %v3100
    %3132 = vmatpush.msra.mxu0 %v3096
    %3133 = vmatpush.msra.mxu0 %v3092
    %3134 = vmatpush.msra.mxu0 %v3088
    %3135 = vmatpush.msra.mxu0 %v3084
    %3136 = vmatpush.msra.mxu0 %v3080
    %3137 = vmatpush.msra.mxu0 %v3076
    %3138 = vmatpush.msra.mxu0 %v3072
    %3139 = vmatpush.msra.mxu0 %v3068
    %3140 = vmatpush.msra.mxu0 %v3064
    %3141 = vmatpush.msra.mxu0 %v3060
    %3142 = vmatpush.msra.mxu0 %v3056
    %3143 = vmatpush.msra.mxu0 %v3052
    %3144 = vmatpush.msra.mxu0 %v3048
    %3145 = vmatpush.msra.mxu0 %v3044
    %3146 = vmatmul.f32.gmra.mxu0 %v3108
    %v3147 = vpop.f32.mrf.mxu0
    %v3148 = vadd.f32 0.0, %v3147
    %3149 = vdwg.mxu0
    %3150 = vmatpush.msra.mxu0 %v3105
    %3151 = vmatpush.msra.mxu0 %v3101
    %3152 = vmatpush.msra.mxu0 %v3097
    %3153 = vmatpush.msra.mxu0 %v3093
    %3154 = vmatpush.msra.mxu0 %v3089
    %3155 = vmatpush.msra.mxu0 %v3085
    %3156 = vmatpush.msra.mxu0 %v3081
    %3157 = vmatpush.msra.mxu0 %v3077
    %3158 = vmatpush.msra.mxu0 %v3073
    %3159 = vmatpush.msra.mxu0 %v3069
    %3160 = vmatpush.msra.mxu0 %v3065
    %3161 = vmatpush.msra.mxu0 %v3061
    %3162 = vmatpush.msra.mxu0 %v3057
    %3163 = vmatpush.msra.mxu0 %v3053
    %3164 = vmatpush.msra.mxu0 %v3049
    %3165 = vmatpush.msra.mxu0 %v3045
    %3166 = vmatmul.f32.gmra.mxu0 %v3108
    %v3167 = vpop.f32.mrf.mxu0
    %v3168 = vadd.f32 0.0, %v3167
    %3169 = vdwg.mxu0
    %3170 = vmatpush.msra.mxu0 %v3106
    %3171 = vmatpush.msra.mxu0 %v3102
    %3172 = vmatpush.msra.mxu0 %v3098
    %3173 = vmatpush.msra.mxu0 %v3094
    %3174 = vmatpush.msra.mxu0 %v3090
    %3175 = vmatpush.msra.mxu0 %v3086
    %3176 = vmatpush.msra.mxu0 %v3082
    %3177 = vmatpush.msra.mxu0 %v3078
    %3178 = vmatpush.msra.mxu0 %v3074
    %3179 = vmatpush.msra.mxu0 %v3070
    %3180 = vmatpush.msra.mxu0 %v3066
    %3181 = vmatpush.msra.mxu0 %v3062
    %3182 = vmatpush.msra.mxu0 %v3058
    %3183 = vmatpush.msra.mxu0 %v3054
    %3184 = vmatpush.msra.mxu0 %v3050
    %3185 = vmatpush.msra.mxu0 %v3046
    %3186 = vmatmul.f32.gmra.mxu0 %v3108
    %v3187 = vpop.f32.mrf.mxu0
    %v3188 = vadd.f32 0.0, %v3187
    %3189 = vdwg.mxu0
    %v3190 = vadd.f32 %v2069, %v3128
    %v3191 = vadd.f32 %v2092, %v3148
    %v3192 = vadd.f32 %v2115, %v3168
    %v3193 = vadd.f32 %v2138, %v3188
    %v3194 = vxor.u32 %v3190, 2147483648
    %v3195 = vmul.f32 %v3194, 1.442695
    %v3196 = vpow.pop %v3195
    %v3197 = vadd.f32 %v3196, 1.0
    %v3198 = vrcp.pop %v3197
    %v3199 = vmul.f32 %v3197, %v3198
    %v3200 = vsub.f32 1.0, %v3199
    %v3201 = vmul.f32 %v3198, %v3200
    %v3202 = vadd.f32 %v3198, %v3201
    %vm3203 = vweird.f32 %v3197
    %vm3204 = vweird.f32 %v3198
    %vm3205 = vmor %vm3203, %vm3204
    %v3206 = vsel %vm3205, %v3198, %v3202
    %v3207 = vand.u32 2147483647, %v3197
    %vm3208 = vcmp.eq.f32.partialorder %v3207, 8.507059e+37
    %v3209 = vand.u32 %v3197, 2147483648
    %v3210 = vor.u32 1.1754944e-38, %v3209
    %v3211 = vsel %vm3208, %v3210, %v3206
    %v3212 = vmul.f32 1.0, %v3211
    %v3213 = vxor.u32 %v3191, 2147483648
    %v3214 = vmul.f32 %v3213, 1.442695
    %v3215 = vpow.pop %v3214
    %v3216 = vadd.f32 %v3215, 1.0
    %v3217 = vrcp.pop %v3216
    %v3218 = vmul.f32 %v3216, %v3217
    %v3219 = vsub.f32 1.0, %v3218
    %v3220 = vmul.f32 %v3217, %v3219
    %v3221 = vadd.f32 %v3217, %v3220
    %vm3222 = vweird.f32 %v3216
    %vm3223 = vweird.f32 %v3217
    %vm3224 = vmor %vm3222, %vm3223
    %v3225 = vsel %vm3224, %v3217, %v3221
    %v3226 = vand.u32 2147483647, %v3216
    %vm3227 = vcmp.eq.f32.partialorder %v3226, 8.507059e+37
    %v3228 = vand.u32 %v3216, 2147483648
    %v3229 = vor.u32 1.1754944e-38, %v3228
    %v3230 = vsel %vm3227, %v3229, %v3225
    %v3231 = vmul.f32 1.0, %v3230
    %v3232 = vtanh.pop %v3192
    %v3233 = vxor.u32 %v3193, 2147483648
    %v3234 = vmul.f32 %v3233, 1.442695
    %v3235 = vpow.pop %v3234
    %v3236 = vadd.f32 %v3235, 1.0
    %v3237 = vrcp.pop %v3236
    %v3238 = vmul.f32 %v3236, %v3237
    %v3239 = vsub.f32 1.0, %v3238
    %v3240 = vmul.f32 %v3237, %v3239
    %v3241 = vadd.f32 %v3237, %v3240
    %vm3242 = vweird.f32 %v3236
    %vm3243 = vweird.f32 %v3237
    %vm3244 = vmor %vm3242, %vm3243
    %v3245 = vsel %vm3244, %v3237, %v3241
    %v3246 = vand.u32 2147483647, %v3236
    %vm3247 = vcmp.eq.f32.partialorder %v3246, 8.507059e+37
    %v3248 = vand.u32 %v3236, 2147483648
    %v3249 = vor.u32 1.1754944e-38, %v3248
    %v3250 = vsel %vm3247, %v3249, %v3245
    %v3251 = vmul.f32 1.0, %v3250
    %v3253 = vrot.slane %v3039, 6
    %v3255 = vmul.f32 %v3231, %v3253
    %v3256 = vmul.f32 %v3212, %v3232
    %v3257 = vadd.f32 %v3255, %v3256
    %v3258 = vtanh.pop %v3257
    %v3259 = vmul.f32 %v3251, %v3258
    %3260 = vst [vmem:[#allocation3 + $0x8] sm:$0x3] %v3259
    %v3261 = vld [vmem:[%s7] sm:$0xff]
    %v3262 = vld [vmem:[%s7 + $0x8] sm:$0xff]
    %v3263 = vld [vmem:[%s7 + $0x10] sm:$0xff]
    %v3264 = vld [vmem:[%s7 + $0x18] sm:$0xff]
    %v3265 = vld [vmem:[%s7 + $0x20] sm:$0xff]
    %v3266 = vld [vmem:[%s7 + $0x28] sm:$0xff]
    %v3267 = vld [vmem:[%s7 + $0x30] sm:$0xff]
    %v3268 = vld [vmem:[%s7 + $0x38] sm:$0xff]
    %v3269 = vld [vmem:[%s7 + $0x40] sm:$0xff]
    %v3270 = vld [vmem:[%s7 + $0x48] sm:$0xff]
    %v3271 = vld [vmem:[%s7 + $0x50] sm:$0xff]
    %v3272 = vld [vmem:[%s7 + $0x58] sm:$0xff]
    %v3273 = vld [vmem:[%s7 + $0x60] sm:$0xff]
    %v3274 = vld [vmem:[%s7 + $0x68] sm:$0xff]
    %v3275 = vld [vmem:[%s7 + $0x70] sm:$0xff]
    %v3276 = vld [vmem:[%s7 + $0x78] sm:$0xff]
    %v3277 = vld [vmem:[%s7 + $0x80] sm:$0xff]
    %v3278 = vld [vmem:[%s7 + $0x88] sm:$0xff]
    %v3279 = vld [vmem:[%s7 + $0x90] sm:$0xff]
    %v3280 = vld [vmem:[%s7 + $0x98] sm:$0xff]
    %v3281 = vld [vmem:[%s7 + $0xa0] sm:$0xff]
    %v3282 = vld [vmem:[%s7 + $0xa8] sm:$0xff]
    %v3283 = vld [vmem:[%s7 + $0xb0] sm:$0xff]
    %v3284 = vld [vmem:[%s7 + $0xb8] sm:$0xff]
    %v3285 = vld [vmem:[%s7 + $0xc0] sm:$0xff]
    %v3286 = vld [vmem:[%s7 + $0xc8] sm:$0xff]
    %v3287 = vld [vmem:[%s7 + $0xd0] sm:$0xff]
    %v3288 = vld [vmem:[%s7 + $0xd8] sm:$0xff]
    %v3289 = vld [vmem:[%s7 + $0xe0] sm:$0xff]
    %v3290 = vld [vmem:[%s7 + $0xe8] sm:$0xff]
    %v3291 = vld [vmem:[%s7 + $0xf0] sm:$0xff]
    %v3292 = vld [vmem:[%s7 + $0xf8] sm:$0xff]
    %v3293 = vld [vmem:[%s7 + $0x100] sm:$0xff]
    %v3294 = vld [vmem:[%s7 + $0x108] sm:$0xff]
    %v3295 = vld [vmem:[%s7 + $0x110] sm:$0xff]
    %v3296 = vld [vmem:[%s7 + $0x118] sm:$0xff]
    %v3297 = vld [vmem:[%s7 + $0x120] sm:$0xff]
    %v3298 = vld [vmem:[%s7 + $0x128] sm:$0xff]
    %v3299 = vld [vmem:[%s7 + $0x130] sm:$0xff]
    %v3300 = vld [vmem:[%s7 + $0x138] sm:$0xff]
    %v3301 = vld [vmem:[%s7 + $0x140] sm:$0xff]
    %v3302 = vld [vmem:[%s7 + $0x148] sm:$0xff]
    %v3303 = vld [vmem:[%s7 + $0x150] sm:$0xff]
    %v3304 = vld [vmem:[%s7 + $0x158] sm:$0xff]
    %v3305 = vld [vmem:[%s7 + $0x160] sm:$0xff]
    %v3306 = vld [vmem:[%s7 + $0x168] sm:$0xff]
    %v3307 = vld [vmem:[%s7 + $0x170] sm:$0xff]
    %v3308 = vld [vmem:[%s7 + $0x178] sm:$0xff]
    %v3309 = vld [vmem:[%s7 + $0x180] sm:$0xff]
    %v3310 = vld [vmem:[%s7 + $0x188] sm:$0xff]
    %v3311 = vld [vmem:[%s7 + $0x190] sm:$0xff]
    %v3312 = vld [vmem:[%s7 + $0x198] sm:$0xff]
    %v3313 = vld [vmem:[%s7 + $0x1a0] sm:$0xff]
    %v3314 = vld [vmem:[%s7 + $0x1a8] sm:$0xff]
    %v3315 = vld [vmem:[%s7 + $0x1b0] sm:$0xff]
    %v3316 = vld [vmem:[%s7 + $0x1b8] sm:$0xff]
    %v3317 = vld [vmem:[%s7 + $0x1c0] sm:$0xff]
    %v3318 = vld [vmem:[%s7 + $0x1c8] sm:$0xff]
    %v3319 = vld [vmem:[%s7 + $0x1d0] sm:$0xff]
    %v3320 = vld [vmem:[%s7 + $0x1d8] sm:$0xff]
    %v3321 = vld [vmem:[%s7 + $0x1e0] sm:$0xff]
    %v3322 = vld [vmem:[%s7 + $0x1e8] sm:$0xff]
    %v3323 = vld [vmem:[%s7 + $0x1f0] sm:$0xff]
    %v3324 = vld [vmem:[%s7 + $0x1f8] sm:$0xff]
    %3325 = vmatpush.msra.mxu0 %v3321
    %3326 = vmatpush.msra.mxu0 %v3317
    %3327 = vmatpush.msra.mxu0 %v3313
    %3328 = vmatpush.msra.mxu0 %v3309
    %3329 = vmatpush.msra.mxu0 %v3305
    %3330 = vmatpush.msra.mxu0 %v3301
    %3331 = vmatpush.msra.mxu0 %v3297
    %3332 = vmatpush.msra.mxu0 %v3293
    %3333 = vmatpush.msra.mxu0 %v3289
    %3334 = vmatpush.msra.mxu0 %v3285
    %3335 = vmatpush.msra.mxu0 %v3281
    %3336 = vmatpush.msra.mxu0 %v3277
    %3337 = vmatpush.msra.mxu0 %v3273
    %3338 = vmatpush.msra.mxu0 %v3269
    %3339 = vmatpush.msra.mxu0 %v3265
    %3340 = vmatpush.msra.mxu0 %v3261
    %3341 = vmatmul.f32.gmra.mxu0 %v3259
    %v3342 = vpop.f32.mrf.mxu0
    %v3343 = vadd.f32 0.0, %v3342
    %3344 = vdwg.mxu0
    %3345 = vmatpush.msra.mxu0 %v3322
    %3346 = vmatpush.msra.mxu0 %v3318
    %3347 = vmatpush.msra.mxu0 %v3314
    %3348 = vmatpush.msra.mxu0 %v3310
    %3349 = vmatpush.msra.mxu0 %v3306
    %3350 = vmatpush.msra.mxu0 %v3302
    %3351 = vmatpush.msra.mxu0 %v3298
    %3352 = vmatpush.msra.mxu0 %v3294
    %3353 = vmatpush.msra.mxu0 %v3290
    %3354 = vmatpush.msra.mxu0 %v3286
    %3355 = vmatpush.msra.mxu0 %v3282
    %3356 = vmatpush.msra.mxu0 %v3278
    %3357 = vmatpush.msra.mxu0 %v3274
    %3358 = vmatpush.msra.mxu0 %v3270
    %3359 = vmatpush.msra.mxu0 %v3266
    %3360 = vmatpush.msra.mxu0 %v3262
    %3361 = vmatmul.f32.gmra.mxu0 %v3259
    %v3362 = vpop.f32.mrf.mxu0
    %v3363 = vadd.f32 0.0, %v3362
    %3364 = vdwg.mxu0
    %3365 = vmatpush.msra.mxu0 %v3323
    %3366 = vmatpush.msra.mxu0 %v3319
    %3367 = vmatpush.msra.mxu0 %v3315
    %3368 = vmatpush.msra.mxu0 %v3311
    %3369 = vmatpush.msra.mxu0 %v3307
    %3370 = vmatpush.msra.mxu0 %v3303
    %3371 = vmatpush.msra.mxu0 %v3299
    %3372 = vmatpush.msra.mxu0 %v3295
    %3373 = vmatpush.msra.mxu0 %v3291
    %3374 = vmatpush.msra.mxu0 %v3287
    %3375 = vmatpush.msra.mxu0 %v3283
    %3376 = vmatpush.msra.mxu0 %v3279
    %3377 = vmatpush.msra.mxu0 %v3275
    %3378 = vmatpush.msra.mxu0 %v3271
    %3379 = vmatpush.msra.mxu0 %v3267
    %3380 = vmatpush.msra.mxu0 %v3263
    %3381 = vmatmul.f32.gmra.mxu0 %v3259
    %v3382 = vpop.f32.mrf.mxu0
    %v3383 = vadd.f32 0.0, %v3382
    %3384 = vdwg.mxu0
    %3385 = vmatpush.msra.mxu0 %v3324
    %3386 = vmatpush.msra.mxu0 %v3320
    %3387 = vmatpush.msra.mxu0 %v3316
    %3388 = vmatpush.msra.mxu0 %v3312
    %3389 = vmatpush.msra.mxu0 %v3308
    %3390 = vmatpush.msra.mxu0 %v3304
    %3391 = vmatpush.msra.mxu0 %v3300
    %3392 = vmatpush.msra.mxu0 %v3296
    %3393 = vmatpush.msra.mxu0 %v3292
    %3394 = vmatpush.msra.mxu0 %v3288
    %3395 = vmatpush.msra.mxu0 %v3284
    %3396 = vmatpush.msra.mxu0 %v3280
    %3397 = vmatpush.msra.mxu0 %v3276
    %3398 = vmatpush.msra.mxu0 %v3272
    %3399 = vmatpush.msra.mxu0 %v3268
    %3400 = vmatpush.msra.mxu0 %v3264
    %3401 = vmatmul.f32.gmra.mxu0 %v3259
    %v3402 = vpop.f32.mrf.mxu0
    %v3403 = vadd.f32 0.0, %v3402
    %3404 = vdwg.mxu0
    %v3409 = vrot.slane %v3343, 6
    %v3410 = vrot.slane %v3363, 6
    %v3411 = vrot.slane %v3383, 6
    %v3412 = vrot.slane %v3403, 6
    %v3417 = vadd.f32 %v2069, %v3409
    %v3418 = vadd.f32 %v2092, %v3410
    %v3419 = vadd.f32 %v2115, %v3411
    %v3420 = vadd.f32 %v2138, %v3412
    %v3421 = vxor.u32 %v3417, 2147483648
    %v3422 = vmul.f32 %v3421, 1.442695
    %v3423 = vpow.pop %v3422
    %v3424 = vadd.f32 %v3423, 1.0
    %v3425 = vrcp.pop %v3424
    %v3426 = vmul.f32 %v3424, %v3425
    %v3427 = vsub.f32 1.0, %v3426
    %v3428 = vmul.f32 %v3425, %v3427
    %v3429 = vadd.f32 %v3425, %v3428
    %vm3430 = vweird.f32 %v3424
    %vm3431 = vweird.f32 %v3425
    %vm3432 = vmor %vm3430, %vm3431
    %v3433 = vsel %vm3432, %v3425, %v3429
    %v3434 = vand.u32 2147483647, %v3424
    %vm3435 = vcmp.eq.f32.partialorder %v3434, 8.507059e+37
    %v3436 = vand.u32 %v3424, 2147483648
    %v3437 = vor.u32 1.1754944e-38, %v3436
    %v3438 = vsel %vm3435, %v3437, %v3433
    %v3439 = vmul.f32 1.0, %v3438
    %v3440 = vxor.u32 %v3418, 2147483648
    %v3441 = vmul.f32 %v3440, 1.442695
    %v3442 = vpow.pop %v3441
    %v3443 = vadd.f32 %v3442, 1.0
    %v3444 = vrcp.pop %v3443
    %v3445 = vmul.f32 %v3443, %v3444
    %v3446 = vsub.f32 1.0, %v3445
    %v3447 = vmul.f32 %v3444, %v3446
    %v3448 = vadd.f32 %v3444, %v3447
    %vm3449 = vweird.f32 %v3443
    %vm3450 = vweird.f32 %v3444
    %vm3451 = vmor %vm3449, %vm3450
    %v3452 = vsel %vm3451, %v3444, %v3448
    %v3453 = vand.u32 2147483647, %v3443
    %vm3454 = vcmp.eq.f32.partialorder %v3453, 8.507059e+37
    %v3455 = vand.u32 %v3443, 2147483648
    %v3456 = vor.u32 1.1754944e-38, %v3455
    %v3457 = vsel %vm3454, %v3456, %v3452
    %v3458 = vmul.f32 1.0, %v3457
    %v3459 = vtanh.pop %v3419
    %v3460 = vxor.u32 %v3420, 2147483648
    %v3461 = vmul.f32 %v3460, 1.442695
    %v3462 = vpow.pop %v3461
    %v3463 = vadd.f32 %v3462, 1.0
    %v3464 = vrcp.pop %v3463
    %v3465 = vmul.f32 %v3463, %v3464
    %v3466 = vsub.f32 1.0, %v3465
    %v3467 = vmul.f32 %v3464, %v3466
    %v3468 = vadd.f32 %v3464, %v3467
    %vm3469 = vweird.f32 %v3463
    %vm3470 = vweird.f32 %v3464
    %vm3471 = vmor %vm3469, %vm3470
    %v3472 = vsel %vm3471, %v3464, %v3468
    %v3473 = vand.u32 2147483647, %v3463
    %vm3474 = vcmp.eq.f32.partialorder %v3473, 8.507059e+37
    %v3475 = vand.u32 %v3463, 2147483648
    %v3476 = vor.u32 1.1754944e-38, %v3475
    %v3477 = vsel %vm3474, %v3476, %v3472
    %v3478 = vmul.f32 1.0, %v3477
    %v3480 = vrot.slane %v3257, 6
    %v3482 = vmul.f32 %v3458, %v3480
    %v3483 = vmul.f32 %v3439, %v3459
    %v3484 = vadd.f32 %v3482, %v3483
    %v3485 = vtanh.pop %v3484
    %v3486 = vmul.f32 %v3478, %v3485
    %3487 = vst [vmem:[#allocation3 + $0x8] sm:$0xc] %v3486
    %v3488 = vld [vmem:[%s7] sm:$0xff]
    %v3489 = vld [vmem:[%s7 + $0x8] sm:$0xff]
    %v3490 = vld [vmem:[%s7 + $0x10] sm:$0xff]
    %v3491 = vld [vmem:[%s7 + $0x18] sm:$0xff]
    %v3492 = vld [vmem:[%s7 + $0x20] sm:$0xff]
    %v3493 = vld [vmem:[%s7 + $0x28] sm:$0xff]
    %v3494 = vld [vmem:[%s7 + $0x30] sm:$0xff]
    %v3495 = vld [vmem:[%s7 + $0x38] sm:$0xff]
    %v3496 = vld [vmem:[%s7 + $0x40] sm:$0xff]
    %v3497 = vld [vmem:[%s7 + $0x48] sm:$0xff]
    %v3498 = vld [vmem:[%s7 + $0x50] sm:$0xff]
    %v3499 = vld [vmem:[%s7 + $0x58] sm:$0xff]
    %v3500 = vld [vmem:[%s7 + $0x60] sm:$0xff]
    %v3501 = vld [vmem:[%s7 + $0x68] sm:$0xff]
    %v3502 = vld [vmem:[%s7 + $0x70] sm:$0xff]
    %v3503 = vld [vmem:[%s7 + $0x78] sm:$0xff]
    %v3504 = vld [vmem:[%s7 + $0x80] sm:$0xff]
    %v3505 = vld [vmem:[%s7 + $0x88] sm:$0xff]
    %v3506 = vld [vmem:[%s7 + $0x90] sm:$0xff]
    %v3507 = vld [vmem:[%s7 + $0x98] sm:$0xff]
    %v3508 = vld [vmem:[%s7 + $0xa0] sm:$0xff]
    %v3509 = vld [vmem:[%s7 + $0xa8] sm:$0xff]
    %v3510 = vld [vmem:[%s7 + $0xb0] sm:$0xff]
    %v3511 = vld [vmem:[%s7 + $0xb8] sm:$0xff]
    %v3512 = vld [vmem:[%s7 + $0xc0] sm:$0xff]
    %v3513 = vld [vmem:[%s7 + $0xc8] sm:$0xff]
    %v3514 = vld [vmem:[%s7 + $0xd0] sm:$0xff]
    %v3515 = vld [vmem:[%s7 + $0xd8] sm:$0xff]
    %v3516 = vld [vmem:[%s7 + $0xe0] sm:$0xff]
    %v3517 = vld [vmem:[%s7 + $0xe8] sm:$0xff]
    %v3518 = vld [vmem:[%s7 + $0xf0] sm:$0xff]
    %v3519 = vld [vmem:[%s7 + $0xf8] sm:$0xff]
    %v3520 = vld [vmem:[%s7 + $0x100] sm:$0xff]
    %v3521 = vld [vmem:[%s7 + $0x108] sm:$0xff]
    %v3522 = vld [vmem:[%s7 + $0x110] sm:$0xff]
    %v3523 = vld [vmem:[%s7 + $0x118] sm:$0xff]
    %v3524 = vld [vmem:[%s7 + $0x120] sm:$0xff]
    %v3525 = vld [vmem:[%s7 + $0x128] sm:$0xff]
    %v3526 = vld [vmem:[%s7 + $0x130] sm:$0xff]
    %v3527 = vld [vmem:[%s7 + $0x138] sm:$0xff]
    %v3528 = vld [vmem:[%s7 + $0x140] sm:$0xff]
    %v3529 = vld [vmem:[%s7 + $0x148] sm:$0xff]
    %v3530 = vld [vmem:[%s7 + $0x150] sm:$0xff]
    %v3531 = vld [vmem:[%s7 + $0x158] sm:$0xff]
    %v3532 = vld [vmem:[%s7 + $0x160] sm:$0xff]
    %v3533 = vld [vmem:[%s7 + $0x168] sm:$0xff]
    %v3534 = vld [vmem:[%s7 + $0x170] sm:$0xff]
    %v3535 = vld [vmem:[%s7 + $0x178] sm:$0xff]
    %v3536 = vld [vmem:[%s7 + $0x180] sm:$0xff]
    %v3537 = vld [vmem:[%s7 + $0x188] sm:$0xff]
    %v3538 = vld [vmem:[%s7 + $0x190] sm:$0xff]
    %v3539 = vld [vmem:[%s7 + $0x198] sm:$0xff]
    %v3540 = vld [vmem:[%s7 + $0x1a0] sm:$0xff]
    %v3541 = vld [vmem:[%s7 + $0x1a8] sm:$0xff]
    %v3542 = vld [vmem:[%s7 + $0x1b0] sm:$0xff]
    %v3543 = vld [vmem:[%s7 + $0x1b8] sm:$0xff]
    %v3544 = vld [vmem:[%s7 + $0x1c0] sm:$0xff]
    %v3545 = vld [vmem:[%s7 + $0x1c8] sm:$0xff]
    %v3546 = vld [vmem:[%s7 + $0x1d0] sm:$0xff]
    %v3547 = vld [vmem:[%s7 + $0x1d8] sm:$0xff]
    %v3548 = vld [vmem:[%s7 + $0x1e0] sm:$0xff]
    %v3549 = vld [vmem:[%s7 + $0x1e8] sm:$0xff]
    %v3550 = vld [vmem:[%s7 + $0x1f0] sm:$0xff]
    %v3551 = vld [vmem:[%s7 + $0x1f8] sm:$0xff]
    %v3553 = vrot.slane %v3486, 2
    %3555 = vmatpush.msra.mxu0 %v3548
    %3556 = vmatpush.msra.mxu0 %v3544
    %3557 = vmatpush.msra.mxu0 %v3540
    %3558 = vmatpush.msra.mxu0 %v3536
    %3559 = vmatpush.msra.mxu0 %v3532
    %3560 = vmatpush.msra.mxu0 %v3528
    %3561 = vmatpush.msra.mxu0 %v3524
    %3562 = vmatpush.msra.mxu0 %v3520
    %3563 = vmatpush.msra.mxu0 %v3516
    %3564 = vmatpush.msra.mxu0 %v3512
    %3565 = vmatpush.msra.mxu0 %v3508
    %3566 = vmatpush.msra.mxu0 %v3504
    %3567 = vmatpush.msra.mxu0 %v3500
    %3568 = vmatpush.msra.mxu0 %v3496
    %3569 = vmatpush.msra.mxu0 %v3492
    %3570 = vmatpush.msra.mxu0 %v3488
    %3571 = vmatmul.f32.gmra.mxu0 %v3553
    %v3572 = vpop.f32.mrf.mxu0
    %v3573 = vadd.f32 0.0, %v3572
    %3574 = vdwg.mxu0
    %3575 = vmatpush.msra.mxu0 %v3549
    %3576 = vmatpush.msra.mxu0 %v3545
    %3577 = vmatpush.msra.mxu0 %v3541
    %3578 = vmatpush.msra.mxu0 %v3537
    %3579 = vmatpush.msra.mxu0 %v3533
    %3580 = vmatpush.msra.mxu0 %v3529
    %3581 = vmatpush.msra.mxu0 %v3525
    %3582 = vmatpush.msra.mxu0 %v3521
    %3583 = vmatpush.msra.mxu0 %v3517
    %3584 = vmatpush.msra.mxu0 %v3513
    %3585 = vmatpush.msra.mxu0 %v3509
    %3586 = vmatpush.msra.mxu0 %v3505
    %3587 = vmatpush.msra.mxu0 %v3501
    %3588 = vmatpush.msra.mxu0 %v3497
    %3589 = vmatpush.msra.mxu0 %v3493
    %3590 = vmatpush.msra.mxu0 %v3489
    %3591 = vmatmul.f32.gmra.mxu0 %v3553
    %v3592 = vpop.f32.mrf.mxu0
    %v3593 = vadd.f32 0.0, %v3592
    %3594 = vdwg.mxu0
    %3595 = vmatpush.msra.mxu0 %v3550
    %3596 = vmatpush.msra.mxu0 %v3546
    %3597 = vmatpush.msra.mxu0 %v3542
    %3598 = vmatpush.msra.mxu0 %v3538
    %3599 = vmatpush.msra.mxu0 %v3534
    %3600 = vmatpush.msra.mxu0 %v3530
    %3601 = vmatpush.msra.mxu0 %v3526
    %3602 = vmatpush.msra.mxu0 %v3522
    %3603 = vmatpush.msra.mxu0 %v3518
    %3604 = vmatpush.msra.mxu0 %v3514
    %3605 = vmatpush.msra.mxu0 %v3510
    %3606 = vmatpush.msra.mxu0 %v3506
    %3607 = vmatpush.msra.mxu0 %v3502
    %3608 = vmatpush.msra.mxu0 %v3498
    %3609 = vmatpush.msra.mxu0 %v3494
    %3610 = vmatpush.msra.mxu0 %v3490
    %3611 = vmatmul.f32.gmra.mxu0 %v3553
    %v3612 = vpop.f32.mrf.mxu0
    %v3613 = vadd.f32 0.0, %v3612
    %3614 = vdwg.mxu0
    %3615 = vmatpush.msra.mxu0 %v3551
    %3616 = vmatpush.msra.mxu0 %v3547
    %3617 = vmatpush.msra.mxu0 %v3543
    %3618 = vmatpush.msra.mxu0 %v3539
    %3619 = vmatpush.msra.mxu0 %v3535
    %3620 = vmatpush.msra.mxu0 %v3531
    %3621 = vmatpush.msra.mxu0 %v3527
    %3622 = vmatpush.msra.mxu0 %v3523
    %3623 = vmatpush.msra.mxu0 %v3519
    %3624 = vmatpush.msra.mxu0 %v3515
    %3625 = vmatpush.msra.mxu0 %v3511
    %3626 = vmatpush.msra.mxu0 %v3507
    %3627 = vmatpush.msra.mxu0 %v3503
    %3628 = vmatpush.msra.mxu0 %v3499
    %3629 = vmatpush.msra.mxu0 %v3495
    %3630 = vmatpush.msra.mxu0 %v3491
    %3631 = vmatmul.f32.gmra.mxu0 %v3553
    %v3632 = vpop.f32.mrf.mxu0
    %v3633 = vadd.f32 0.0, %v3632
    %3634 = vdwg.mxu0
    %v3639 = vrot.slane %v3573, 4
    %v3640 = vrot.slane %v3593, 4
    %v3641 = vrot.slane %v3613, 4
    %v3642 = vrot.slane %v3633, 4
    %v3647 = vadd.f32 %v2069, %v3639
    %v3648 = vadd.f32 %v2092, %v3640
    %v3649 = vadd.f32 %v2115, %v3641
    %v3650 = vadd.f32 %v2138, %v3642
    %v3651 = vxor.u32 %v3647, 2147483648
    %v3652 = vmul.f32 %v3651, 1.442695
    %v3653 = vpow.pop %v3652
    %v3654 = vadd.f32 %v3653, 1.0
    %v3655 = vrcp.pop %v3654
    %v3656 = vmul.f32 %v3654, %v3655
    %v3657 = vsub.f32 1.0, %v3656
    %v3658 = vmul.f32 %v3655, %v3657
    %v3659 = vadd.f32 %v3655, %v3658
    %vm3660 = vweird.f32 %v3654
    %vm3661 = vweird.f32 %v3655
    %vm3662 = vmor %vm3660, %vm3661
    %v3663 = vsel %vm3662, %v3655, %v3659
    %v3664 = vand.u32 2147483647, %v3654
    %vm3665 = vcmp.eq.f32.partialorder %v3664, 8.507059e+37
    %v3666 = vand.u32 %v3654, 2147483648
    %v3667 = vor.u32 1.1754944e-38, %v3666
    %v3668 = vsel %vm3665, %v3667, %v3663
    %v3669 = vmul.f32 1.0, %v3668
    %v3670 = vxor.u32 %v3648, 2147483648
    %v3671 = vmul.f32 %v3670, 1.442695
    %v3672 = vpow.pop %v3671
    %v3673 = vadd.f32 %v3672, 1.0
    %v3674 = vrcp.pop %v3673
    %v3675 = vmul.f32 %v3673, %v3674
    %v3676 = vsub.f32 1.0, %v3675
    %v3677 = vmul.f32 %v3674, %v3676
    %v3678 = vadd.f32 %v3674, %v3677
    %vm3679 = vweird.f32 %v3673
    %vm3680 = vweird.f32 %v3674
    %vm3681 = vmor %vm3679, %vm3680
    %v3682 = vsel %vm3681, %v3674, %v3678
    %v3683 = vand.u32 2147483647, %v3673
    %vm3684 = vcmp.eq.f32.partialorder %v3683, 8.507059e+37
    %v3685 = vand.u32 %v3673, 2147483648
    %v3686 = vor.u32 1.1754944e-38, %v3685
    %v3687 = vsel %vm3684, %v3686, %v3682
    %v3688 = vmul.f32 1.0, %v3687
    %v3689 = vtanh.pop %v3649
    %v3690 = vxor.u32 %v3650, 2147483648
    %v3691 = vmul.f32 %v3690, 1.442695
    %v3692 = vpow.pop %v3691
    %v3693 = vadd.f32 %v3692, 1.0
    %v3694 = vrcp.pop %v3693
    %v3695 = vmul.f32 %v3693, %v3694
    %v3696 = vsub.f32 1.0, %v3695
    %v3697 = vmul.f32 %v3694, %v3696
    %v3698 = vadd.f32 %v3694, %v3697
    %vm3699 = vweird.f32 %v3693
    %vm3700 = vweird.f32 %v3694
    %vm3701 = vmor %vm3699, %vm3700
    %v3702 = vsel %vm3701, %v3694, %v3698
    %v3703 = vand.u32 2147483647, %v3693
    %vm3704 = vcmp.eq.f32.partialorder %v3703, 8.507059e+37
    %v3705 = vand.u32 %v3693, 2147483648
    %v3706 = vor.u32 1.1754944e-38, %v3705
    %v3707 = vsel %vm3704, %v3706, %v3702
    %v3708 = vmul.f32 1.0, %v3707
    %v3710 = vrot.slane %v3484, 6
    %v3712 = vmul.f32 %v3688, %v3710
    %v3713 = vmul.f32 %v3669, %v3689
    %v3714 = vadd.f32 %v3712, %v3713
    %v3715 = vtanh.pop %v3714
    %v3716 = vmul.f32 %v3708, %v3715
    %3717 = vst [vmem:[#allocation3 + $0x8] sm:$0x30] %v3716
    %v3718 = vld [vmem:[%s7] sm:$0xff]
    %v3719 = vld [vmem:[%s7 + $0x8] sm:$0xff]
    %v3720 = vld [vmem:[%s7 + $0x10] sm:$0xff]
    %v3721 = vld [vmem:[%s7 + $0x18] sm:$0xff]
    %v3722 = vld [vmem:[%s7 + $0x20] sm:$0xff]
    %v3723 = vld [vmem:[%s7 + $0x28] sm:$0xff]
    %v3724 = vld [vmem:[%s7 + $0x30] sm:$0xff]
    %v3725 = vld [vmem:[%s7 + $0x38] sm:$0xff]
    %v3726 = vld [vmem:[%s7 + $0x40] sm:$0xff]
    %v3727 = vld [vmem:[%s7 + $0x48] sm:$0xff]
    %v3728 = vld [vmem:[%s7 + $0x50] sm:$0xff]
    %v3729 = vld [vmem:[%s7 + $0x58] sm:$0xff]
    %v3730 = vld [vmem:[%s7 + $0x60] sm:$0xff]
    %v3731 = vld [vmem:[%s7 + $0x68] sm:$0xff]
    %v3732 = vld [vmem:[%s7 + $0x70] sm:$0xff]
    %v3733 = vld [vmem:[%s7 + $0x78] sm:$0xff]
    %v3734 = vld [vmem:[%s7 + $0x80] sm:$0xff]
    %v3735 = vld [vmem:[%s7 + $0x88] sm:$0xff]
    %v3736 = vld [vmem:[%s7 + $0x90] sm:$0xff]
    %v3737 = vld [vmem:[%s7 + $0x98] sm:$0xff]
    %v3738 = vld [vmem:[%s7 + $0xa0] sm:$0xff]
    %v3739 = vld [vmem:[%s7 + $0xa8] sm:$0xff]
    %v3740 = vld [vmem:[%s7 + $0xb0] sm:$0xff]
    %v3741 = vld [vmem:[%s7 + $0xb8] sm:$0xff]
    %v3742 = vld [vmem:[%s7 + $0xc0] sm:$0xff]
    %v3743 = vld [vmem:[%s7 + $0xc8] sm:$0xff]
    %v3744 = vld [vmem:[%s7 + $0xd0] sm:$0xff]
    %v3745 = vld [vmem:[%s7 + $0xd8] sm:$0xff]
    %v3746 = vld [vmem:[%s7 + $0xe0] sm:$0xff]
    %v3747 = vld [vmem:[%s7 + $0xe8] sm:$0xff]
    %v3748 = vld [vmem:[%s7 + $0xf0] sm:$0xff]
    %v3749 = vld [vmem:[%s7 + $0xf8] sm:$0xff]
    %v3750 = vld [vmem:[%s7 + $0x100] sm:$0xff]
    %v3751 = vld [vmem:[%s7 + $0x108] sm:$0xff]
    %v3752 = vld [vmem:[%s7 + $0x110] sm:$0xff]
    %v3753 = vld [vmem:[%s7 + $0x118] sm:$0xff]
    %v3754 = vld [vmem:[%s7 + $0x120] sm:$0xff]
    %v3755 = vld [vmem:[%s7 + $0x128] sm:$0xff]
    %v3756 = vld [vmem:[%s7 + $0x130] sm:$0xff]
    %v3757 = vld [vmem:[%s7 + $0x138] sm:$0xff]
    %v3758 = vld [vmem:[%s7 + $0x140] sm:$0xff]
    %v3759 = vld [vmem:[%s7 + $0x148] sm:$0xff]
    %v3760 = vld [vmem:[%s7 + $0x150] sm:$0xff]
    %v3761 = vld [vmem:[%s7 + $0x158] sm:$0xff]
    %v3762 = vld [vmem:[%s7 + $0x160] sm:$0xff]
    %v3763 = vld [vmem:[%s7 + $0x168] sm:$0xff]
    %v3764 = vld [vmem:[%s7 + $0x170] sm:$0xff]
    %v3765 = vld [vmem:[%s7 + $0x178] sm:$0xff]
    %v3766 = vld [vmem:[%s7 + $0x180] sm:$0xff]
    %v3767 = vld [vmem:[%s7 + $0x188] sm:$0xff]
    %v3768 = vld [vmem:[%s7 + $0x190] sm:$0xff]
    %v3769 = vld [vmem:[%s7 + $0x198] sm:$0xff]
    %v3770 = vld [vmem:[%s7 + $0x1a0] sm:$0xff]
    %v3771 = vld [vmem:[%s7 + $0x1a8] sm:$0xff]
    %v3772 = vld [vmem:[%s7 + $0x1b0] sm:$0xff]
    %v3773 = vld [vmem:[%s7 + $0x1b8] sm:$0xff]
    %v3774 = vld [vmem:[%s7 + $0x1c0] sm:$0xff]
    %v3775 = vld [vmem:[%s7 + $0x1c8] sm:$0xff]
    %v3776 = vld [vmem:[%s7 + $0x1d0] sm:$0xff]
    %v3777 = vld [vmem:[%s7 + $0x1d8] sm:$0xff]
    %v3778 = vld [vmem:[%s7 + $0x1e0] sm:$0xff]
    %v3779 = vld [vmem:[%s7 + $0x1e8] sm:$0xff]
    %v3780 = vld [vmem:[%s7 + $0x1f0] sm:$0xff]
    %v3781 = vld [vmem:[%s7 + $0x1f8] sm:$0xff]
    %v3783 = vrot.slane %v3716, 4
    %3785 = vmatpush.msra.mxu0 %v3778
    %3786 = vmatpush.msra.mxu0 %v3774
    %3787 = vmatpush.msra.mxu0 %v3770
    %3788 = vmatpush.msra.mxu0 %v3766
    %3789 = vmatpush.msra.mxu0 %v3762
    %3790 = vmatpush.msra.mxu0 %v3758
    %3791 = vmatpush.msra.mxu0 %v3754
    %3792 = vmatpush.msra.mxu0 %v3750
    %3793 = vmatpush.msra.mxu0 %v3746
    %3794 = vmatpush.msra.mxu0 %v3742
    %3795 = vmatpush.msra.mxu0 %v3738
    %3796 = vmatpush.msra.mxu0 %v3734
    %3797 = vmatpush.msra.mxu0 %v3730
    %3798 = vmatpush.msra.mxu0 %v3726
    %3799 = vmatpush.msra.mxu0 %v3722
    %3800 = vmatpush.msra.mxu0 %v3718
    %3801 = vmatmul.f32.gmra.mxu0 %v3783
    %v3802 = vpop.f32.mrf.mxu0
    %v3803 = vadd.f32 0.0, %v3802
    %3804 = vdwg.mxu0
    %3805 = vmatpush.msra.mxu0 %v3779
    %3806 = vmatpush.msra.mxu0 %v3775
    %3807 = vmatpush.msra.mxu0 %v3771
    %3808 = vmatpush.msra.mxu0 %v3767
    %3809 = vmatpush.msra.mxu0 %v3763
    %3810 = vmatpush.msra.mxu0 %v3759
    %3811 = vmatpush.msra.mxu0 %v3755
    %3812 = vmatpush.msra.mxu0 %v3751
    %3813 = vmatpush.msra.mxu0 %v3747
    %3814 = vmatpush.msra.mxu0 %v3743
    %3815 = vmatpush.msra.mxu0 %v3739
    %3816 = vmatpush.msra.mxu0 %v3735
    %3817 = vmatpush.msra.mxu0 %v3731
    %3818 = vmatpush.msra.mxu0 %v3727
    %3819 = vmatpush.msra.mxu0 %v3723
    %3820 = vmatpush.msra.mxu0 %v3719
    %3821 = vmatmul.f32.gmra.mxu0 %v3783
    %v3822 = vpop.f32.mrf.mxu0
    %v3823 = vadd.f32 0.0, %v3822
    %3824 = vdwg.mxu0
    %3825 = vmatpush.msra.mxu0 %v3780
    %3826 = vmatpush.msra.mxu0 %v3776
    %3827 = vmatpush.msra.mxu0 %v3772
    %3828 = vmatpush.msra.mxu0 %v3768
    %3829 = vmatpush.msra.mxu0 %v3764
    %3830 = vmatpush.msra.mxu0 %v3760
    %3831 = vmatpush.msra.mxu0 %v3756
    %3832 = vmatpush.msra.mxu0 %v3752
    %3833 = vmatpush.msra.mxu0 %v3748
    %3834 = vmatpush.msra.mxu0 %v3744
    %3835 = vmatpush.msra.mxu0 %v3740
    %3836 = vmatpush.msra.mxu0 %v3736
    %3837 = vmatpush.msra.mxu0 %v3732
    %3838 = vmatpush.msra.mxu0 %v3728
    %3839 = vmatpush.msra.mxu0 %v3724
    %3840 = vmatpush.msra.mxu0 %v3720
    %3841 = vmatmul.f32.gmra.mxu0 %v3783
    %v3842 = vpop.f32.mrf.mxu0
    %v3843 = vadd.f32 0.0, %v3842
    %3844 = vdwg.mxu0
    %3845 = vmatpush.msra.mxu0 %v3781
    %3846 = vmatpush.msra.mxu0 %v3777
    %3847 = vmatpush.msra.mxu0 %v3773
    %3848 = vmatpush.msra.mxu0 %v3769
    %3849 = vmatpush.msra.mxu0 %v3765
    %3850 = vmatpush.msra.mxu0 %v3761
    %3851 = vmatpush.msra.mxu0 %v3757
    %3852 = vmatpush.msra.mxu0 %v3753
    %3853 = vmatpush.msra.mxu0 %v3749
    %3854 = vmatpush.msra.mxu0 %v3745
    %3855 = vmatpush.msra.mxu0 %v3741
    %3856 = vmatpush.msra.mxu0 %v3737
    %3857 = vmatpush.msra.mxu0 %v3733
    %3858 = vmatpush.msra.mxu0 %v3729
    %3859 = vmatpush.msra.mxu0 %v3725
    %3860 = vmatpush.msra.mxu0 %v3721
    %3861 = vmatmul.f32.gmra.mxu0 %v3783
    %v3862 = vpop.f32.mrf.mxu0
    %v3863 = vadd.f32 0.0, %v3862
    %3864 = vdwg.mxu0
    %v3869 = vrot.slane %v3803, 2
    %v3870 = vrot.slane %v3823, 2
    %v3871 = vrot.slane %v3843, 2
    %v3872 = vrot.slane %v3863, 2
    %v3877 = vadd.f32 %v2069, %v3869
    %v3878 = vadd.f32 %v2092, %v3870
    %v3879 = vadd.f32 %v2115, %v3871
    %v3880 = vadd.f32 %v2138, %v3872
    %v3881 = vxor.u32 %v3877, 2147483648
    %v3882 = vmul.f32 %v3881, 1.442695
    %v3883 = vpow.pop %v3882
    %v3884 = vadd.f32 %v3883, 1.0
    %v3885 = vrcp.pop %v3884
    %v3886 = vmul.f32 %v3884, %v3885
    %v3887 = vsub.f32 1.0, %v3886
    %v3888 = vmul.f32 %v3885, %v3887
    %v3889 = vadd.f32 %v3885, %v3888
    %vm3890 = vweird.f32 %v3884
    %vm3891 = vweird.f32 %v3885
    %vm3892 = vmor %vm3890, %vm3891
    %v3893 = vsel %vm3892, %v3885, %v3889
    %v3894 = vand.u32 2147483647, %v3884
    %vm3895 = vcmp.eq.f32.partialorder %v3894, 8.507059e+37
    %v3896 = vand.u32 %v3884, 2147483648
    %v3897 = vor.u32 1.1754944e-38, %v3896
    %v3898 = vsel %vm3895, %v3897, %v3893
    %v3899 = vmul.f32 1.0, %v3898
    %v3900 = vxor.u32 %v3878, 2147483648
    %v3901 = vmul.f32 %v3900, 1.442695
    %v3902 = vpow.pop %v3901
    %v3903 = vadd.f32 %v3902, 1.0
    %v3904 = vrcp.pop %v3903
    %v3905 = vmul.f32 %v3903, %v3904
    %v3906 = vsub.f32 1.0, %v3905
    %v3907 = vmul.f32 %v3904, %v3906
    %v3908 = vadd.f32 %v3904, %v3907
    %vm3909 = vweird.f32 %v3903
    %vm3910 = vweird.f32 %v3904
    %vm3911 = vmor %vm3909, %vm3910
    %v3912 = vsel %vm3911, %v3904, %v3908
    %v3913 = vand.u32 2147483647, %v3903
    %vm3914 = vcmp.eq.f32.partialorder %v3913, 8.507059e+37
    %v3915 = vand.u32 %v3903, 2147483648
    %v3916 = vor.u32 1.1754944e-38, %v3915
    %v3917 = vsel %vm3914, %v3916, %v3912
    %v3918 = vmul.f32 1.0, %v3917
    %v3919 = vtanh.pop %v3879
    %v3920 = vxor.u32 %v3880, 2147483648
    %v3921 = vmul.f32 %v3920, 1.442695
    %v3922 = vpow.pop %v3921
    %v3923 = vadd.f32 %v3922, 1.0
    %v3924 = vrcp.pop %v3923
    %v3925 = vmul.f32 %v3923, %v3924
    %v3926 = vsub.f32 1.0, %v3925
    %v3927 = vmul.f32 %v3924, %v3926
    %v3928 = vadd.f32 %v3924, %v3927
    %vm3929 = vweird.f32 %v3923
    %vm3930 = vweird.f32 %v3924
    %vm3931 = vmor %vm3929, %vm3930
    %v3932 = vsel %vm3931, %v3924, %v3928
    %v3933 = vand.u32 2147483647, %v3923
    %vm3934 = vcmp.eq.f32.partialorder %v3933, 8.507059e+37
    %v3935 = vand.u32 %v3923, 2147483648
    %v3936 = vor.u32 1.1754944e-38, %v3935
    %v3937 = vsel %vm3934, %v3936, %v3932
    %v3938 = vmul.f32 1.0, %v3937
    %v3940 = vrot.slane %v3714, 6
    %v3942 = vmul.f32 %v3918, %v3940
    %v3943 = vmul.f32 %v3899, %v3919
    %v3944 = vadd.f32 %v3942, %v3943
    %v3945 = vtanh.pop %v3944
    %v3946 = vmul.f32 %v3938, %v3945
    %3947 = vst [vmem:[#allocation3 + $0x8] sm:$0xc0] %v3946
    %v3948 = vld [vmem:[#allocation3] sm:$0xff]
    %v3949 = vld [vmem:[#allocation3 + $0x8] sm:$0xff]
    %v3950 = vld [vmem:[%s9] sm:$0xff]
    %v3951 = vld [vmem:[%s9 + $0x8] sm:$0xff]
    %v3952 = vld [vmem:[%s9 + $0x10] sm:$0xff]
    %v3953 = vld [vmem:[%s9 + $0x18] sm:$0xff]
    %v3954 = vld [vmem:[%s9 + $0x20] sm:$0xff]
    %v3955 = vld [vmem:[%s9 + $0x28] sm:$0xff]
    %v3956 = vld [vmem:[%s9 + $0x30] sm:$0xff]
    %v3957 = vld [vmem:[%s9 + $0x38] sm:$0xff]
    %v3958 = vld [vmem:[%s9 + $0x40] sm:$0xff]
    %v3959 = vld [vmem:[%s9 + $0x48] sm:$0xff]
    %v3960 = vld [vmem:[%s9 + $0x50] sm:$0xff]
    %v3961 = vld [vmem:[%s9 + $0x58] sm:$0xff]
    %v3962 = vld [vmem:[%s9 + $0x60] sm:$0xff]
    %v3963 = vld [vmem:[%s9 + $0x68] sm:$0xff]
    %v3964 = vld [vmem:[%s9 + $0x70] sm:$0xff]
    %v3965 = vld [vmem:[%s9 + $0x78] sm:$0xff]
    %v3966 = vld [vmem:[%s10] sm:$0x1]
    %v3968 = vperm.slane %v3966, 0
    %3970 = vmatpush.msra.mxu0 %v3965
    %3971 = vmatpush.msra.mxu0 %v3964
    %3972 = vmatpush.msra.mxu0 %v3963
    %3973 = vmatpush.msra.mxu0 %v3962
    %3974 = vmatpush.msra.mxu0 %v3961
    %3975 = vmatpush.msra.mxu0 %v3960
    %3976 = vmatpush.msra.mxu0 %v3959
    %3977 = vmatpush.msra.mxu0 %v3958
    %3978 = vmatpush.msra.mxu0 %v3957
    %3979 = vmatpush.msra.mxu0 %v3956
    %3980 = vmatpush.msra.mxu0 %v3955
    %3981 = vmatpush.msra.mxu0 %v3954
    %3982 = vmatpush.msra.mxu0 %v3953
    %3983 = vmatpush.msra.mxu0 %v3952
    %3984 = vmatpush.msra.mxu0 %v3951
    %3985 = vmatpush.msra.mxu0 %v3950
    %3986 = vmatmul.f32.gmra.mxu0 %v3948
    %v3987 = vpop.f32.mrf.mxu0
    %v3988 = vadd.f32 %v3968, %v3987
    %3989 = vmatmul.f32.gmra.mxu0 %v3949
    %v3990 = vpop.f32.mrf.mxu0
    %v3991 = vadd.f32 %v3968, %v3990
    %3992 = vdwg.mxu0
    %3993 = vst [vmem:[#allocation4] sm:$0xff] %v3988
    %3994 = vst [vmem:[#allocation4 + $0x8] sm:$0xff] %v3991
    // Predicated region
    $region46: #{text_generation_forward.1} parent=1 // pred_check
      _
    $region47: #{text_generation_forward.1} parent=1 // pred_check_branch
      %3996 = sbr.rel (0) target = $region49
    $region48: #{text_generation_forward.1} parent=1 // pred_region
      %3998 = vsyncadd [#allocation5], 0
      %s3999 = sshll.u32 [#allocation4], 4
      %s4000 = int_to_ptr.vmem [resolvable:$true] %s3999
      %s4001 = sshll.u32 %s11, 4
      %s4002 = int_to_ptr.hbm [resolvable:$true] %s4001
      %4007 = dma.vmem_to_hbm [thread:$0]  %s4000, 256, %s4002, [#allocation5], 128, 128, 8
    $region49: #{text_generation_forward.1} parent=1 // pred_fallthru
      _
    // Predicated region
    $region50: #{text_generation_forward.1} parent=1 // pred_check
      _
    $region51: #{text_generation_forward.1} parent=1 // pred_check_branch
      %4009 = sbr.rel (0) target = $region53
    $region52: #{text_generation_forward.1} parent=1 // pred_region
      %4011 = dma.done [#allocation5], 256
    $region53: #{text_generation_forward.1} parent=1 // pred_fallthru
      _
    %4012 = vsyncpa [#allocation5], 1

</llo_original>
